<compile_context>
chip_gen: v5e
topology: v5e:2x2
jax: 0.10.0
libtpu: 0.0.40
codegen_flags: <defaults>
</compile_context>

<pallas_src>
import math
import functools

import jax
import jax.numpy as jnp
from jax.experimental import pallas as pl
from jax.experimental.pallas import tpu as pltpu

MM_DTYPE = jnp.bfloat16          # MXU operand / residual-stream dtype (f32 accumulation)
LN_EPS = 1e-5


# ------------------------------ hardware-aware knobs ------------------------------

@functools.lru_cache(maxsize=1)
def _vmem_budget():
    """Generation-aware VMEM limit: physical capacity minus headroom, clamped."""
    cap = 64 << 20                                 # conservative default (v7x-sized)
    try:
        info = pltpu.get_tpu_info()
        cap = int(getattr(info, "vmem_capacity_bytes", cap))
    except Exception:
        pass
    return int(max(32 << 20, min(cap - (16 << 20), 100 << 20)))


def _pick_tile(dim, cap, aligns):
    """Largest tile <= cap dividing `dim`, trying alignments in order (e.g. 256 then 128
    for MXU-friendly lane tiles).  Falls back to the full dim (always legal)."""
    if dim <= cap:
        return dim
    for a in aligns:
        t = (cap // a) * a
        while t >= a:
            if dim % t == 0:
                return t
            t -= a
    return dim


# ------------------------- tiled linear (GEMM + bias) -------------------------
# Used for the final logits projection (vocab padded to a lane-dense multiple of 128).

def _linear_kernel(x_ref, w_ref, b_ref, o_ref, acc_ref):
    @pl.when(pl.program_id(2) == 0)
    def _():
        acc_ref[...] = jnp.zeros_like(acc_ref)

    acc_ref[...] += jnp.dot(x_ref[...], w_ref[...], preferred_element_type=jnp.float32)

    @pl.when(pl.program_id(2) == pl.num_programs(2) - 1)
    def _():
        o_ref[...] = (acc_ref[...] + b_ref[...]).astype(o_ref.dtype)


def linear(x, w, b, *, out_dtype=jnp.float32, tm_cap=512, tn_cap=512, tk_cap=512):
    """x: (M, K) bf16, w: (K, N) bf16, b: (1, N) f32 -> (M, N) out_dtype."""
    M, K = x.shape
    N = w.shape[1]
    tm = _pick_tile(M, tm_cap, (8,))
    tn = _pick_tile(N, tn_cap, (256, 128))
    tk = _pick_tile(K, tk_cap, (256, 128))
    grid = (M // tm, N // tn, K // tk)
    # TODO(synk): on v5e consider pipeline_mode=pl.Buffered(3) on the weight spec to hide
    # weight DMA behind the lower HBM bandwidth.
    return pl.pallas_call(
        _linear_kernel,
        out_shape=jax.ShapeDtypeStruct((M, N), out_dtype),
        grid=grid,
        in_specs=[
            pl.BlockSpec((tm, tk), lambda i, j, k: (i, k)),
            pl.BlockSpec((tk, tn), lambda i, j, k: (k, j)),
            pl.BlockSpec((1, tn), lambda i, j, k: (0, j)),
        ],
        out_specs=pl.BlockSpec((tm, tn), lambda i, j, k: (i, j)),
        scratch_shapes=[pltpu.VMEM((tm, tn), jnp.float32)],
        compiler_params=pltpu.CompilerParams(
            dimension_semantics=("parallel", "parallel", "arbitrary"),
            vmem_limit_bytes=_vmem_budget()),
    )(x, w, b)


# ---------------------- fused FFN (lin-relu-lin) + residual + LayerNorm ----------------------

def _ffn_ln_kernel(x_ref, w1_ref, b1_ref, w2_ref, b2_ref, g_ref, bt_ref, o_ref, *, eps):
    x = x_ref[...]                                                   # (tm, D) bf16
    h = jnp.dot(x, w1_ref[...], preferred_element_type=jnp.float32) + b1_ref[...]
    h = jnp.maximum(h, 0.0)                                          # (tm, d_ff) stays in VMEM
    y = jnp.dot(h.astype(w2_ref.dtype), w2_ref[...],
                preferred_element_type=jnp.float32) + b2_ref[...]
    z = x.astype(jnp.float32) + y                                    # residual
    mean = jnp.mean(z, axis=-1, keepdims=True)
    c = z - mean
    var = jnp.mean(c * c, axis=-1, keepdims=True)                    # biased var (PyTorch LN)
    out = c * jax.lax.rsqrt(var + eps) * g_ref[...] + bt_ref[...]
    o_ref[...] = out.astype(o_ref.dtype)


def ffn_ln_block(x2d, p_ff, p_ln, eps=LN_EPS, tm_cap=512):
    M, D = x2d.shape
    F = p_ff["w1"].shape[1]
    tm = _pick_tile(M, tm_cap, (8,))
    # TODO(synk): at production sizes on v7x (64 MiB VMEM) reduce tm_cap and/or add a
    # reduction grid axis over d_ff so both full weight matrices are not VMEM-resident.
    return pl.pallas_call(
        functools.partial(_ffn_ln_kernel, eps=eps),
        out_shape=jax.ShapeDtypeStruct((M, D), MM_DTYPE),
        grid=(M // tm,),
        in_specs=[
            pl.BlockSpec((tm, D), lambda i: (i, 0)),
            pl.BlockSpec((D, F), lambda i: (0, 0)),
            pl.BlockSpec((1, F), lambda i: (0, 0)),
            pl.BlockSpec((F, D), lambda i: (0, 0)),
            pl.BlockSpec((1, D), lambda i: (0, 0)),
            pl.BlockSpec((1, D), lambda i: (0, 0)),
            pl.BlockSpec((1, D), lambda i: (0, 0)),
        ],
        out_specs=pl.BlockSpec((tm, D), lambda i: (i, 0)),
        compiler_params=pltpu.CompilerParams(
            dimension_semantics=("parallel",), vmem_limit_bytes=_vmem_budget()),
    )(x2d, p_ff["w1"], p_ff["b1"], p_ff["w2"], p_ff["b2"], p_ln["w"], p_ln["b"])


# ---- fused attention: in-kernel QKV projection + MHA + out-proj + residual + LayerNorm ----

def _mha_ln_core(q, k, v, mask, ctx_ref, wo, bo, res_f32, gamma, beta,
                 *, num_heads, scale, eps):
    """q:(Sq,D) f32, k/v:(Sk,D) f32, mask:(Sq,Sk) bool, ctx_ref: (Sq,D) f32 VMEM scratch."""
    Sq, D = q.shape
    dk = D // num_heads
    mmdt = wo.dtype
    qc, kc, vc = q.astype(mmdt), k.astype(mmdt), v.astype(mmdt)
    # TODO(synk): for production dk >= 128, replace the per-head loop with a single
    # head-batched dot_general (lane-tile aligned slices).
    for h in range(num_heads):                                   # static unroll over heads
        lo = h * dk
        s = jax.lax.dot_general(qc[:, lo:lo + dk], kc[:, lo:lo + dk],    # Q @ K^T
                                (((1,), (1,)), ((), ())),
                                preferred_element_type=jnp.float32) * scale
        s = jnp.where(mask, s, jnp.float32(-1e9))                # masked_fill(mask == 0, -1e9)
        s = s - jnp.max(s, axis=-1, keepdims=True)               # stable softmax (f32, exact)
        p = jnp.exp(s)
        p = p / jnp.sum(p, axis=-1, keepdims=True)
        ctx_ref[:, lo:lo + dk] = jnp.dot(p.astype(mmdt), vc[:, lo:lo + dk],
                                         preferred_element_type=jnp.float32)
    ctx = ctx_ref[...].astype(mmdt)                              # (Sq, D): heads merged in VMEM
    o = jnp.dot(ctx, wo, preferred_element_type=jnp.float32) + bo
    z = res_f32 + o                                              # residual
    mean = jnp.mean(z, axis=-1, keepdims=True)
    c = z - mean
    var = jnp.mean(c * c, axis=-1, keepdims=True)
    return c * jax.lax.rsqrt(var + eps) * gamma + beta


def _self_attn_ln_kernel(x_ref, pad_ref, wqkv_ref, bqkv_ref, wo_ref, bo_ref, g_ref, bt_ref,
                         o_ref, ctx_ref, *, num_heads, scale, causal, eps):
    S = x_ref.shape[1]
    D = x_ref.shape[2]
    x = x_ref[0]                                                 # (S, D) bf16
    qkv = jnp.dot(x, wqkv_ref[...], preferred_element_type=jnp.float32) + bqkv_ref[...]
    q = qkv[:, :D]
    k = qkv[:, D:2 * D]
    v = qkv[:, 2 * D:]
    mask = jnp.broadcast_to(pad_ref[0] > 0.5, (S, S))            # key pad mask
    if causal:
        qi = jax.lax.broadcasted_iota(jnp.int32, (S, S), 0)
        ki = jax.lax.broadcasted_iota(jnp.int32, (S, S), 1)
        mask = jnp.logical_and(mask, ki <= qi)                   # no-peek mask built in-kernel
    out = _mha_ln_core(q, k, v, mask, ctx_ref, wo_ref[...], bo_ref[...],
                       x.astype(jnp.float32), g_ref[...], bt_ref[...],
                       num_heads=num_heads, scale=scale, eps=eps)
    o_ref[0] = out.astype(o_ref.dtype)


def _cross_attn_ln_kernel(x_ref, mem_ref, pad_ref, wq_ref, bq_ref, wkv_ref, bkv_ref,
                          wo_ref, bo_ref, g_ref, bt_ref, o_ref, ctx_ref,
                          *, num_heads, scale, eps):
    Sq = x_ref.shape[1]
    D = x_ref.shape[2]
    Sk = mem_ref.shape[1]
    x = x_ref[0]                                                 # (Sq, D) bf16
    m = mem_ref[0]                                               # (Sk, D) bf16
    q = jnp.dot(x, wq_ref[...], preferred_element_type=jnp.float32) + bq_ref[...]
    kv = jnp.dot(m, wkv_ref[...], preferred_element_type=jnp.float32) + bkv_ref[...]
    k = kv[:, :D]
    v = kv[:, D:]
    mask = jnp.broadcast_to(pad_ref[0] > 0.5, (Sq, Sk))
    out = _mha_ln_core(q, k, v, mask, ctx_ref, wo_ref[...], bo_ref[...],
                       x.astype(jnp.float32), g_ref[...], bt_ref[...],
                       num_heads=num_heads, scale=scale, eps=eps)
    o_ref[0] = out.astype(o_ref.dtype)


def self_attn_ln(x, key_pad, p_attn, p_ln, *, num_heads, causal, eps=LN_EPS):
    """x: (B, S, D) bf16, key_pad: (B, 1, S) -> LayerNorm(x + SelfAttn(x)) in bf16."""
    B, S, D = x.shape
    scale = 1.0 / math.sqrt(D // num_heads)
    # TODO(synk): for long sequences / v7x, tile the query dim (flash-style grid (B, Sq/tq)
    # with online softmax) instead of holding the full (S,S) scores per head.
    return pl.pallas_call(
        functools.partial(_self_attn_ln_kernel, num_heads=num_heads,
                          scale=scale, causal=causal, eps=eps),
        out_shape=jax.ShapeDtypeStruct((B, S, D), MM_DTYPE),
        grid=(B,),
        in_specs=[
            pl.BlockSpec((1, S, D), lambda b: (b, 0, 0)),
            pl.BlockSpec((1, 1, S), lambda b: (b, 0, 0)),
            pl.BlockSpec((D, 3 * D), lambda b: (0, 0)),
            pl.BlockSpec((1, 3 * D), lambda b: (0, 0)),
            pl.BlockSpec((D, D), lambda b: (0, 0)),
            pl.BlockSpec((1, D), lambda b: (0, 0)),
            pl.BlockSpec((1, D), lambda b: (0, 0)),
            pl.BlockSpec((1, D), lambda b: (0, 0)),
        ],
        out_specs=pl.BlockSpec((1, S, D), lambda b: (b, 0, 0)),
        scratch_shapes=[pltpu.VMEM((S, D), jnp.float32)],
        compiler_params=pltpu.CompilerParams(
            dimension_semantics=("parallel",), vmem_limit_bytes=_vmem_budget()),
    )(x, key_pad, p_attn["wqkv"], p_attn["bqkv"], p_attn["wo"], p_attn["bo"],
      p_ln["w"], p_ln["b"])


def cross_attn_ln(x, memory, key_pad, p_attn, p_ln, *, num_heads, eps=LN_EPS):
    """x: (B, St, D) bf16 (queries+residual), memory: (B, Ss, D) bf16, key_pad: (B,1,Ss)."""
    B, St, D = x.shape
    Ss = memory.shape[1]
    scale = 1.0 / math.sqrt(D // num_heads)
    return pl.pallas_call(
        functools.partial(_cross_attn_ln_kernel, num_heads=num_heads, scale=scale, eps=eps),
        out_shape=jax.ShapeDtypeStruct((B, St, D), MM_DTYPE),
        grid=(B,),
        in_specs=[
            pl.BlockSpec((1, St, D), lambda b: (b, 0, 0)),
            pl.BlockSpec((1, Ss, D), lambda b: (b, 0, 0)),
            pl.BlockSpec((1, 1, Ss), lambda b: (b, 0, 0)),
            pl.BlockSpec((D, D), lambda b: (0, 0)),        # wq
            pl.BlockSpec((1, D), lambda b: (0, 0)),        # bq
            pl.BlockSpec((D, 2 * D), lambda b: (0, 0)),    # wkv (fused K,V)
            pl.BlockSpec((1, 2 * D), lambda b: (0, 0)),    # bkv
            pl.BlockSpec((D, D), lambda b: (0, 0)),        # wo
            pl.BlockSpec((1, D), lambda b: (0, 0)),        # bo
            pl.BlockSpec((1, D), lambda b: (0, 0)),        # gamma
            pl.BlockSpec((1, D), lambda b: (0, 0)),        # beta
        ],
        out_specs=pl.BlockSpec((1, St, D), lambda b: (b, 0, 0)),
        scratch_shapes=[pltpu.VMEM((St, D), jnp.float32)],
        compiler_params=pltpu.CompilerParams(
            dimension_semantics=("parallel",), vmem_limit_bytes=_vmem_budget()),
    )(x, memory, key_pad, p_attn["wq"], p_attn["bq"], p_attn["wkv"], p_attn["bkv"],
      p_attn["wo"], p_attn["bo"], p_ln["w"], p_ln["b"])


# --------------------------------- parameters ---------------------------------

def _init_linear(key, d_in, d_out):
    k1, k2 = jax.random.split(key)
    bound = 1.0 / math.sqrt(d_in)
    w = jax.random.uniform(k1, (d_in, d_out), jnp.float32, -bound, bound)
    b = jax.random.uniform(k2, (1, d_out), jnp.float32, -bound, bound)
    return w.astype(MM_DTYPE), b              # weights bf16 (MXU), biases f32


def init_layernorm(d):
    return {"w": jnp.ones((1, d), jnp.float32), "b": jnp.zeros((1, d), jnp.float32)}


def init_self_mha(key, d_model):
    k1, k2 = jax.random.split(key)
    wqkv, bqkv = _init_linear(k1, d_model, 3 * d_model)    # fused Q,K,V weights
    wo, bo = _init_linear(k2, d_model, d_model)
    return {"wqkv": wqkv, "bqkv": bqkv, "wo": wo, "bo": bo}


def init_cross_mha(key, d_model):
    k1, k2, k3 = jax.random.split(key, 3)
    wq, bq = _init_linear(k1, d_model, d_model)
    wkv, bkv = _init_linear(k2, d_model, 2 * d_model)      # fused K,V weights
    wo, bo = _init_linear(k3, d_model, d_model)
    return {"wq": wq, "bq": bq, "wkv": wkv, "bkv": bkv, "wo": wo, "bo": bo}


def init_ffn(key, d_model, d_ff):
    k1, k2 = jax.random.split(key)
    w1, b1 = _init_linear(k1, d_model, d_ff)
    w2, b2 = _init_linear(k2, d_ff, d_model)
    return {"w1": w1, "b1": b1, "w2": w2, "b2": b2}


def init_encoder_layer(key, d_model, d_ff):
    k1, k2 = jax.random.split(key)
    return {"attn": init_self_mha(k1, d_model),
            "ff": init_ffn(k2, d_model, d_ff),
            "ln1": init_layernorm(d_model),
            "ln2": init_layernorm(d_model)}


def init_decoder_layer(key, d_model, d_ff):
    k1, k2, k3 = jax.random.split(key, 3)
    return {"self": init_self_mha(k1, d_model),
            "cross": init_cross_mha(k2, d_model),
            "ff": init_ffn(k3, d_model, d_ff),
            "ln1": init_layernorm(d_model),
            "ln2": init_layernorm(d_model),
            "ln3": init_layernorm(d_model)}


def init_transformer(key, src_vocab, tgt_vocab, d_model, d_ff, num_layers):
    k_ee, k_de, k_enc, k_dec, k_out = jax.random.split(key, 5)
    wout, bout = _init_linear(k_out, d_model, tgt_vocab)
    # Lane-dense logits: pad vocab up to a multiple of 128 (unmasked vector stores).
    n_pad = ((tgt_vocab + 127) // 128) * 128
    wout = jnp.pad(wout, ((0, 0), (0, n_pad - tgt_vocab)))
    bout = jnp.pad(bout, ((0, 0), (0, n_pad - tgt_vocab)))
    return {
        "encoder": {
            "embedding": jax.random.normal(k_ee, (src_vocab, d_model), jnp.float32),
            "layers": [init_encoder_layer(k, d_model, d_ff)
                       for k in jax.random.split(k_enc, num_layers)],
        },
        "decoder": {
            "embedding": jax.random.normal(k_de, (tgt_vocab, d_model), jnp.float32),
            "layers": [init_decoder_layer(k, d_model, d_ff)
                       for k in jax.random.split(k_dec, num_layers)],
        },
        "out": {"w": wout, "b": bout},
    }


def positional_encoding(max_len, d_model):
    position = jnp.arange(max_len, dtype=jnp.float32)[:, None]
    div_term = jnp.exp(jnp.arange(0, d_model, 2, dtype=jnp.float32)
                       * (-math.log(10000.0) / d_model))
    pe = jnp.zeros((max_len, d_model), jnp.float32)
    pe = pe.at[:, 0::2].set(jnp.sin(position * div_term))
    pe = pe.at[:, 1::2].set(jnp.cos(position * div_term))
    return pe


# --------------------------------- model forward ---------------------------------

def encoder_layer_forward(p, x, src_pad, num_heads):
    B, S, D = x.shape
    x = self_attn_ln(x, src_pad, p["attn"], p["ln1"], num_heads=num_heads, causal=False)
    x = ffn_ln_block(x.reshape(B * S, D), p["ff"], p["ln2"]).reshape(B, S, D)
    return x


def decoder_layer_forward(p, x, memory, src_pad, tgt_pad, num_heads):
    B, St, D = x.shape
    # masked self-attention (QKV projection fused into the kernel)
    x = self_attn_ln(x, tgt_pad, p["self"], p["ln1"], num_heads=num_heads, causal=True)
    # cross attention (Q and fused KV projections happen inside the kernel)
    x = cross_attn_ln(x, memory, src_pad, p["cross"], p["ln2"], num_heads=num_heads)
    # feed forward
    x = ffn_ln_block(x.reshape(B * St, D), p["ff"], p["ln3"]).reshape(B, St, D)
    return x


def transformer_forward(params, src, tgt, pe, *, num_heads, tgt_vocab):
    B, Ss = src.shape
    St = tgt.shape[1]
    # Compact key-pad masks (B, 1, S); head broadcast + causal pattern are generated
    # inside the attention kernels (no (B*H, Sq, Sk) mask DMA).
    src_pad = (src != 0).astype(jnp.float32)[:, None, :]
    tgt_pad = (tgt != 0).astype(jnp.float32)[:, None, :]

    # TODO(synk): embedding gather stays as XLA jnp.take; dropout is identity (eval mode).
    x = (jnp.take(params["encoder"]["embedding"], src, axis=0)
         + pe[None, :Ss, :]).astype(MM_DTYPE)
    for lp in params["encoder"]["layers"]:
        x = encoder_layer_forward(lp, x, src_pad, num_heads)
    memory = x

    y = (jnp.take(params["decoder"]["embedding"], tgt, axis=0)
         + pe[None, :St, :]).astype(MM_DTYPE)
    for lp in params["decoder"]["layers"]:
        y = decoder_layer_forward(lp, y, memory, src_pad, tgt_pad, num_heads)

    D = y.shape[2]
    logits = linear(y.reshape(B * St, D), params["out"]["w"], params["out"]["b"],
                    out_dtype=jnp.float32)
    return logits.reshape(B, St, -1)[:, :, :tgt_vocab]


# ----------------------------------- main -----------------------------------

if __name__ == "__main__":
    src_vocab_size = 50
    tgt_vocab_size = 60
    d_model = 32        # NOTE: production-sized models should use d_model >= 128 (lane-dense)
    num_heads = 4
    d_ff = 64
    num_layers = 2
    max_len = 64
    B, S_src, S_tgt = 2, 8, 8

    key = jax.random.PRNGKey(0)
    k_params, k_src, k_tgt = jax.random.split(key, 3)

    params = init_transformer(k_params, src_vocab_size, tgt_vocab_size,
                              d_model, d_ff, num_layers)
    pe = positional_encoding(max_len, d_model)

    src = jax.random.randint(k_src, (B, S_src), 0, src_vocab_size, dtype=jnp.int32)
    tgt = jax.random.randint(k_tgt, (B, S_tgt), 0, tgt_vocab_size, dtype=jnp.int32)

    fwd = jax.jit(functools.partial(transformer_forward, num_heads=num_heads,
                                    tgt_vocab=tgt_vocab_size))
    logits = fwd(params, src, tgt, pe)
    jax.block_until_ready(logits)

    assert logits.shape == (B, S_tgt, tgt_vocab_size)
    assert bool(jnp.all(jnp.isfinite(logits)))
    print("KERNEL_OK")
</pallas_src>

<mosaic_0001>
module attributes {stable_mosaic.version = 11 : i64} {
  func.func @_ffn_ln_kernel(%arg0: i32, %arg1: memref<16x32xbf16, #tpu.memory_space<vmem>>, %arg2: memref<32x64xbf16, #tpu.memory_space<vmem>>, %arg3: memref<1x64xf32, #tpu.memory_space<vmem>>, %arg4: memref<64x32xbf16, #tpu.memory_space<vmem>>, %arg5: memref<1x32xf32, #tpu.memory_space<vmem>>, %arg6: memref<1x32xf32, #tpu.memory_space<vmem>>, %arg7: memref<1x32xf32, #tpu.memory_space<vmem>>, %arg8: memref<16x32xbf16, #tpu.memory_space<vmem>>) attributes {dimension_semantics = [#tpu.dimension_semantics<parallel>], iteration_bounds = array<i64: 1>, scalar_prefetch = 0 : i64, scratch_operands = 0 : i64, tpu.core_type = #tpu.core_type<tc>, window_params = [{transform_indices = @transform_0, window_bounds = array<i64: 16, 32>}, {pipeline_mode = #tpu.pipeline_mode<synchronous>, transform_indices = @transform_1, window_bounds = array<i64: 32, 64>}, {pipeline_mode = #tpu.pipeline_mode<synchronous>, transform_indices = @transform_2, window_bounds = array<i64: 1, 64>}, {pipeline_mode = #tpu.pipeline_mode<synchronous>, transform_indices = @transform_3, window_bounds = array<i64: 64, 32>}, {pipeline_mode = #tpu.pipeline_mode<synchronous>, transform_indices = @transform_4, window_bounds = array<i64: 1, 32>}, {pipeline_mode = #tpu.pipeline_mode<synchronous>, transform_indices = @transform_5, window_bounds = array<i64: 1, 32>}, {pipeline_mode = #tpu.pipeline_mode<synchronous>, transform_indices = @transform_6, window_bounds = array<i64: 1, 32>}, {transform_indices = @transform_7, window_bounds = array<i64: 16, 32>}]} {
    %c0 = arith.constant 0 : index
    %c0_0 = arith.constant 0 : index
    %0 = vector.load %arg1[%c0, %c0_0] : memref<16x32xbf16, #tpu.memory_space<vmem>>, vector<16x32xbf16>
    %c0_1 = arith.constant 0 : index
    %c0_2 = arith.constant 0 : index
    %1 = vector.load %arg2[%c0_1, %c0_2] : memref<32x64xbf16, #tpu.memory_space<vmem>>, vector<32x64xbf16>
    %cst = arith.constant dense<0.000000e+00> : vector<16x64xf32>
    %2 = tpu.matmul %0, %1, %cst {dimension_numbers = #tpu.dot_dimension_numbers<[1], [0], [0], [1], [0, 0, 1, 1], [], []>} : vector<16x32xbf16>, vector<32x64xbf16>, vector<16x64xf32> -> vector<16x64xf32>
    %c0_3 = arith.constant 0 : index
    %c0_4 = arith.constant 0 : index
    %3 = vector.load %arg3[%c0_3, %c0_4] : memref<1x64xf32, #tpu.memory_space<vmem>>, vector<1x64xf32>
    %4 = vector.broadcast %3 : vector<1x64xf32> to vector<16x64xf32>
    %5 = arith.addf %2, %4 : vector<16x64xf32>
    %cst_5 = arith.constant 0.000000e+00 : f32
    %6 = vector.broadcast %cst_5 : f32 to vector<16x64xf32>
    %7 = arith.maximumf %5, %6 : vector<16x64xf32>
    %8 = arith.truncf %7 : vector<16x64xf32> to vector<16x64xbf16>
    %c0_6 = arith.constant 0 : index
    %c0_7 = arith.constant 0 : index
    %9 = vector.load %arg4[%c0_6, %c0_7] : memref<64x32xbf16, #tpu.memory_space<vmem>>, vector<64x32xbf16>
    %cst_8 = arith.constant dense<0.000000e+00> : vector<16x32xf32>
    %10 = tpu.matmul %8, %9, %cst_8 {dimension_numbers = #tpu.dot_dimension_numbers<[1], [0], [0], [1], [0, 0, 1, 1], [], []>} : vector<16x64xbf16>, vector<64x32xbf16>, vector<16x32xf32> -> vector<16x32xf32>
    %c0_9 = arith.constant 0 : index
    %c0_10 = arith.constant 0 : index
    %11 = vector.load %arg5[%c0_9, %c0_10] : memref<1x32xf32, #tpu.memory_space<vmem>>, vector<1x32xf32>
    %12 = vector.broadcast %11 : vector<1x32xf32> to vector<16x32xf32>
    %13 = arith.addf %10, %12 : vector<16x32xf32>
    %14 = arith.extf %0 : vector<16x32xbf16> to vector<16x32xf32>
    %15 = arith.addf %14, %13 : vector<16x32xf32>
    %cst_11 = arith.constant dense<0.000000e+00> : vector<16xf32>
    %16 = vector.multi_reduction <add>, %15, %cst_11 [1] : vector<16x32xf32> to vector<16xf32>
    %17 = vector.shape_cast %16 : vector<16xf32> to vector<16x1xf32>
    %cst_12 = arith.constant 3.200000e+01 : f32
    %18 = vector.broadcast %cst_12 : f32 to vector<16x1xf32>
    %19 = arith.divf %17, %18 : vector<16x1xf32>
    %20 = vector.broadcast %19 : vector<16x1xf32> to vector<16x32xf32>
    %21 = arith.subf %15, %20 : vector<16x32xf32>
    %22 = arith.mulf %21, %21 : vector<16x32xf32>
    %cst_13 = arith.constant dense<0.000000e+00> : vector<16xf32>
    %23 = vector.multi_reduction <add>, %22, %cst_13 [1] : vector<16x32xf32> to vector<16xf32>
    %24 = vector.shape_cast %23 : vector<16xf32> to vector<16x1xf32>
    %cst_14 = arith.constant 3.200000e+01 : f32
    %25 = vector.broadcast %cst_14 : f32 to vector<16x1xf32>
    %26 = arith.divf %24, %25 : vector<16x1xf32>
    %cst_15 = arith.constant 9.99999974E-6 : f32
    %27 = vector.broadcast %cst_15 : f32 to vector<16x1xf32>
    %28 = arith.addf %26, %27 : vector<16x1xf32>
    %29 = math.rsqrt %28 : vector<16x1xf32>
    %30 = vector.broadcast %29 : vector<16x1xf32> to vector<16x32xf32>
    %31 = arith.mulf %21, %30 : vector<16x32xf32>
    %c0_16 = arith.constant 0 : index
    %c0_17 = arith.constant 0 : index
    %32 = vector.load %arg6[%c0_16, %c0_17] : memref<1x32xf32, #tpu.memory_space<vmem>>, vector<1x32xf32>
    %33 = vector.broadcast %32 : vector<1x32xf32> to vector<16x32xf32>
    %34 = arith.mulf %31, %33 : vector<16x32xf32>
    %c0_18 = arith.constant 0 : index
    %c0_19 = arith.constant 0 : index
    %35 = vector.load %arg7[%c0_18, %c0_19] : memref<1x32xf32, #tpu.memory_space<vmem>>, vector<1x32xf32>
    %36 = vector.broadcast %35 : vector<1x32xf32> to vector<16x32xf32>
    %37 = arith.addf %34, %36 : vector<16x32xf32>
    %38 = arith.truncf %37 : vector<16x32xf32> to vector<16x32xbf16>
    %c0_20 = arith.constant 0 : index
    %c0_21 = arith.constant 0 : index
    %39 = vector.load %arg8[%c0_20, %c0_21] : memref<16x32xbf16, #tpu.memory_space<vmem>>, vector<16x32xbf16>
    tpu.vector_store %arg8[%c0_20, %c0_21], %38 {strides = array<i32>} : memref<16x32xbf16, #tpu.memory_space<vmem>>, vector<16x32xbf16>,
    return
  }
  func.func @transform_0(%arg0: i32) -> (i32, i32) {
    %c0_i32 = arith.constant 0 : i32
    %c0_i32_0 = arith.constant 0 : i32
    return %arg0, %c0_i32 : i32, i32
  }
  func.func @transform_1(%arg0: i32) -> (i32, i32) {
    %c0_i32 = arith.constant 0 : i32
    %c0_i32_0 = arith.constant 0 : i32
    %c0_i32_1 = arith.constant 0 : i32
    return %c0_i32, %c0_i32_0 : i32, i32
  }
  func.func @transform_2(%arg0: i32) -> (i32, i32) {
    %c0_i32 = arith.constant 0 : i32
    %c0_i32_0 = arith.constant 0 : i32
    %c0_i32_1 = arith.constant 0 : i32
    return %c0_i32, %c0_i32_0 : i32, i32
  }
  func.func @transform_3(%arg0: i32) -> (i32, i32) {
    %c0_i32 = arith.constant 0 : i32
    %c0_i32_0 = arith.constant 0 : i32
    %c0_i32_1 = arith.constant 0 : i32
    return %c0_i32, %c0_i32_0 : i32, i32
  }
  func.func @transform_4(%arg0: i32) -> (i32, i32) {
    %c0_i32 = arith.constant 0 : i32
    %c0_i32_0 = arith.constant 0 : i32
    %c0_i32_1 = arith.constant 0 : i32
    return %c0_i32, %c0_i32_0 : i32, i32
  }
  func.func @transform_5(%arg0: i32) -> (i32, i32) {
    %c0_i32 = arith.constant 0 : i32
    %c0_i32_0 = arith.constant 0 : i32
    %c0_i32_1 = arith.constant 0 : i32
    return %c0_i32, %c0_i32_0 : i32, i32
  }
  func.func @transform_6(%arg0: i32) -> (i32, i32) {
    %c0_i32 = arith.constant 0 : i32
    %c0_i32_0 = arith.constant 0 : i32
    %c0_i32_1 = arith.constant 0 : i32
    return %c0_i32, %c0_i32_0 : i32, i32
  }
  func.func @transform_7(%arg0: i32) -> (i32, i32) {
    %c0_i32 = arith.constant 0 : i32
    %c0_i32_0 = arith.constant 0 : i32
    return %arg0, %c0_i32 : i32, i32
  }
}

module attributes {stable_mosaic.version = 11 : i64} {
  func.func @_self_attn_ln_kernel(%arg0: i32, %arg1: memref<1x8x32xbf16, #tpu.memory_space<vmem>>, %arg2: memref<1x1x8xf32, #tpu.memory_space<vmem>>, %arg3: memref<32x96xbf16, #tpu.memory_space<vmem>>, %arg4: memref<1x96xf32, #tpu.memory_space<vmem>>, %arg5: memref<32x32xbf16, #tpu.memory_space<vmem>>, %arg6: memref<1x32xf32, #tpu.memory_space<vmem>>, %arg7: memref<1x32xf32, #tpu.memory_space<vmem>>, %arg8: memref<1x32xf32, #tpu.memory_space<vmem>>, %arg9: memref<1x8x32xbf16, #tpu.memory_space<vmem>>, %arg10: memref<8x32xf32, #tpu.memory_space<vmem>>) attributes {dimension_semantics = [#tpu.dimension_semantics<parallel>], iteration_bounds = array<i64: 2>, scalar_prefetch = 0 : i64, scratch_operands = 1 : i64, tpu.core_type = #tpu.core_type<tc>, window_params = [{transform_indices = @transform_0, window_bounds = array<i64: 1, 8, 32>}, {transform_indices = @transform_1, window_bounds = array<i64: 1, 1, 8>}, {pipeline_mode = #tpu.pipeline_mode<synchronous>, transform_indices = @transform_2, window_bounds = array<i64: 32, 96>}, {pipeline_mode = #tpu.pipeline_mode<synchronous>, transform_indices = @transform_3, window_bounds = array<i64: 1, 96>}, {pipeline_mode = #tpu.pipeline_mode<synchronous>, transform_indices = @transform_4, window_bounds = array<i64: 32, 32>}, {pipeline_mode = #tpu.pipeline_mode<synchronous>, transform_indices = @transform_5, window_bounds = array<i64: 1, 32>}, {pipeline_mode = #tpu.pipeline_mode<synchronous>, transform_indices = @transform_6, window_bounds = array<i64: 1, 32>}, {pipeline_mode = #tpu.pipeline_mode<synchronous>, transform_indices = @transform_7, window_bounds = array<i64: 1, 32>}, {transform_indices = @transform_8, window_bounds = array<i64: 1, 8, 32>}]} {
    %c0 = arith.constant 0 : index
    %c0_0 = arith.constant 0 : index
    %c0_1 = arith.constant 0 : index
    %0 = vector.load %arg1[%c0, %c0_0, %c0_1] : memref<1x8x32xbf16, #tpu.memory_space<vmem>>, vector<1x8x32xbf16>
    %1 = vector.shape_cast %0 : vector<1x8x32xbf16> to vector<8x32xbf16>
    %c0_2 = arith.constant 0 : index
    %c0_3 = arith.constant 0 : index
    %2 = vector.load %arg3[%c0_2, %c0_3] : memref<32x96xbf16, #tpu.memory_space<vmem>>, vector<32x96xbf16>
    %cst = arith.constant dense<0.000000e+00> : vector<8x96xf32>
    %3 = tpu.matmul %1, %2, %cst {dimension_numbers = #tpu.dot_dimension_numbers<[1], [0], [0], [1], [0, 0, 1, 1], [], []>} : vector<8x32xbf16>, vector<32x96xbf16>, vector<8x96xf32> -> vector<8x96xf32>
    %c0_4 = arith.constant 0 : index
    %c0_5 = arith.constant 0 : index
    %4 = vector.load %arg4[%c0_4, %c0_5] : memref<1x96xf32, #tpu.memory_space<vmem>>, vector<1x96xf32>
    %5 = vector.broadcast %4 : vector<1x96xf32> to vector<8x96xf32>
    %6 = arith.addf %3, %5 : vector<8x96xf32>
    %7 = vector.extract_strided_slice %6 {offsets = [0, 0], sizes = [8, 32], strides = [1, 1]} : vector<8x96xf32> to vector<8x32xf32>
    %8 = vector.extract_strided_slice %6 {offsets = [0, 32], sizes = [8, 32], strides = [1, 1]} : vector<8x96xf32> to vector<8x32xf32>
    %9 = vector.extract_strided_slice %6 {offsets = [0, 64], sizes = [8, 32], strides = [1, 1]} : vector<8x96xf32> to vector<8x32xf32>
    %c0_6 = arith.constant 0 : index
    %c0_7 = arith.constant 0 : index
    %c0_8 = arith.constant 0 : index
    %10 = vector.load %arg2[%c0_6, %c0_7, %c0_8] : memref<1x1x8xf32, #tpu.memory_space<vmem>>, vector<1x1x8xf32>
    %11 = vector.shape_cast %10 : vector<1x1x8xf32> to vector<1x8xf32>
    %cst_9 = arith.constant 5.000000e-01 : f32
    %12 = vector.broadcast %cst_9 : f32 to vector<1x8xf32>
    %13 = arith.cmpf ogt, %11, %12 : vector<1x8xf32>
    %14 = vector.shape_cast %13 : vector<1x8xi1> to vector<1x8xi1>
    %15 = vector.broadcast %14 : vector<1x8xi1> to vector<8x8xi1>
    %16 = tpu.iota {dimensions = array<i32: 0>} : vector<8x8xi32>
    %17 = tpu.iota {dimensions = array<i32: 1>} : vector<8x8xi32>
    %18 = arith.cmpi sle, %17, %16 : vector<8x8xi32>
    %19 = arith.andi %15, %18 : vector<8x8xi1>
    %c0_10 = arith.constant 0 : index
    %c0_11 = arith.constant 0 : index
    %20 = vector.load %arg5[%c0_10, %c0_11] : memref<32x32xbf16, #tpu.memory_space<vmem>>, vector<32x32xbf16>
    %c0_12 = arith.constant 0 : index
    %c0_13 = arith.constant 0 : index
    %21 = vector.load %arg6[%c0_12, %c0_13] : memref<1x32xf32, #tpu.memory_space<vmem>>, vector<1x32xf32>
    %22 = arith.extf %1 : vector<8x32xbf16> to vector<8x32xf32>
    %c0_14 = arith.constant 0 : index
    %c0_15 = arith.constant 0 : index
    %23 = vector.load %arg7[%c0_14, %c0_15] : memref<1x32xf32, #tpu.memory_space<vmem>>, vector<1x32xf32>
    %c0_16 = arith.constant 0 : index
    %c0_17 = arith.constant 0 : index
    %24 = vector.load %arg8[%c0_16, %c0_17] : memref<1x32xf32, #tpu.memory_space<vmem>>, vector<1x32xf32>
    %25 = arith.truncf %7 : vector<8x32xf32> to vector<8x32xbf16>
    %26 = arith.truncf %8 : vector<8x32xf32> to vector<8x32xbf16>
    %27 = arith.truncf %9 : vector<8x32xf32> to vector<8x32xbf16>
    %28 = vector.extract_strided_slice %25 {offsets = [0, 0], sizes = [8, 8], strides = [1, 1]} : vector<8x32xbf16> to vector<8x8xbf16>
    %29 = vector.extract_strided_slice %26 {offsets = [0, 0], sizes = [8, 8], strides = [1, 1]} : vector<8x32xbf16> to vector<8x8xbf16>
    %cst_18 = arith.constant dense<0.000000e+00> : vector<8x8xf32>
    %30 = tpu.matmul %28, %29, %cst_18 {dimension_numbers = #tpu.dot_dimension_numbers<[1], [1], [0], [0], [0, 0, 1, 0], [], []>} : vector<8x8xbf16>, vector<8x8xbf16>, vector<8x8xf32> -> vector<8x8xf32>
    %cst_19 = arith.constant 0.353553385 : f32
    %31 = vector.broadcast %cst_19 : f32 to vector<8x8xf32>
    %32 = arith.mulf %30, %31 : vector<8x8xf32>
    %cst_20 = arith.constant -1.000000e+09 : f32
    %33 = vector.broadcast %cst_20 : f32 to vector<8x8xf32>
    %34 = arith.select %19, %32, %33 : vector<8x8xi1>, vector<8x8xf32>
    %cst_21 = arith.constant dense<0xFF800000> : vector<8xf32>
    %35 = vector.multi_reduction <maximumf>, %34, %cst_21 [1] : vector<8x8xf32> to vector<8xf32>
    %36 = vector.shape_cast %35 : vector<8xf32> to vector<8x1xf32>
    %37 = vector.broadcast %36 : vector<8x1xf32> to vector<8x8xf32>
    %38 = arith.subf %34, %37 : vector<8x8xf32>
    %39 = math.exp %38 : vector<8x8xf32>
    %cst_22 = arith.constant dense<0.000000e+00> : vector<8xf32>
    %40 = vector.multi_reduction <add>, %39, %cst_22 [1] : vector<8x8xf32> to vector<8xf32>
    %41 = vector.shape_cast %40 : vector<8xf32> to vector<8x1xf32>
    %42 = vector.broadcast %41 : vector<8x1xf32> to vector<8x8xf32>
    %43 = arith.divf %39, %42 : vector<8x8xf32>
    %44 = arith.truncf %43 : vector<8x8xf32> to vector<8x8xbf16>
    %45 = vector.extract_strided_slice %27 {offsets = [0, 0], sizes = [8, 8], strides = [1, 1]} : vector<8x32xbf16> to vector<8x8xbf16>
    %cst_23 = arith.constant dense<0.000000e+00> : vector<8x8xf32>
    %46 = tpu.matmul %44, %45, %cst_23 {dimension_numbers = #tpu.dot_dimension_numbers<[1], [0], [0], [1], [0, 0, 1, 1], [], []>} : vector<8x8xbf16>, vector<8x8xbf16>, vector<8x8xf32> -> vector<8x8xf32>
    %c0_24 = arith.constant 0 : index
    %c0_25 = arith.constant 0 : index
    %47 = vector.load %arg10[%c0_24, %c0_25] : memref<8x32xf32, #tpu.memory_space<vmem>>, vector<8x8xf32>
    tpu.vector_store %arg10[%c0_24, %c0_25], %46 {strides = array<i32>} : memref<8x32xf32, #tpu.memory_space<vmem>>, vector<8x8xf32>,
    %48 = vector.extract_strided_slice %25 {offsets = [0, 8], sizes = [8, 8], strides = [1, 1]} : vector<8x32xbf16> to vector<8x8xbf16>
    %49 = vector.extract_strided_slice %26 {offsets = [0, 8], sizes = [8, 8], strides = [1, 1]} : vector<8x32xbf16> to vector<8x8xbf16>
    %cst_26 = arith.constant dense<0.000000e+00> : vector<8x8xf32>
    %50 = tpu.matmul %48, %49, %cst_26 {dimension_numbers = #tpu.dot_dimension_numbers<[1], [1], [0], [0], [0, 0, 1, 0], [], []>} : vector<8x8xbf16>, vector<8x8xbf16>, vector<8x8xf32> -> vector<8x8xf32>
    %cst_27 = arith.constant 0.353553385 : f32
    %51 = vector.broadcast %cst_27 : f32 to vector<8x8xf32>
    %52 = arith.mulf %50, %51 : vector<8x8xf32>
    %cst_28 = arith.constant -1.000000e+09 : f32
    %53 = vector.broadcast %cst_28 : f32 to vector<8x8xf32>
    %54 = arith.select %19, %52, %53 : vector<8x8xi1>, vector<8x8xf32>
    %cst_29 = arith.constant dense<0xFF800000> : vector<8xf32>
    %55 = vector.multi_reduction <maximumf>, %54, %cst_29 [1] : vector<8x8xf32> to vector<8xf32>
    %56 = vector.shape_cast %55 : vector<8xf32> to vector<8x1xf32>
    %57 = vector.broadcast %56 : vector<8x1xf32> to vector<8x8xf32>
    %58 = arith.subf %54, %57 : vector<8x8xf32>
    %59 = math.exp %58 : vector<8x8xf32>
    %cst_30 = arith.constant dense<0.000000e+00> : vector<8xf32>
    %60 = vector.multi_reduction <add>, %59, %cst_30 [1] : vector<8x8xf32> to vector<8xf32>
    %61 = vector.shape_cast %60 : vector<8xf32> to vector<8x1xf32>
    %62 = vector.broadcast %61 : vector<8x1xf32> to vector<8x8xf32>
    %63 = arith.divf %59, %62 : vector<8x8xf32>
    %64 = arith.truncf %63 : vector<8x8xf32> to vector<8x8xbf16>
    %65 = vector.extract_strided_slice %27 {offsets = [0, 8], sizes = [8, 8], strides = [1, 1]} : vector<8x32xbf16> to vector<8x8xbf16>
    %cst_31 = arith.constant dense<0.000000e+00> : vector<8x8xf32>
    %66 = tpu.matmul %64, %65, %cst_31 {dimension_numbers = #tpu.dot_dimension_numbers<[1], [0], [0], [1], [0, 0, 1, 1], [], []>} : vector<8x8xbf16>, vector<8x8xbf16>, vector<8x8xf32> -> vector<8x8xf32>
    %c0_32 = arith.constant 0 : index
    %c8 = arith.constant 8 : index
    %67 = vector.load %arg10[%c0_32, %c8] : memref<8x32xf32, #tpu.memory_space<vmem>>, vector<8x8xf32>
    tpu.vector_store %arg10[%c0_32, %c8], %66 {strides = array<i32>} : memref<8x32xf32, #tpu.memory_space<vmem>>, vector<8x8xf32>,
    %68 = vector.extract_strided_slice %25 {offsets = [0, 16], sizes = [8, 8], strides = [1, 1]} : vector<8x32xbf16> to vector<8x8xbf16>
    %69 = vector.extract_strided_slice %26 {offsets = [0, 16], sizes = [8, 8], strides = [1, 1]} : vector<8x32xbf16> to vector<8x8xbf16>
    %cst_33 = arith.constant dense<0.000000e+00> : vector<8x8xf32>
    %70 = tpu.matmul %68, %69, %cst_33 {dimension_numbers = #tpu.dot_dimension_numbers<[1], [1], [0], [0], [0, 0, 1, 0], [], []>} : vector<8x8xbf16>, vector<8x8xbf16>, vector<8x8xf32> -> vector<8x8xf32>
    %cst_34 = arith.constant 0.353553385 : f32
    %71 = vector.broadcast %cst_34 : f32 to vector<8x8xf32>
    %72 = arith.mulf %70, %71 : vector<8x8xf32>
    %cst_35 = arith.constant -1.000000e+09 : f32
    %73 = vector.broadcast %cst_35 : f32 to vector<8x8xf32>
    %74 = arith.select %19, %72, %73 : vector<8x8xi1>, vector<8x8xf32>
    %cst_36 = arith.constant dense<0xFF800000> : vector<8xf32>
    %75 = vector.multi_reduction <maximumf>, %74, %cst_36 [1] : vector<8x8xf32> to vector<8xf32>
    %76 = vector.shape_cast %75 : vector<8xf32> to vector<8x1xf32>
    %77 = vector.broadcast %76 : vector<8x1xf32> to vector<8x8xf32>
    %78 = arith.subf %74, %77 : vector<8x8xf32>
    %79 = math.exp %78 : vector<8x8xf32>
    %cst_37 = arith.constant dense<0.000000e+00> : vector<8xf32>
    %80 = vector.multi_reduction <add>, %79, %cst_37 [1] : vector<8x8xf32> to vector<8xf32>
    %81 = vector.shape_cast %80 : vector<8xf32> to vector<8x1xf32>
    %82 = vector.broadcast %81 : vector<8x1xf32> to vector<8x8xf32>
    %83 = arith.divf %79, %82 : vector<8x8xf32>
    %84 = arith.truncf %83 : vector<8x8xf32> to vector<8x8xbf16>
    %85 = vector.extract_strided_slice %27 {offsets = [0, 16], sizes = [8, 8], strides = [1, 1]} : vector<8x32xbf16> to vector<8x8xbf16>
    %cst_38 = arith.constant dense<0.000000e+00> : vector<8x8xf32>
    %86 = tpu.matmul %84, %85, %cst_38 {dimension_numbers = #tpu.dot_dimension_numbers<[1], [0], [0], [1], [0, 0, 1, 1], [], []>} : vector<8x8xbf16>, vector<8x8xbf16>, vector<8x8xf32> -> vector<8x8xf32>
    %c0_39 = arith.constant 0 : index
    %c16 = arith.constant 16 : index
    %87 = vector.load %arg10[%c0_39, %c16] : memref<8x32xf32, #tpu.memory_space<vmem>>, vector<8x8xf32>
    tpu.vector_store %arg10[%c0_39, %c16], %86 {strides = array<i32>} : memref<8x32xf32, #tpu.memory_space<vmem>>, vector<8x8xf32>,
    %88 = vector.extract_strided_slice %25 {offsets = [0, 24], sizes = [8, 8], strides = [1, 1]} : vector<8x32xbf16> to vector<8x8xbf16>
    %89 = vector.extract_strided_slice %26 {offsets = [0, 24], sizes = [8, 8], strides = [1, 1]} : vector<8x32xbf16> to vector<8x8xbf16>
    %cst_40 = arith.constant dense<0.000000e+00> : vector<8x8xf32>
    %90 = tpu.matmul %88, %89, %cst_40 {dimension_numbers = #tpu.dot_dimension_numbers<[1], [1], [0], [0], [0, 0, 1, 0], [], []>} : vector<8x8xbf16>, vector<8x8xbf16>, vector<8x8xf32> -> vector<8x8xf32>
    %cst_41 = arith.constant 0.353553385 : f32
    %91 = vector.broadcast %cst_41 : f32 to vector<8x8xf32>
    %92 = arith.mulf %90, %91 : vector<8x8xf32>
    %cst_42 = arith.constant -1.000000e+09 : f32
    %93 = vector.broadcast %cst_42 : f32 to vector<8x8xf32>
    %94 = arith.select %19, %92, %93 : vector<8x8xi1>, vector<8x8xf32>
    %cst_43 = arith.constant dense<0xFF800000> : vector<8xf32>
    %95 = vector.multi_reduction <maximumf>, %94, %cst_43 [1] : vector<8x8xf32> to vector<8xf32>
    %96 = vector.shape_cast %95 : vector<8xf32> to vector<8x1xf32>
    %97 = vector.broadcast %96 : vector<8x1xf32> to vector<8x8xf32>
    %98 = arith.subf %94, %97 : vector<8x8xf32>
    %99 = math.exp %98 : vector<8x8xf32>
    %cst_44 = arith.constant dense<0.000000e+00> : vector<8xf32>
    %100 = vector.multi_reduction <add>, %99, %cst_44 [1] : vector<8x8xf32> to vector<8xf32>
    %101 = vector.shape_cast %100 : vector<8xf32> to vector<8x1xf32>
    %102 = vector.broadcast %101 : vector<8x1xf32> to vector<8x8xf32>
    %103 = arith.divf %99, %102 : vector<8x8xf32>
    %104 = arith.truncf %103 : vector<8x8xf32> to vector<8x8xbf16>
    %105 = vector.extract_strided_slice %27 {offsets = [0, 24], sizes = [8, 8], strides = [1, 1]} : vector<8x32xbf16> to vector<8x8xbf16>
    %cst_45 = arith.constant dense<0.000000e+00> : vector<8x8xf32>
    %106 = tpu.matmul %104, %105, %cst_45 {dimension_numbers = #tpu.dot_dimension_numbers<[1], [0], [0], [1], [0, 0, 1, 1], [], []>} : vector<8x8xbf16>, vector<8x8xbf16>, vector<8x8xf32> -> vector<8x8xf32>
    %c0_46 = arith.constant 0 : index
    %c24 = arith.constant 24 : index
    %107 = vector.load %arg10[%c0_46, %c24] : memref<8x32xf32, #tpu.memory_space<vmem>>, vector<8x8xf32>
    tpu.vector_store %arg10[%c0_46, %c24], %106 {strides = array<i32>} : memref<8x32xf32, #tpu.memory_space<vmem>>, vector<8x8xf32>,
    %c0_47 = arith.constant 0 : index
    %c0_48 = arith.constant 0 : index
    %108 = vector.load %arg10[%c0_47, %c0_48] : memref<8x32xf32, #tpu.memory_space<vmem>>, vector<8x32xf32>
    %109 = arith.truncf %108 : vector<8x32xf32> to vector<8x32xbf16>
    %cst_49 = arith.constant dense<0.000000e+00> : vector<8x32xf32>
    %110 = tpu.matmul %109, %20, %cst_49 {dimension_numbers = #tpu.dot_dimension_numbers<[1], [0], [0], [1], [0, 0, 1, 1], [], []>} : vector<8x32xbf16>, vector<32x32xbf16>, vector<8x32xf32> -> vector<8x32xf32>
    %111 = vector.broadcast %21 : vector<1x32xf32> to vector<8x32xf32>
    %112 = arith.addf %110, %111 : vector<8x32xf32>
    %113 = arith.addf %22, %112 : vector<8x32xf32>
    %cst_50 = arith.constant dense<0.000000e+00> : vector<8xf32>
    %114 = vector.multi_reduction <add>, %113, %cst_50 [1] : vector<8x32xf32> to vector<8xf32>
    %115 = vector.shape_cast %114 : vector<8xf32> to vector<8x1xf32>
    %cst_51 = arith.constant 3.200000e+01 : f32
    %116 = vector.broadcast %cst_51 : f32 to vector<8x1xf32>
    %117 = arith.divf %115, %116 : vector<8x1xf32>
    %118 = vector.broadcast %117 : vector<8x1xf32> to vector<8x32xf32>
    %119 = arith.subf %113, %118 : vector<8x32xf32>
    %120 = arith.mulf %119, %119 : vector<8x32xf32>
    %cst_52 = arith.constant dense<0.000000e+00> : vector<8xf32>
    %121 = vector.multi_reduction <add>, %120, %cst_52 [1] : vector<8x32xf32> to vector<8xf32>
    %122 = vector.shape_cast %121 : vector<8xf32> to vector<8x1xf32>
    %cst_53 = arith.constant 3.200000e+01 : f32
    %123 = vector.broadcast %cst_53 : f32 to vector<8x1xf32>
    %124 = arith.divf %122, %123 : vector<8x1xf32>
    %cst_54 = arith.constant 9.99999974E-6 : f32
    %125 = vector.broadcast %cst_54 : f32 to vector<8x1xf32>
    %126 = arith.addf %124, %125 : vector<8x1xf32>
    %127 = math.rsqrt %126 : vector<8x1xf32>
    %128 = vector.broadcast %127 : vector<8x1xf32> to vector<8x32xf32>
    %129 = arith.mulf %119, %128 : vector<8x32xf32>
    %130 = vector.broadcast %23 : vector<1x32xf32> to vector<8x32xf32>
    %131 = arith.mulf %129, %130 : vector<8x32xf32>
    %132 = vector.broadcast %24 : vector<1x32xf32> to vector<8x32xf32>
    %133 = arith.addf %131, %132 : vector<8x32xf32>
    %134 = arith.truncf %133 : vector<8x32xf32> to vector<8x32xbf16>
    %c0_55 = arith.constant 0 : index
    %c0_56 = arith.constant 0 : index
    %c0_57 = arith.constant 0 : index
    %135 = vector.load %arg9[%c0_55, %c0_56, %c0_57] : memref<1x8x32xbf16, #tpu.memory_space<vmem>>, vector<1x8x32xbf16>
    %136 = vector.shape_cast %135 : vector<1x8x32xbf16> to vector<8x32xbf16>
    %137 = vector.shape_cast %134 : vector<8x32xbf16> to vector<1x8x32xbf16>
    tpu.vector_store %arg9[%c0_55, %c0_56, %c0_57], %137 {strides = array<i32>} : memref<1x8x32xbf16, #tpu.memory_space<vmem>>, vector<1x8x32xbf16>,
    return
  }
  func.func @transform_0(%arg0: i32) -> (i32, i32, i32) {
    %c0_i32 = arith.constant 0 : i32
    %c0_i32_0 = arith.constant 0 : i32
    %c0_i32_1 = arith.constant 0 : i32
    return %arg0, %c0_i32, %c0_i32_0 : i32, i32, i32
  }
  func.func @transform_1(%arg0: i32) -> (i32, i32, i32) {
    %c0_i32 = arith.constant 0 : i32
    %c0_i32_0 = arith.constant 0 : i32
    %c0_i32_1 = arith.constant 0 : i32
    return %arg0, %c0_i32, %c0_i32_0 : i32, i32, i32
  }
  func.func @transform_2(%arg0: i32) -> (i32, i32) {
    %c0_i32 = arith.constant 0 : i32
    %c0_i32_0 = arith.constant 0 : i32
    %c0_i32_1 = arith.constant 0 : i32
    return %c0_i32, %c0_i32_0 : i32, i32
  }
  func.func @transform_3(%arg0: i32) -> (i32, i32) {
    %c0_i32 = arith.constant 0 : i32
    %c0_i32_0 = arith.constant 0 : i32
    %c0_i32_1 = arith.constant 0 : i32
    return %c0_i32, %c0_i32_0 : i32, i32
  }
  func.func @transform_4(%arg0: i32) -> (i32, i32) {
    %c0_i32 = arith.constant 0 : i32
    %c0_i32_0 = arith.constant 0 : i32
    %c0_i32_1 = arith.constant 0 : i32
    return %c0_i32, %c0_i32_0 : i32, i32
  }
  func.func @transform_5(%arg0: i32) -> (i32, i32) {
    %c0_i32 = arith.constant 0 : i32
    %c0_i32_0 = arith.constant 0 : i32
    %c0_i32_1 = arith.constant 0 : i32
    return %c0_i32, %c0_i32_0 : i32, i32
  }
  func.func @transform_6(%arg0: i32) -> (i32, i32) {
    %c0_i32 = arith.constant 0 : i32
    %c0_i32_0 = arith.constant 0 : i32
    %c0_i32_1 = arith.constant 0 : i32
    return %c0_i32, %c0_i32_0 : i32, i32
  }
  func.func @transform_7(%arg0: i32) -> (i32, i32) {
    %c0_i32 = arith.constant 0 : i32
    %c0_i32_0 = arith.constant 0 : i32
    %c0_i32_1 = arith.constant 0 : i32
    return %c0_i32, %c0_i32_0 : i32, i32
  }
  func.func @transform_8(%arg0: i32) -> (i32, i32, i32) {
    %c0_i32 = arith.constant 0 : i32
    %c0_i32_0 = arith.constant 0 : i32
    %c0_i32_1 = arith.constant 0 : i32
    return %arg0, %c0_i32, %c0_i32_0 : i32, i32, i32
  }
}

module attributes {stable_mosaic.version = 11 : i64} {
  func.func @_cross_attn_ln_kernel(%arg0: i32, %arg1: memref<1x8x32xbf16, #tpu.memory_space<vmem>>, %arg2: memref<1x8x32xbf16, #tpu.memory_space<vmem>>, %arg3: memref<1x1x8xf32, #tpu.memory_space<vmem>>, %arg4: memref<32x32xbf16, #tpu.memory_space<vmem>>, %arg5: memref<1x32xf32, #tpu.memory_space<vmem>>, %arg6: memref<32x64xbf16, #tpu.memory_space<vmem>>, %arg7: memref<1x64xf32, #tpu.memory_space<vmem>>, %arg8: memref<32x32xbf16, #tpu.memory_space<vmem>>, %arg9: memref<1x32xf32, #tpu.memory_space<vmem>>, %arg10: memref<1x32xf32, #tpu.memory_space<vmem>>, %arg11: memref<1x32xf32, #tpu.memory_space<vmem>>, %arg12: memref<1x8x32xbf16, #tpu.memory_space<vmem>>, %arg13: memref<8x32xf32, #tpu.memory_space<vmem>>) attributes {dimension_semantics = [#tpu.dimension_semantics<parallel>], iteration_bounds = array<i64: 2>, scalar_prefetch = 0 : i64, scratch_operands = 1 : i64, tpu.core_type = #tpu.core_type<tc>, window_params = [{transform_indices = @transform_0, window_bounds = array<i64: 1, 8, 32>}, {transform_indices = @transform_1, window_bounds = array<i64: 1, 8, 32>}, {transform_indices = @transform_2, window_bounds = array<i64: 1, 1, 8>}, {pipeline_mode = #tpu.pipeline_mode<synchronous>, transform_indices = @transform_3, window_bounds = array<i64: 32, 32>}, {pipeline_mode = #tpu.pipeline_mode<synchronous>, transform_indices = @transform_4, window_bounds = array<i64: 1, 32>}, {pipeline_mode = #tpu.pipeline_mode<synchronous>, transform_indices = @transform_5, window_bounds = array<i64: 32, 64>}, {pipeline_mode = #tpu.pipeline_mode<synchronous>, transform_indices = @transform_6, window_bounds = array<i64: 1, 64>}, {pipeline_mode = #tpu.pipeline_mode<synchronous>, transform_indices = @transform_7, window_bounds = array<i64: 32, 32>}, {pipeline_mode = #tpu.pipeline_mode<synchronous>, transform_indices = @transform_8, window_bounds = array<i64: 1, 32>}, {pipeline_mode = #tpu.pipeline_mode<synchronous>, transform_indices = @transform_9, window_bounds = array<i64: 1, 32>}, {pipeline_mode = #tpu.pipeline_mode<synchronous>, transform_indices = @transform_10, window_bounds = array<i64: 1, 32>}, {transform_indices = @transform_11, window_bounds = array<i64: 1, 8, 32>}]} {
    %c0 = arith.constant 0 : index
    %c0_0 = arith.constant 0 : index
    %c0_1 = arith.constant 0 : index
    %0 = vector.load %arg1[%c0, %c0_0, %c0_1] : memref<1x8x32xbf16, #tpu.memory_space<vmem>>, vector<1x8x32xbf16>
    %1 = vector.shape_cast %0 : vector<1x8x32xbf16> to vector<8x32xbf16>
    %c0_2 = arith.constant 0 : index
    %c0_3 = arith.constant 0 : index
    %c0_4 = arith.constant 0 : index
    %2 = vector.load %arg2[%c0_2, %c0_3, %c0_4] : memref<1x8x32xbf16, #tpu.memory_space<vmem>>, vector<1x8x32xbf16>
    %3 = vector.shape_cast %2 : vector<1x8x32xbf16> to vector<8x32xbf16>
    %c0_5 = arith.constant 0 : index
    %c0_6 = arith.constant 0 : index
    %4 = vector.load %arg4[%c0_5, %c0_6] : memref<32x32xbf16, #tpu.memory_space<vmem>>, vector<32x32xbf16>
    %cst = arith.constant dense<0.000000e+00> : vector<8x32xf32>
    %5 = tpu.matmul %1, %4, %cst {dimension_numbers = #tpu.dot_dimension_numbers<[1], [0], [0], [1], [0, 0, 1, 1], [], []>} : vector<8x32xbf16>, vector<32x32xbf16>, vector<8x32xf32> -> vector<8x32xf32>
    %c0_7 = arith.constant 0 : index
    %c0_8 = arith.constant 0 : index
    %6 = vector.load %arg5[%c0_7, %c0_8] : memref<1x32xf32, #tpu.memory_space<vmem>>, vector<1x32xf32>
    %7 = vector.broadcast %6 : vector<1x32xf32> to vector<8x32xf32>
    %8 = arith.addf %5, %7 : vector<8x32xf32>
    %c0_9 = arith.constant 0 : index
    %c0_10 = arith.constant 0 : index
    %9 = vector.load %arg6[%c0_9, %c0_10] : memref<32x64xbf16, #tpu.memory_space<vmem>>, vector<32x64xbf16>
    %cst_11 = arith.constant dense<0.000000e+00> : vector<8x64xf32>
    %10 = tpu.matmul %3, %9, %cst_11 {dimension_numbers = #tpu.dot_dimension_numbers<[1], [0], [0], [1], [0, 0, 1, 1], [], []>} : vector<8x32xbf16>, vector<32x64xbf16>, vector<8x64xf32> -> vector<8x64xf32>
    %c0_12 = arith.constant 0 : index
    %c0_13 = arith.constant 0 : index
    %11 = vector.load %arg7[%c0_12, %c0_13] : memref<1x64xf32, #tpu.memory_space<vmem>>, vector<1x64xf32>
    %12 = vector.broadcast %11 : vector<1x64xf32> to vector<8x64xf32>
    %13 = arith.addf %10, %12 : vector<8x64xf32>
    %14 = vector.extract_strided_slice %13 {offsets = [0, 0], sizes = [8, 32], strides = [1, 1]} : vector<8x64xf32> to vector<8x32xf32>
    %15 = vector.extract_strided_slice %13 {offsets = [0, 32], sizes = [8, 32], strides = [1, 1]} : vector<8x64xf32> to vector<8x32xf32>
    %c0_14 = arith.constant 0 : index
    %c0_15 = arith.constant 0 : index
    %c0_16 = arith.constant 0 : index
    %16 = vector.load %arg3[%c0_14, %c0_15, %c0_16] : memref<1x1x8xf32, #tpu.memory_space<vmem>>, vector<1x1x8xf32>
    %17 = vector.shape_cast %16 : vector<1x1x8xf32> to vector<1x8xf32>
    %cst_17 = arith.constant 5.000000e-01 : f32
    %18 = vector.broadcast %cst_17 : f32 to vector<1x8xf32>
    %19 = arith.cmpf ogt, %17, %18 : vector<1x8xf32>
    %20 = vector.shape_cast %19 : vector<1x8xi1> to vector<1x8xi1>
    %21 = vector.broadcast %20 : vector<1x8xi1> to vector<8x8xi1>
    %c0_18 = arith.constant 0 : index
    %c0_19 = arith.constant 0 : index
    %22 = vector.load %arg8[%c0_18, %c0_19] : memref<32x32xbf16, #tpu.memory_space<vmem>>, vector<32x32xbf16>
    %c0_20 = arith.constant 0 : index
    %c0_21 = arith.constant 0 : index
    %23 = vector.load %arg9[%c0_20, %c0_21] : memref<1x32xf32, #tpu.memory_space<vmem>>, vector<1x32xf32>
    %24 = arith.extf %1 : vector<8x32xbf16> to vector<8x32xf32>
    %c0_22 = arith.constant 0 : index
    %c0_23 = arith.constant 0 : index
    %25 = vector.load %arg10[%c0_22, %c0_23] : memref<1x32xf32, #tpu.memory_space<vmem>>, vector<1x32xf32>
    %c0_24 = arith.constant 0 : index
    %c0_25 = arith.constant 0 : index
    %26 = vector.load %arg11[%c0_24, %c0_25] : memref<1x32xf32, #tpu.memory_space<vmem>>, vector<1x32xf32>
    %27 = arith.truncf %8 : vector<8x32xf32> to vector<8x32xbf16>
    %28 = arith.truncf %14 : vector<8x32xf32> to vector<8x32xbf16>
    %29 = arith.truncf %15 : vector<8x32xf32> to vector<8x32xbf16>
    %30 = vector.extract_strided_slice %27 {offsets = [0, 0], sizes = [8, 8], strides = [1, 1]} : vector<8x32xbf16> to vector<8x8xbf16>
    %31 = vector.extract_strided_slice %28 {offsets = [0, 0], sizes = [8, 8], strides = [1, 1]} : vector<8x32xbf16> to vector<8x8xbf16>
    %cst_26 = arith.constant dense<0.000000e+00> : vector<8x8xf32>
    %32 = tpu.matmul %30, %31, %cst_26 {dimension_numbers = #tpu.dot_dimension_numbers<[1], [1], [0], [0], [0, 0, 1, 0], [], []>} : vector<8x8xbf16>, vector<8x8xbf16>, vector<8x8xf32> -> vector<8x8xf32>
    %cst_27 = arith.constant 0.353553385 : f32
    %33 = vector.broadcast %cst_27 : f32 to vector<8x8xf32>
    %34 = arith.mulf %32, %33 : vector<8x8xf32>
    %cst_28 = arith.constant -1.000000e+09 : f32
    %35 = vector.broadcast %cst_28 : f32 to vector<8x8xf32>
    %36 = arith.select %21, %34, %35 : vector<8x8xi1>, vector<8x8xf32>
    %cst_29 = arith.constant dense<0xFF800000> : vector<8xf32>
    %37 = vector.multi_reduction <maximumf>, %36, %cst_29 [1] : vector<8x8xf32> to vector<8xf32>
    %38 = vector.shape_cast %37 : vector<8xf32> to vector<8x1xf32>
    %39 = vector.broadcast %38 : vector<8x1xf32> to vector<8x8xf32>
    %40 = arith.subf %36, %39 : vector<8x8xf32>
    %41 = math.exp %40 : vector<8x8xf32>
    %cst_30 = arith.constant dense<0.000000e+00> : vector<8xf32>
    %42 = vector.multi_reduction <add>, %41, %cst_30 [1] : vector<8x8xf32> to vector<8xf32>
    %43 = vector.shape_cast %42 : vector<8xf32> to vector<8x1xf32>
    %44 = vector.broadcast %43 : vector<8x1xf32> to vector<8x8xf32>
    %45 = arith.divf %41, %44 : vector<8x8xf32>
    %46 = arith.truncf %45 : vector<8x8xf32> to vector<8x8xbf16>
    %47 = vector.extract_strided_slice %29 {offsets = [0, 0], sizes = [8, 8], strides = [1, 1]} : vector<8x32xbf16> to vector<8x8xbf16>
    %cst_31 = arith.constant dense<0.000000e+00> : vector<8x8xf32>
    %48 = tpu.matmul %46, %47, %cst_31 {dimension_numbers = #tpu.dot_dimension_numbers<[1], [0], [0], [1], [0, 0, 1, 1], [], []>} : vector<8x8xbf16>, vector<8x8xbf16>, vector<8x8xf32> -> vector<8x8xf32>
    %c0_32 = arith.constant 0 : index
    %c0_33 = arith.constant 0 : index
    %49 = vector.load %arg13[%c0_32, %c0_33] : memref<8x32xf32, #tpu.memory_space<vmem>>, vector<8x8xf32>
    tpu.vector_store %arg13[%c0_32, %c0_33], %48 {strides = array<i32>} : memref<8x32xf32, #tpu.memory_space<vmem>>, vector<8x8xf32>,
    %50 = vector.extract_strided_slice %27 {offsets = [0, 8], sizes = [8, 8], strides = [1, 1]} : vector<8x32xbf16> to vector<8x8xbf16>
    %51 = vector.extract_strided_slice %28 {offsets = [0, 8], sizes = [8, 8], strides = [1, 1]} : vector<8x32xbf16> to vector<8x8xbf16>
    %cst_34 = arith.constant dense<0.000000e+00> : vector<8x8xf32>
    %52 = tpu.matmul %50, %51, %cst_34 {dimension_numbers = #tpu.dot_dimension_numbers<[1], [1], [0], [0], [0, 0, 1, 0], [], []>} : vector<8x8xbf16>, vector<8x8xbf16>, vector<8x8xf32> -> vector<8x8xf32>
    %cst_35 = arith.constant 0.353553385 : f32
    %53 = vector.broadcast %cst_35 : f32 to vector<8x8xf32>
    %54 = arith.mulf %52, %53 : vector<8x8xf32>
    %cst_36 = arith.constant -1.000000e+09 : f32
    %55 = vector.broadcast %cst_36 : f32 to vector<8x8xf32>
    %56 = arith.select %21, %54, %55 : vector<8x8xi1>, vector<8x8xf32>
    %cst_37 = arith.constant dense<0xFF800000> : vector<8xf32>
    %57 = vector.multi_reduction <maximumf>, %56, %cst_37 [1] : vector<8x8xf32> to vector<8xf32>
    %58 = vector.shape_cast %57 : vector<8xf32> to vector<8x1xf32>
    %59 = vector.broadcast %58 : vector<8x1xf32> to vector<8x8xf32>
    %60 = arith.subf %56, %59 : vector<8x8xf32>
    %61 = math.exp %60 : vector<8x8xf32>
    %cst_38 = arith.constant dense<0.000000e+00> : vector<8xf32>
    %62 = vector.multi_reduction <add>, %61, %cst_38 [1] : vector<8x8xf32> to vector<8xf32>
    %63 = vector.shape_cast %62 : vector<8xf32> to vector<8x1xf32>
    %64 = vector.broadcast %63 : vector<8x1xf32> to vector<8x8xf32>
    %65 = arith.divf %61, %64 : vector<8x8xf32>
    %66 = arith.truncf %65 : vector<8x8xf32> to vector<8x8xbf16>
    %67 = vector.extract_strided_slice %29 {offsets = [0, 8], sizes = [8, 8], strides = [1, 1]} : vector<8x32xbf16> to vector<8x8xbf16>
    %cst_39 = arith.constant dense<0.000000e+00> : vector<8x8xf32>
    %68 = tpu.matmul %66, %67, %cst_39 {dimension_numbers = #tpu.dot_dimension_numbers<[1], [0], [0], [1], [0, 0, 1, 1], [], []>} : vector<8x8xbf16>, vector<8x8xbf16>, vector<8x8xf32> -> vector<8x8xf32>
    %c0_40 = arith.constant 0 : index
    %c8 = arith.constant 8 : index
    %69 = vector.load %arg13[%c0_40, %c8] : memref<8x32xf32, #tpu.memory_space<vmem>>, vector<8x8xf32>
    tpu.vector_store %arg13[%c0_40, %c8], %68 {strides = array<i32>} : memref<8x32xf32, #tpu.memory_space<vmem>>, vector<8x8xf32>,
    %70 = vector.extract_strided_slice %27 {offsets = [0, 16], sizes = [8, 8], strides = [1, 1]} : vector<8x32xbf16> to vector<8x8xbf16>
    %71 = vector.extract_strided_slice %28 {offsets = [0, 16], sizes = [8, 8], strides = [1, 1]} : vector<8x32xbf16> to vector<8x8xbf16>
    %cst_41 = arith.constant dense<0.000000e+00> : vector<8x8xf32>
    %72 = tpu.matmul %70, %71, %cst_41 {dimension_numbers = #tpu.dot_dimension_numbers<[1], [1], [0], [0], [0, 0, 1, 0], [], []>} : vector<8x8xbf16>, vector<8x8xbf16>, vector<8x8xf32> -> vector<8x8xf32>
    %cst_42 = arith.constant 0.353553385 : f32
    %73 = vector.broadcast %cst_42 : f32 to vector<8x8xf32>
    %74 = arith.mulf %72, %73 : vector<8x8xf32>
    %cst_43 = arith.constant -1.000000e+09 : f32
    %75 = vector.broadcast %cst_43 : f32 to vector<8x8xf32>
    %76 = arith.select %21, %74, %75 : vector<8x8xi1>, vector<8x8xf32>
    %cst_44 = arith.constant dense<0xFF800000> : vector<8xf32>
    %77 = vector.multi_reduction <maximumf>, %76, %cst_44 [1] : vector<8x8xf32> to vector<8xf32>
    %78 = vector.shape_cast %77 : vector<8xf32> to vector<8x1xf32>
    %79 = vector.broadcast %78 : vector<8x1xf32> to vector<8x8xf32>
    %80 = arith.subf %76, %79 : vector<8x8xf32>
    %81 = math.exp %80 : vector<8x8xf32>
    %cst_45 = arith.constant dense<0.000000e+00> : vector<8xf32>
    %82 = vector.multi_reduction <add>, %81, %cst_45 [1] : vector<8x8xf32> to vector<8xf32>
    %83 = vector.shape_cast %82 : vector<8xf32> to vector<8x1xf32>
    %84 = vector.broadcast %83 : vector<8x1xf32> to vector<8x8xf32>
    %85 = arith.divf %81, %84 : vector<8x8xf32>
    %86 = arith.truncf %85 : vector<8x8xf32> to vector<8x8xbf16>
    %87 = vector.extract_strided_slice %29 {offsets = [0, 16], sizes = [8, 8], strides = [1, 1]} : vector<8x32xbf16> to vector<8x8xbf16>
    %cst_46 = arith.constant dense<0.000000e+00> : vector<8x8xf32>
    %88 = tpu.matmul %86, %87, %cst_46 {dimension_numbers = #tpu.dot_dimension_numbers<[1], [0], [0], [1], [0, 0, 1, 1], [], []>} : vector<8x8xbf16>, vector<8x8xbf16>, vector<8x8xf32> -> vector<8x8xf32>
    %c0_47 = arith.constant 0 : index
    %c16 = arith.constant 16 : index
    %89 = vector.load %arg13[%c0_47, %c16] : memref<8x32xf32, #tpu.memory_space<vmem>>, vector<8x8xf32>
    tpu.vector_store %arg13[%c0_47, %c16], %88 {strides = array<i32>} : memref<8x32xf32, #tpu.memory_space<vmem>>, vector<8x8xf32>,
    %90 = vector.extract_strided_slice %27 {offsets = [0, 24], sizes = [8, 8], strides = [1, 1]} : vector<8x32xbf16> to vector<8x8xbf16>
    %91 = vector.extract_strided_slice %28 {offsets = [0, 24], sizes = [8, 8], strides = [1, 1]} : vector<8x32xbf16> to vector<8x8xbf16>
    %cst_48 = arith.constant dense<0.000000e+00> : vector<8x8xf32>
    %92 = tpu.matmul %90, %91, %cst_48 {dimension_numbers = #tpu.dot_dimension_numbers<[1], [1], [0], [0], [0, 0, 1, 0], [], []>} : vector<8x8xbf16>, vector<8x8xbf16>, vector<8x8xf32> -> vector<8x8xf32>
    %cst_49 = arith.constant 0.353553385 : f32
    %93 = vector.broadcast %cst_49 : f32 to vector<8x8xf32>
    %94 = arith.mulf %92, %93 : vector<8x8xf32>
    %cst_50 = arith.constant -1.000000e+09 : f32
    %95 = vector.broadcast %cst_50 : f32 to vector<8x8xf32>
    %96 = arith.select %21, %94, %95 : vector<8x8xi1>, vector<8x8xf32>
    %cst_51 = arith.constant dense<0xFF800000> : vector<8xf32>
    %97 = vector.multi_reduction <maximumf>, %96, %cst_51 [1] : vector<8x8xf32> to vector<8xf32>
    %98 = vector.shape_cast %97 : vector<8xf32> to vector<8x1xf32>
    %99 = vector.broadcast %98 : vector<8x1xf32> to vector<8x8xf32>
    %100 = arith.subf %96, %99 : vector<8x8xf32>
    %101 = math.exp %100 : vector<8x8xf32>
    %cst_52 = arith.constant dense<0.000000e+00> : vector<8xf32>
    %102 = vector.multi_reduction <add>, %101, %cst_52 [1] : vector<8x8xf32> to vector<8xf32>
    %103 = vector.shape_cast %102 : vector<8xf32> to vector<8x1xf32>
    %104 = vector.broadcast %103 : vector<8x1xf32> to vector<8x8xf32>
    %105 = arith.divf %101, %104 : vector<8x8xf32>
    %106 = arith.truncf %105 : vector<8x8xf32> to vector<8x8xbf16>
    %107 = vector.extract_strided_slice %29 {offsets = [0, 24], sizes = [8, 8], strides = [1, 1]} : vector<8x32xbf16> to vector<8x8xbf16>
    %cst_53 = arith.constant dense<0.000000e+00> : vector<8x8xf32>
    %108 = tpu.matmul %106, %107, %cst_53 {dimension_numbers = #tpu.dot_dimension_numbers<[1], [0], [0], [1], [0, 0, 1, 1], [], []>} : vector<8x8xbf16>, vector<8x8xbf16>, vector<8x8xf32> -> vector<8x8xf32>
    %c0_54 = arith.constant 0 : index
    %c24 = arith.constant 24 : index
    %109 = vector.load %arg13[%c0_54, %c24] : memref<8x32xf32, #tpu.memory_space<vmem>>, vector<8x8xf32>
    tpu.vector_store %arg13[%c0_54, %c24], %108 {strides = array<i32>} : memref<8x32xf32, #tpu.memory_space<vmem>>, vector<8x8xf32>,
    %c0_55 = arith.constant 0 : index
    %c0_56 = arith.constant 0 : index
    %110 = vector.load %arg13[%c0_55, %c0_56] : memref<8x32xf32, #tpu.memory_space<vmem>>, vector<8x32xf32>
    %111 = arith.truncf %110 : vector<8x32xf32> to vector<8x32xbf16>
    %cst_57 = arith.constant dense<0.000000e+00> : vector<8x32xf32>
    %112 = tpu.matmul %111, %22, %cst_57 {dimension_numbers = #tpu.dot_dimension_numbers<[1], [0], [0], [1], [0, 0, 1, 1], [], []>} : vector<8x32xbf16>, vector<32x32xbf16>, vector<8x32xf32> -> vector<8x32xf32>
    %113 = vector.broadcast %23 : vector<1x32xf32> to vector<8x32xf32>
    %114 = arith.addf %112, %113 : vector<8x32xf32>
    %115 = arith.addf %24, %114 : vector<8x32xf32>
    %cst_58 = arith.constant dense<0.000000e+00> : vector<8xf32>
    %116 = vector.multi_reduction <add>, %115, %cst_58 [1] : vector<8x32xf32> to vector<8xf32>
    %117 = vector.shape_cast %116 : vector<8xf32> to vector<8x1xf32>
    %cst_59 = arith.constant 3.200000e+01 : f32
    %118 = vector.broadcast %cst_59 : f32 to vector<8x1xf32>
    %119 = arith.divf %117, %118 : vector<8x1xf32>
    %120 = vector.broadcast %119 : vector<8x1xf32> to vector<8x32xf32>
    %121 = arith.subf %115, %120 : vector<8x32xf32>
    %122 = arith.mulf %121, %121 : vector<8x32xf32>
    %cst_60 = arith.constant dense<0.000000e+00> : vector<8xf32>
    %123 = vector.multi_reduction <add>, %122, %cst_60 [1] : vector<8x32xf32> to vector<8xf32>
    %124 = vector.shape_cast %123 : vector<8xf32> to vector<8x1xf32>
    %cst_61 = arith.constant 3.200000e+01 : f32
    %125 = vector.broadcast %cst_61 : f32 to vector<8x1xf32>
    %126 = arith.divf %124, %125 : vector<8x1xf32>
    %cst_62 = arith.constant 9.99999974E-6 : f32
    %127 = vector.broadcast %cst_62 : f32 to vector<8x1xf32>
    %128 = arith.addf %126, %127 : vector<8x1xf32>
    %129 = math.rsqrt %128 : vector<8x1xf32>
    %130 = vector.broadcast %129 : vector<8x1xf32> to vector<8x32xf32>
    %131 = arith.mulf %121, %130 : vector<8x32xf32>
    %132 = vector.broadcast %25 : vector<1x32xf32> to vector<8x32xf32>
    %133 = arith.mulf %131, %132 : vector<8x32xf32>
    %134 = vector.broadcast %26 : vector<1x32xf32> to vector<8x32xf32>
    %135 = arith.addf %133, %134 : vector<8x32xf32>
    %136 = arith.truncf %135 : vector<8x32xf32> to vector<8x32xbf16>
    %c0_63 = arith.constant 0 : index
    %c0_64 = arith.constant 0 : index
    %c0_65 = arith.constant 0 : index
    %137 = vector.load %arg12[%c0_63, %c0_64, %c0_65] : memref<1x8x32xbf16, #tpu.memory_space<vmem>>, vector<1x8x32xbf16>
    %138 = vector.shape_cast %137 : vector<1x8x32xbf16> to vector<8x32xbf16>
    %139 = vector.shape_cast %136 : vector<8x32xbf16> to vector<1x8x32xbf16>
    tpu.vector_store %arg12[%c0_63, %c0_64, %c0_65], %139 {strides = array<i32>} : memref<1x8x32xbf16, #tpu.memory_space<vmem>>, vector<1x8x32xbf16>,
    return
  }
  func.func @transform_0(%arg0: i32) -> (i32, i32, i32) {
    %c0_i32 = arith.constant 0 : i32
    %c0_i32_0 = arith.constant 0 : i32
    %c0_i32_1 = arith.constant 0 : i32
    return %arg0, %c0_i32, %c0_i32_0 : i32, i32, i32
  }
  func.func @transform_1(%arg0: i32) -> (i32, i32, i32) {
    %c0_i32 = arith.constant 0 : i32
    %c0_i32_0 = arith.constant 0 : i32
    %c0_i32_1 = arith.constant 0 : i32
    return %arg0, %c0_i32, %c0_i32_0 : i32, i32, i32
  }
  func.func @transform_2(%arg0: i32) -> (i32, i32, i32) {
    %c0_i32 = arith.constant 0 : i32
    %c0_i32_0 = arith.constant 0 : i32
    %c0_i32_1 = arith.constant 0 : i32
    return %arg0, %c0_i32, %c0_i32_0 : i32, i32, i32
  }
  func.func @transform_3(%arg0: i32) -> (i32, i32) {
    %c0_i32 = arith.constant 0 : i32
    %c0_i32_0 = arith.constant 0 : i32
    %c0_i32_1 = arith.constant 0 : i32
    return %c0_i32, %c0_i32_0 : i32, i32
  }
  func.func @transform_4(%arg0: i32) -> (i32, i32) {
    %c0_i32 = arith.constant 0 : i32
    %c0_i32_0 = arith.constant 0 : i32
    %c0_i32_1 = arith.constant 0 : i32
    return %c0_i32, %c0_i32_0 : i32, i32
  }
  func.func @transform_5(%arg0: i32) -> (i32, i32) {
    %c0_i32 = arith.constant 0 : i32
    %c0_i32_0 = arith.constant 0 : i32
    %c0_i32_1 = arith.constant 0 : i32
    return %c0_i32, %c0_i32_0 : i32, i32
  }
  func.func @transform_6(%arg0: i32) -> (i32, i32) {
    %c0_i32 = arith.constant 0 : i32
    %c0_i32_0 = arith.constant 0 : i32
    %c0_i32_1 = arith.constant 0 : i32
    return %c0_i32, %c0_i32_0 : i32, i32
  }
  func.func @transform_7(%arg0: i32) -> (i32, i32) {
    %c0_i32 = arith.constant 0 : i32
    %c0_i32_0 = arith.constant 0 : i32
    %c0_i32_1 = arith.constant 0 : i32
    return %c0_i32, %c0_i32_0 : i32, i32
  }
  func.func @transform_8(%arg0: i32) -> (i32, i32) {
    %c0_i32 = arith.constant 0 : i32
    %c0_i32_0 = arith.constant 0 : i32
    %c0_i32_1 = arith.constant 0 : i32
    return %c0_i32, %c0_i32_0 : i32, i32
  }
  func.func @transform_9(%arg0: i32) -> (i32, i32) {
    %c0_i32 = arith.constant 0 : i32
    %c0_i32_0 = arith.constant 0 : i32
    %c0_i32_1 = arith.constant 0 : i32
    return %c0_i32, %c0_i32_0 : i32, i32
  }
  func.func @transform_10(%arg0: i32) -> (i32, i32) {
    %c0_i32 = arith.constant 0 : i32
    %c0_i32_0 = arith.constant 0 : i32
    %c0_i32_1 = arith.constant 0 : i32
    return %c0_i32, %c0_i32_0 : i32, i32
  }
  func.func @transform_11(%arg0: i32) -> (i32, i32, i32) {
    %c0_i32 = arith.constant 0 : i32
    %c0_i32_0 = arith.constant 0 : i32
    %c0_i32_1 = arith.constant 0 : i32
    return %arg0, %c0_i32, %c0_i32_0 : i32, i32, i32
  }
}

module attributes {stable_mosaic.version = 11 : i64} {
  func.func @_self_attn_ln_kernel(%arg0: i32, %arg1: memref<1x8x32xbf16, #tpu.memory_space<vmem>>, %arg2: memref<1x1x8xf32, #tpu.memory_space<vmem>>, %arg3: memref<32x96xbf16, #tpu.memory_space<vmem>>, %arg4: memref<1x96xf32, #tpu.memory_space<vmem>>, %arg5: memref<32x32xbf16, #tpu.memory_space<vmem>>, %arg6: memref<1x32xf32, #tpu.memory_space<vmem>>, %arg7: memref<1x32xf32, #tpu.memory_space<vmem>>, %arg8: memref<1x32xf32, #tpu.memory_space<vmem>>, %arg9: memref<1x8x32xbf16, #tpu.memory_space<vmem>>, %arg10: memref<8x32xf32, #tpu.memory_space<vmem>>) attributes {dimension_semantics = [#tpu.dimension_semantics<parallel>], iteration_bounds = array<i64: 2>, scalar_prefetch = 0 : i64, scratch_operands = 1 : i64, tpu.core_type = #tpu.core_type<tc>, window_params = [{transform_indices = @transform_0, window_bounds = array<i64: 1, 8, 32>}, {transform_indices = @transform_1, window_bounds = array<i64: 1, 1, 8>}, {pipeline_mode = #tpu.pipeline_mode<synchronous>, transform_indices = @transform_2, window_bounds = array<i64: 32, 96>}, {pipeline_mode = #tpu.pipeline_mode<synchronous>, transform_indices = @transform_3, window_bounds = array<i64: 1, 96>}, {pipeline_mode = #tpu.pipeline_mode<synchronous>, transform_indices = @transform_4, window_bounds = array<i64: 32, 32>}, {pipeline_mode = #tpu.pipeline_mode<synchronous>, transform_indices = @transform_5, window_bounds = array<i64: 1, 32>}, {pipeline_mode = #tpu.pipeline_mode<synchronous>, transform_indices = @transform_6, window_bounds = array<i64: 1, 32>}, {pipeline_mode = #tpu.pipeline_mode<synchronous>, transform_indices = @transform_7, window_bounds = array<i64: 1, 32>}, {transform_indices = @transform_8, window_bounds = array<i64: 1, 8, 32>}]} {
    %c0 = arith.constant 0 : index
    %c0_0 = arith.constant 0 : index
    %c0_1 = arith.constant 0 : index
    %0 = vector.load %arg1[%c0, %c0_0, %c0_1] : memref<1x8x32xbf16, #tpu.memory_space<vmem>>, vector<1x8x32xbf16>
    %1 = vector.shape_cast %0 : vector<1x8x32xbf16> to vector<8x32xbf16>
    %c0_2 = arith.constant 0 : index
    %c0_3 = arith.constant 0 : index
    %2 = vector.load %arg3[%c0_2, %c0_3] : memref<32x96xbf16, #tpu.memory_space<vmem>>, vector<32x96xbf16>
    %cst = arith.constant dense<0.000000e+00> : vector<8x96xf32>
    %3 = tpu.matmul %1, %2, %cst {dimension_numbers = #tpu.dot_dimension_numbers<[1], [0], [0], [1], [0, 0, 1, 1], [], []>} : vector<8x32xbf16>, vector<32x96xbf16>, vector<8x96xf32> -> vector<8x96xf32>
    %c0_4 = arith.constant 0 : index
    %c0_5 = arith.constant 0 : index
    %4 = vector.load %arg4[%c0_4, %c0_5] : memref<1x96xf32, #tpu.memory_space<vmem>>, vector<1x96xf32>
    %5 = vector.broadcast %4 : vector<1x96xf32> to vector<8x96xf32>
    %6 = arith.addf %3, %5 : vector<8x96xf32>
    %7 = vector.extract_strided_slice %6 {offsets = [0, 0], sizes = [8, 32], strides = [1, 1]} : vector<8x96xf32> to vector<8x32xf32>
    %8 = vector.extract_strided_slice %6 {offsets = [0, 32], sizes = [8, 32], strides = [1, 1]} : vector<8x96xf32> to vector<8x32xf32>
    %9 = vector.extract_strided_slice %6 {offsets = [0, 64], sizes = [8, 32], strides = [1, 1]} : vector<8x96xf32> to vector<8x32xf32>
    %c0_6 = arith.constant 0 : index
    %c0_7 = arith.constant 0 : index
    %c0_8 = arith.constant 0 : index
    %10 = vector.load %arg2[%c0_6, %c0_7, %c0_8] : memref<1x1x8xf32, #tpu.memory_space<vmem>>, vector<1x1x8xf32>
    %11 = vector.shape_cast %10 : vector<1x1x8xf32> to vector<1x8xf32>
    %cst_9 = arith.constant 5.000000e-01 : f32
    %12 = vector.broadcast %cst_9 : f32 to vector<1x8xf32>
    %13 = arith.cmpf ogt, %11, %12 : vector<1x8xf32>
    %14 = vector.shape_cast %13 : vector<1x8xi1> to vector<1x8xi1>
    %15 = vector.broadcast %14 : vector<1x8xi1> to vector<8x8xi1>
    %c0_10 = arith.constant 0 : index
    %c0_11 = arith.constant 0 : index
    %16 = vector.load %arg5[%c0_10, %c0_11] : memref<32x32xbf16, #tpu.memory_space<vmem>>, vector<32x32xbf16>
    %c0_12 = arith.constant 0 : index
    %c0_13 = arith.constant 0 : index
    %17 = vector.load %arg6[%c0_12, %c0_13] : memref<1x32xf32, #tpu.memory_space<vmem>>, vector<1x32xf32>
    %18 = arith.extf %1 : vector<8x32xbf16> to vector<8x32xf32>
    %c0_14 = arith.constant 0 : index
    %c0_15 = arith.constant 0 : index
    %19 = vector.load %arg7[%c0_14, %c0_15] : memref<1x32xf32, #tpu.memory_space<vmem>>, vector<1x32xf32>
    %c0_16 = arith.constant 0 : index
    %c0_17 = arith.constant 0 : index
    %20 = vector.load %arg8[%c0_16, %c0_17] : memref<1x32xf32, #tpu.memory_space<vmem>>, vector<1x32xf32>
    %21 = arith.truncf %7 : vector<8x32xf32> to vector<8x32xbf16>
    %22 = arith.truncf %8 : vector<8x32xf32> to vector<8x32xbf16>
    %23 = arith.truncf %9 : vector<8x32xf32> to vector<8x32xbf16>
    %24 = vector.extract_strided_slice %21 {offsets = [0, 0], sizes = [8, 8], strides = [1, 1]} : vector<8x32xbf16> to vector<8x8xbf16>
    %25 = vector.extract_strided_slice %22 {offsets = [0, 0], sizes = [8, 8], strides = [1, 1]} : vector<8x32xbf16> to vector<8x8xbf16>
    %cst_18 = arith.constant dense<0.000000e+00> : vector<8x8xf32>
    %26 = tpu.matmul %24, %25, %cst_18 {dimension_numbers = #tpu.dot_dimension_numbers<[1], [1], [0], [0], [0, 0, 1, 0], [], []>} : vector<8x8xbf16>, vector<8x8xbf16>, vector<8x8xf32> -> vector<8x8xf32>
    %cst_19 = arith.constant 0.353553385 : f32
    %27 = vector.broadcast %cst_19 : f32 to vector<8x8xf32>
    %28 = arith.mulf %26, %27 : vector<8x8xf32>
    %cst_20 = arith.constant -1.000000e+09 : f32
    %29 = vector.broadcast %cst_20 : f32 to vector<8x8xf32>
    %30 = arith.select %15, %28, %29 : vector<8x8xi1>, vector<8x8xf32>
    %cst_21 = arith.constant dense<0xFF800000> : vector<8xf32>
    %31 = vector.multi_reduction <maximumf>, %30, %cst_21 [1] : vector<8x8xf32> to vector<8xf32>
    %32 = vector.shape_cast %31 : vector<8xf32> to vector<8x1xf32>
    %33 = vector.broadcast %32 : vector<8x1xf32> to vector<8x8xf32>
    %34 = arith.subf %30, %33 : vector<8x8xf32>
    %35 = math.exp %34 : vector<8x8xf32>
    %cst_22 = arith.constant dense<0.000000e+00> : vector<8xf32>
    %36 = vector.multi_reduction <add>, %35, %cst_22 [1] : vector<8x8xf32> to vector<8xf32>
    %37 = vector.shape_cast %36 : vector<8xf32> to vector<8x1xf32>
    %38 = vector.broadcast %37 : vector<8x1xf32> to vector<8x8xf32>
    %39 = arith.divf %35, %38 : vector<8x8xf32>
    %40 = arith.truncf %39 : vector<8x8xf32> to vector<8x8xbf16>
    %41 = vector.extract_strided_slice %23 {offsets = [0, 0], sizes = [8, 8], strides = [1, 1]} : vector<8x32xbf16> to vector<8x8xbf16>
    %cst_23 = arith.constant dense<0.000000e+00> : vector<8x8xf32>
    %42 = tpu.matmul %40, %41, %cst_23 {dimension_numbers = #tpu.dot_dimension_numbers<[1], [0], [0], [1], [0, 0, 1, 1], [], []>} : vector<8x8xbf16>, vector<8x8xbf16>, vector<8x8xf32> -> vector<8x8xf32>
    %c0_24 = arith.constant 0 : index
    %c0_25 = arith.constant 0 : index
    %43 = vector.load %arg10[%c0_24, %c0_25] : memref<8x32xf32, #tpu.memory_space<vmem>>, vector<8x8xf32>
    tpu.vector_store %arg10[%c0_24, %c0_25], %42 {strides = array<i32>} : memref<8x32xf32, #tpu.memory_space<vmem>>, vector<8x8xf32>,
    %44 = vector.extract_strided_slice %21 {offsets = [0, 8], sizes = [8, 8], strides = [1, 1]} : vector<8x32xbf16> to vector<8x8xbf16>
    %45 = vector.extract_strided_slice %22 {offsets = [0, 8], sizes = [8, 8], strides = [1, 1]} : vector<8x32xbf16> to vector<8x8xbf16>
    %cst_26 = arith.constant dense<0.000000e+00> : vector<8x8xf32>
    %46 = tpu.matmul %44, %45, %cst_26 {dimension_numbers = #tpu.dot_dimension_numbers<[1], [1], [0], [0], [0, 0, 1, 0], [], []>} : vector<8x8xbf16>, vector<8x8xbf16>, vector<8x8xf32> -> vector<8x8xf32>
    %cst_27 = arith.constant 0.353553385 : f32
    %47 = vector.broadcast %cst_27 : f32 to vector<8x8xf32>
    %48 = arith.mulf %46, %47 : vector<8x8xf32>
    %cst_28 = arith.constant -1.000000e+09 : f32
    %49 = vector.broadcast %cst_28 : f32 to vector<8x8xf32>
    %50 = arith.select %15, %48, %49 : vector<8x8xi1>, vector<8x8xf32>
    %cst_29 = arith.constant dense<0xFF800000> : vector<8xf32>
    %51 = vector.multi_reduction <maximumf>, %50, %cst_29 [1] : vector<8x8xf32> to vector<8xf32>
    %52 = vector.shape_cast %51 : vector<8xf32> to vector<8x1xf32>
    %53 = vector.broadcast %52 : vector<8x1xf32> to vector<8x8xf32>
    %54 = arith.subf %50, %53 : vector<8x8xf32>
    %55 = math.exp %54 : vector<8x8xf32>
    %cst_30 = arith.constant dense<0.000000e+00> : vector<8xf32>
    %56 = vector.multi_reduction <add>, %55, %cst_30 [1] : vector<8x8xf32> to vector<8xf32>
    %57 = vector.shape_cast %56 : vector<8xf32> to vector<8x1xf32>
    %58 = vector.broadcast %57 : vector<8x1xf32> to vector<8x8xf32>
    %59 = arith.divf %55, %58 : vector<8x8xf32>
    %60 = arith.truncf %59 : vector<8x8xf32> to vector<8x8xbf16>
    %61 = vector.extract_strided_slice %23 {offsets = [0, 8], sizes = [8, 8], strides = [1, 1]} : vector<8x32xbf16> to vector<8x8xbf16>
    %cst_31 = arith.constant dense<0.000000e+00> : vector<8x8xf32>
    %62 = tpu.matmul %60, %61, %cst_31 {dimension_numbers = #tpu.dot_dimension_numbers<[1], [0], [0], [1], [0, 0, 1, 1], [], []>} : vector<8x8xbf16>, vector<8x8xbf16>, vector<8x8xf32> -> vector<8x8xf32>
    %c0_32 = arith.constant 0 : index
    %c8 = arith.constant 8 : index
    %63 = vector.load %arg10[%c0_32, %c8] : memref<8x32xf32, #tpu.memory_space<vmem>>, vector<8x8xf32>
    tpu.vector_store %arg10[%c0_32, %c8], %62 {strides = array<i32>} : memref<8x32xf32, #tpu.memory_space<vmem>>, vector<8x8xf32>,
    %64 = vector.extract_strided_slice %21 {offsets = [0, 16], sizes = [8, 8], strides = [1, 1]} : vector<8x32xbf16> to vector<8x8xbf16>
    %65 = vector.extract_strided_slice %22 {offsets = [0, 16], sizes = [8, 8], strides = [1, 1]} : vector<8x32xbf16> to vector<8x8xbf16>
    %cst_33 = arith.constant dense<0.000000e+00> : vector<8x8xf32>
    %66 = tpu.matmul %64, %65, %cst_33 {dimension_numbers = #tpu.dot_dimension_numbers<[1], [1], [0], [0], [0, 0, 1, 0], [], []>} : vector<8x8xbf16>, vector<8x8xbf16>, vector<8x8xf32> -> vector<8x8xf32>
    %cst_34 = arith.constant 0.353553385 : f32
    %67 = vector.broadcast %cst_34 : f32 to vector<8x8xf32>
    %68 = arith.mulf %66, %67 : vector<8x8xf32>
    %cst_35 = arith.constant -1.000000e+09 : f32
    %69 = vector.broadcast %cst_35 : f32 to vector<8x8xf32>
    %70 = arith.select %15, %68, %69 : vector<8x8xi1>, vector<8x8xf32>
    %cst_36 = arith.constant dense<0xFF800000> : vector<8xf32>
    %71 = vector.multi_reduction <maximumf>, %70, %cst_36 [1] : vector<8x8xf32> to vector<8xf32>
    %72 = vector.shape_cast %71 : vector<8xf32> to vector<8x1xf32>
    %73 = vector.broadcast %72 : vector<8x1xf32> to vector<8x8xf32>
    %74 = arith.subf %70, %73 : vector<8x8xf32>
    %75 = math.exp %74 : vector<8x8xf32>
    %cst_37 = arith.constant dense<0.000000e+00> : vector<8xf32>
    %76 = vector.multi_reduction <add>, %75, %cst_37 [1] : vector<8x8xf32> to vector<8xf32>
    %77 = vector.shape_cast %76 : vector<8xf32> to vector<8x1xf32>
    %78 = vector.broadcast %77 : vector<8x1xf32> to vector<8x8xf32>
    %79 = arith.divf %75, %78 : vector<8x8xf32>
    %80 = arith.truncf %79 : vector<8x8xf32> to vector<8x8xbf16>
    %81 = vector.extract_strided_slice %23 {offsets = [0, 16], sizes = [8, 8], strides = [1, 1]} : vector<8x32xbf16> to vector<8x8xbf16>
    %cst_38 = arith.constant dense<0.000000e+00> : vector<8x8xf32>
    %82 = tpu.matmul %80, %81, %cst_38 {dimension_numbers = #tpu.dot_dimension_numbers<[1], [0], [0], [1], [0, 0, 1, 1], [], []>} : vector<8x8xbf16>, vector<8x8xbf16>, vector<8x8xf32> -> vector<8x8xf32>
    %c0_39 = arith.constant 0 : index
    %c16 = arith.constant 16 : index
    %83 = vector.load %arg10[%c0_39, %c16] : memref<8x32xf32, #tpu.memory_space<vmem>>, vector<8x8xf32>
    tpu.vector_store %arg10[%c0_39, %c16], %82 {strides = array<i32>} : memref<8x32xf32, #tpu.memory_space<vmem>>, vector<8x8xf32>,
    %84 = vector.extract_strided_slice %21 {offsets = [0, 24], sizes = [8, 8], strides = [1, 1]} : vector<8x32xbf16> to vector<8x8xbf16>
    %85 = vector.extract_strided_slice %22 {offsets = [0, 24], sizes = [8, 8], strides = [1, 1]} : vector<8x32xbf16> to vector<8x8xbf16>
    %cst_40 = arith.constant dense<0.000000e+00> : vector<8x8xf32>
    %86 = tpu.matmul %84, %85, %cst_40 {dimension_numbers = #tpu.dot_dimension_numbers<[1], [1], [0], [0], [0, 0, 1, 0], [], []>} : vector<8x8xbf16>, vector<8x8xbf16>, vector<8x8xf32> -> vector<8x8xf32>
    %cst_41 = arith.constant 0.353553385 : f32
    %87 = vector.broadcast %cst_41 : f32 to vector<8x8xf32>
    %88 = arith.mulf %86, %87 : vector<8x8xf32>
    %cst_42 = arith.constant -1.000000e+09 : f32
    %89 = vector.broadcast %cst_42 : f32 to vector<8x8xf32>
    %90 = arith.select %15, %88, %89 : vector<8x8xi1>, vector<8x8xf32>
    %cst_43 = arith.constant dense<0xFF800000> : vector<8xf32>
    %91 = vector.multi_reduction <maximumf>, %90, %cst_43 [1] : vector<8x8xf32> to vector<8xf32>
    %92 = vector.shape_cast %91 : vector<8xf32> to vector<8x1xf32>
    %93 = vector.broadcast %92 : vector<8x1xf32> to vector<8x8xf32>
    %94 = arith.subf %90, %93 : vector<8x8xf32>
    %95 = math.exp %94 : vector<8x8xf32>
    %cst_44 = arith.constant dense<0.000000e+00> : vector<8xf32>
    %96 = vector.multi_reduction <add>, %95, %cst_44 [1] : vector<8x8xf32> to vector<8xf32>
    %97 = vector.shape_cast %96 : vector<8xf32> to vector<8x1xf32>
    %98 = vector.broadcast %97 : vector<8x1xf32> to vector<8x8xf32>
    %99 = arith.divf %95, %98 : vector<8x8xf32>
    %100 = arith.truncf %99 : vector<8x8xf32> to vector<8x8xbf16>
    %101 = vector.extract_strided_slice %23 {offsets = [0, 24], sizes = [8, 8], strides = [1, 1]} : vector<8x32xbf16> to vector<8x8xbf16>
    %cst_45 = arith.constant dense<0.000000e+00> : vector<8x8xf32>
    %102 = tpu.matmul %100, %101, %cst_45 {dimension_numbers = #tpu.dot_dimension_numbers<[1], [0], [0], [1], [0, 0, 1, 1], [], []>} : vector<8x8xbf16>, vector<8x8xbf16>, vector<8x8xf32> -> vector<8x8xf32>
    %c0_46 = arith.constant 0 : index
    %c24 = arith.constant 24 : index
    %103 = vector.load %arg10[%c0_46, %c24] : memref<8x32xf32, #tpu.memory_space<vmem>>, vector<8x8xf32>
    tpu.vector_store %arg10[%c0_46, %c24], %102 {strides = array<i32>} : memref<8x32xf32, #tpu.memory_space<vmem>>, vector<8x8xf32>,
    %c0_47 = arith.constant 0 : index
    %c0_48 = arith.constant 0 : index
    %104 = vector.load %arg10[%c0_47, %c0_48] : memref<8x32xf32, #tpu.memory_space<vmem>>, vector<8x32xf32>
    %105 = arith.truncf %104 : vector<8x32xf32> to vector<8x32xbf16>
    %cst_49 = arith.constant dense<0.000000e+00> : vector<8x32xf32>
    %106 = tpu.matmul %105, %16, %cst_49 {dimension_numbers = #tpu.dot_dimension_numbers<[1], [0], [0], [1], [0, 0, 1, 1], [], []>} : vector<8x32xbf16>, vector<32x32xbf16>, vector<8x32xf32> -> vector<8x32xf32>
    %107 = vector.broadcast %17 : vector<1x32xf32> to vector<8x32xf32>
    %108 = arith.addf %106, %107 : vector<8x32xf32>
    %109 = arith.addf %18, %108 : vector<8x32xf32>
    %cst_50 = arith.constant dense<0.000000e+00> : vector<8xf32>
    %110 = vector.multi_reduction <add>, %109, %cst_50 [1] : vector<8x32xf32> to vector<8xf32>
    %111 = vector.shape_cast %110 : vector<8xf32> to vector<8x1xf32>
    %cst_51 = arith.constant 3.200000e+01 : f32
    %112 = vector.broadcast %cst_51 : f32 to vector<8x1xf32>
    %113 = arith.divf %111, %112 : vector<8x1xf32>
    %114 = vector.broadcast %113 : vector<8x1xf32> to vector<8x32xf32>
    %115 = arith.subf %109, %114 : vector<8x32xf32>
    %116 = arith.mulf %115, %115 : vector<8x32xf32>
    %cst_52 = arith.constant dense<0.000000e+00> : vector<8xf32>
    %117 = vector.multi_reduction <add>, %116, %cst_52 [1] : vector<8x32xf32> to vector<8xf32>
    %118 = vector.shape_cast %117 : vector<8xf32> to vector<8x1xf32>
    %cst_53 = arith.constant 3.200000e+01 : f32
    %119 = vector.broadcast %cst_53 : f32 to vector<8x1xf32>
    %120 = arith.divf %118, %119 : vector<8x1xf32>
    %cst_54 = arith.constant 9.99999974E-6 : f32
    %121 = vector.broadcast %cst_54 : f32 to vector<8x1xf32>
    %122 = arith.addf %120, %121 : vector<8x1xf32>
    %123 = math.rsqrt %122 : vector<8x1xf32>
    %124 = vector.broadcast %123 : vector<8x1xf32> to vector<8x32xf32>
    %125 = arith.mulf %115, %124 : vector<8x32xf32>
    %126 = vector.broadcast %19 : vector<1x32xf32> to vector<8x32xf32>
    %127 = arith.mulf %125, %126 : vector<8x32xf32>
    %128 = vector.broadcast %20 : vector<1x32xf32> to vector<8x32xf32>
    %129 = arith.addf %127, %128 : vector<8x32xf32>
    %130 = arith.truncf %129 : vector<8x32xf32> to vector<8x32xbf16>
    %c0_55 = arith.constant 0 : index
    %c0_56 = arith.constant 0 : index
    %c0_57 = arith.constant 0 : index
    %131 = vector.load %arg9[%c0_55, %c0_56, %c0_57] : memref<1x8x32xbf16, #tpu.memory_space<vmem>>, vector<1x8x32xbf16>
    %132 = vector.shape_cast %131 : vector<1x8x32xbf16> to vector<8x32xbf16>
    %133 = vector.shape_cast %130 : vector<8x32xbf16> to vector<1x8x32xbf16>
    tpu.vector_store %arg9[%c0_55, %c0_56, %c0_57], %133 {strides = array<i32>} : memref<1x8x32xbf16, #tpu.memory_space<vmem>>, vector<1x8x32xbf16>,
    return
  }
  func.func @transform_0(%arg0: i32) -> (i32, i32, i32) {
    %c0_i32 = arith.constant 0 : i32
    %c0_i32_0 = arith.constant 0 : i32
    %c0_i32_1 = arith.constant 0 : i32
    return %arg0, %c0_i32, %c0_i32_0 : i32, i32, i32
  }
  func.func @transform_1(%arg0: i32) -> (i32, i32, i32) {
    %c0_i32 = arith.constant 0 : i32
    %c0_i32_0 = arith.constant 0 : i32
    %c0_i32_1 = arith.constant 0 : i32
    return %arg0, %c0_i32, %c0_i32_0 : i32, i32, i32
  }
  func.func @transform_2(%arg0: i32) -> (i32, i32) {
    %c0_i32 = arith.constant 0 : i32
    %c0_i32_0 = arith.constant 0 : i32
    %c0_i32_1 = arith.constant 0 : i32
    return %c0_i32, %c0_i32_0 : i32, i32
  }
  func.func @transform_3(%arg0: i32) -> (i32, i32) {
    %c0_i32 = arith.constant 0 : i32
    %c0_i32_0 = arith.constant 0 : i32
    %c0_i32_1 = arith.constant 0 : i32
    return %c0_i32, %c0_i32_0 : i32, i32
  }
  func.func @transform_4(%arg0: i32) -> (i32, i32) {
    %c0_i32 = arith.constant 0 : i32
    %c0_i32_0 = arith.constant 0 : i32
    %c0_i32_1 = arith.constant 0 : i32
    return %c0_i32, %c0_i32_0 : i32, i32
  }
  func.func @transform_5(%arg0: i32) -> (i32, i32) {
    %c0_i32 = arith.constant 0 : i32
    %c0_i32_0 = arith.constant 0 : i32
    %c0_i32_1 = arith.constant 0 : i32
    return %c0_i32, %c0_i32_0 : i32, i32
  }
  func.func @transform_6(%arg0: i32) -> (i32, i32) {
    %c0_i32 = arith.constant 0 : i32
    %c0_i32_0 = arith.constant 0 : i32
    %c0_i32_1 = arith.constant 0 : i32
    return %c0_i32, %c0_i32_0 : i32, i32
  }
  func.func @transform_7(%arg0: i32) -> (i32, i32) {
    %c0_i32 = arith.constant 0 : i32
    %c0_i32_0 = arith.constant 0 : i32
    %c0_i32_1 = arith.constant 0 : i32
    return %c0_i32, %c0_i32_0 : i32, i32
  }
  func.func @transform_8(%arg0: i32) -> (i32, i32, i32) {
    %c0_i32 = arith.constant 0 : i32
    %c0_i32_0 = arith.constant 0 : i32
    %c0_i32_1 = arith.constant 0 : i32
    return %arg0, %c0_i32, %c0_i32_0 : i32, i32, i32
  }
}

module attributes {stable_mosaic.version = 11 : i64} {
  func.func @_ffn_ln_kernel(%arg0: i32, %arg1: memref<16x32xbf16, #tpu.memory_space<vmem>>, %arg2: memref<32x64xbf16, #tpu.memory_space<vmem>>, %arg3: memref<1x64xf32, #tpu.memory_space<vmem>>, %arg4: memref<64x32xbf16, #tpu.memory_space<vmem>>, %arg5: memref<1x32xf32, #tpu.memory_space<vmem>>, %arg6: memref<1x32xf32, #tpu.memory_space<vmem>>, %arg7: memref<1x32xf32, #tpu.memory_space<vmem>>, %arg8: memref<16x32xbf16, #tpu.memory_space<vmem>>) attributes {dimension_semantics = [#tpu.dimension_semantics<parallel>], iteration_bounds = array<i64: 1>, scalar_prefetch = 0 : i64, scratch_operands = 0 : i64, tpu.core_type = #tpu.core_type<tc>, window_params = [{transform_indices = @transform_0, window_bounds = array<i64: 16, 32>}, {pipeline_mode = #tpu.pipeline_mode<synchronous>, transform_indices = @transform_1, window_bounds = array<i64: 32, 64>}, {pipeline_mode = #tpu.pipeline_mode<synchronous>, transform_indices = @transform_2, window_bounds = array<i64: 1, 64>}, {pipeline_mode = #tpu.pipeline_mode<synchronous>, transform_indices = @transform_3, window_bounds = array<i64: 64, 32>}, {pipeline_mode = #tpu.pipeline_mode<synchronous>, transform_indices = @transform_4, window_bounds = array<i64: 1, 32>}, {pipeline_mode = #tpu.pipeline_mode<synchronous>, transform_indices = @transform_5, window_bounds = array<i64: 1, 32>}, {pipeline_mode = #tpu.pipeline_mode<synchronous>, transform_indices = @transform_6, window_bounds = array<i64: 1, 32>}, {transform_indices = @transform_7, window_bounds = array<i64: 16, 32>}]} {
    %c0 = arith.constant 0 : index
    %c0_0 = arith.constant 0 : index
    %0 = vector.load %arg1[%c0, %c0_0] : memref<16x32xbf16, #tpu.memory_space<vmem>>, vector<16x32xbf16>
    %c0_1 = arith.constant 0 : index
    %c0_2 = arith.constant 0 : index
    %1 = vector.load %arg2[%c0_1, %c0_2] : memref<32x64xbf16, #tpu.memory_space<vmem>>, vector<32x64xbf16>
    %cst = arith.constant dense<0.000000e+00> : vector<16x64xf32>
    %2 = tpu.matmul %0, %1, %cst {dimension_numbers = #tpu.dot_dimension_numbers<[1], [0], [0], [1], [0, 0, 1, 1], [], []>} : vector<16x32xbf16>, vector<32x64xbf16>, vector<16x64xf32> -> vector<16x64xf32>
    %c0_3 = arith.constant 0 : index
    %c0_4 = arith.constant 0 : index
    %3 = vector.load %arg3[%c0_3, %c0_4] : memref<1x64xf32, #tpu.memory_space<vmem>>, vector<1x64xf32>
    %4 = vector.broadcast %3 : vector<1x64xf32> to vector<16x64xf32>
    %5 = arith.addf %2, %4 : vector<16x64xf32>
    %cst_5 = arith.constant 0.000000e+00 : f32
    %6 = vector.broadcast %cst_5 : f32 to vector<16x64xf32>
    %7 = arith.maximumf %5, %6 : vector<16x64xf32>
    %8 = arith.truncf %7 : vector<16x64xf32> to vector<16x64xbf16>
    %c0_6 = arith.constant 0 : index
    %c0_7 = arith.constant 0 : index
    %9 = vector.load %arg4[%c0_6, %c0_7] : memref<64x32xbf16, #tpu.memory_space<vmem>>, vector<64x32xbf16>
    %cst_8 = arith.constant dense<0.000000e+00> : vector<16x32xf32>
    %10 = tpu.matmul %8, %9, %cst_8 {dimension_numbers = #tpu.dot_dimension_numbers<[1], [0], [0], [1], [0, 0, 1, 1], [], []>} : vector<16x64xbf16>, vector<64x32xbf16>, vector<16x32xf32> -> vector<16x32xf32>
    %c0_9 = arith.constant 0 : index
    %c0_10 = arith.constant 0 : index
    %11 = vector.load %arg5[%c0_9, %c0_10] : memref<1x32xf32, #tpu.memory_space<vmem>>, vector<1x32xf32>
    %12 = vector.broadcast %11 : vector<1x32xf32> to vector<16x32xf32>
    %13 = arith.addf %10, %12 : vector<16x32xf32>
    %14 = arith.extf %0 : vector<16x32xbf16> to vector<16x32xf32>
    %15 = arith.addf %14, %13 : vector<16x32xf32>
    %cst_11 = arith.constant dense<0.000000e+00> : vector<16xf32>
    %16 = vector.multi_reduction <add>, %15, %cst_11 [1] : vector<16x32xf32> to vector<16xf32>
    %17 = vector.shape_cast %16 : vector<16xf32> to vector<16x1xf32>
    %cst_12 = arith.constant 3.200000e+01 : f32
    %18 = vector.broadcast %cst_12 : f32 to vector<16x1xf32>
    %19 = arith.divf %17, %18 : vector<16x1xf32>
    %20 = vector.broadcast %19 : vector<16x1xf32> to vector<16x32xf32>
    %21 = arith.subf %15, %20 : vector<16x32xf32>
    %22 = arith.mulf %21, %21 : vector<16x32xf32>
    %cst_13 = arith.constant dense<0.000000e+00> : vector<16xf32>
    %23 = vector.multi_reduction <add>, %22, %cst_13 [1] : vector<16x32xf32> to vector<16xf32>
    %24 = vector.shape_cast %23 : vector<16xf32> to vector<16x1xf32>
    %cst_14 = arith.constant 3.200000e+01 : f32
    %25 = vector.broadcast %cst_14 : f32 to vector<16x1xf32>
    %26 = arith.divf %24, %25 : vector<16x1xf32>
    %cst_15 = arith.constant 9.99999974E-6 : f32
    %27 = vector.broadcast %cst_15 : f32 to vector<16x1xf32>
    %28 = arith.addf %26, %27 : vector<16x1xf32>
    %29 = math.rsqrt %28 : vector<16x1xf32>
    %30 = vector.broadcast %29 : vector<16x1xf32> to vector<16x32xf32>
    %31 = arith.mulf %21, %30 : vector<16x32xf32>
    %c0_16 = arith.constant 0 : index
    %c0_17 = arith.constant 0 : index
    %32 = vector.load %arg6[%c0_16, %c0_17] : memref<1x32xf32, #tpu.memory_space<vmem>>, vector<1x32xf32>
    %33 = vector.broadcast %32 : vector<1x32xf32> to vector<16x32xf32>
    %34 = arith.mulf %31, %33 : vector<16x32xf32>
    %c0_18 = arith.constant 0 : index
    %c0_19 = arith.constant 0 : index
    %35 = vector.load %arg7[%c0_18, %c0_19] : memref<1x32xf32, #tpu.memory_space<vmem>>, vector<1x32xf32>
    %36 = vector.broadcast %35 : vector<1x32xf32> to vector<16x32xf32>
    %37 = arith.addf %34, %36 : vector<16x32xf32>
    %38 = arith.truncf %37 : vector<16x32xf32> to vector<16x32xbf16>
    %c0_20 = arith.constant 0 : index
    %c0_21 = arith.constant 0 : index
    %39 = vector.load %arg8[%c0_20, %c0_21] : memref<16x32xbf16, #tpu.memory_space<vmem>>, vector<16x32xbf16>
    tpu.vector_store %arg8[%c0_20, %c0_21], %38 {strides = array<i32>} : memref<16x32xbf16, #tpu.memory_space<vmem>>, vector<16x32xbf16>,
    return
  }
  func.func @transform_0(%arg0: i32) -> (i32, i32) {
    %c0_i32 = arith.constant 0 : i32
    %c0_i32_0 = arith.constant 0 : i32
    return %arg0, %c0_i32 : i32, i32
  }
  func.func @transform_1(%arg0: i32) -> (i32, i32) {
    %c0_i32 = arith.constant 0 : i32
    %c0_i32_0 = arith.constant 0 : i32
    %c0_i32_1 = arith.constant 0 : i32
    return %c0_i32, %c0_i32_0 : i32, i32
  }
  func.func @transform_2(%arg0: i32) -> (i32, i32) {
    %c0_i32 = arith.constant 0 : i32
    %c0_i32_0 = arith.constant 0 : i32
    %c0_i32_1 = arith.constant 0 : i32
    return %c0_i32, %c0_i32_0 : i32, i32
  }
  func.func @transform_3(%arg0: i32) -> (i32, i32) {
    %c0_i32 = arith.constant 0 : i32
    %c0_i32_0 = arith.constant 0 : i32
    %c0_i32_1 = arith.constant 0 : i32
    return %c0_i32, %c0_i32_0 : i32, i32
  }
  func.func @transform_4(%arg0: i32) -> (i32, i32) {
    %c0_i32 = arith.constant 0 : i32
    %c0_i32_0 = arith.constant 0 : i32
    %c0_i32_1 = arith.constant 0 : i32
    return %c0_i32, %c0_i32_0 : i32, i32
  }
  func.func @transform_5(%arg0: i32) -> (i32, i32) {
    %c0_i32 = arith.constant 0 : i32
    %c0_i32_0 = arith.constant 0 : i32
    %c0_i32_1 = arith.constant 0 : i32
    return %c0_i32, %c0_i32_0 : i32, i32
  }
  func.func @transform_6(%arg0: i32) -> (i32, i32) {
    %c0_i32 = arith.constant 0 : i32
    %c0_i32_0 = arith.constant 0 : i32
    %c0_i32_1 = arith.constant 0 : i32
    return %c0_i32, %c0_i32_0 : i32, i32
  }
  func.func @transform_7(%arg0: i32) -> (i32, i32) {
    %c0_i32 = arith.constant 0 : i32
    %c0_i32_0 = arith.constant 0 : i32
    return %arg0, %c0_i32 : i32, i32
  }
}

module attributes {stable_mosaic.version = 11 : i64} {
  func.func @_linear_kernel(%arg0: i32, %arg1: i32, %arg2: i32, %arg3: memref<16x32xbf16, #tpu.memory_space<vmem>>, %arg4: memref<32x128xbf16, #tpu.memory_space<vmem>>, %arg5: memref<1x128xf32, #tpu.memory_space<vmem>>, %arg6: memref<16x128xf32, #tpu.memory_space<vmem>>, %arg7: memref<16x128xf32, #tpu.memory_space<vmem>>) attributes {dimension_semantics = [#tpu.dimension_semantics<parallel>, #tpu.dimension_semantics<parallel>, #tpu.dimension_semantics<arbitrary>], iteration_bounds = array<i64: 1, 1, 1>, scalar_prefetch = 0 : i64, scratch_operands = 1 : i64, tpu.core_type = #tpu.core_type<tc>, window_params = [{transform_indices = @transform_0, window_bounds = array<i64: 16, 32>}, {transform_indices = @transform_1, window_bounds = array<i64: 32, 128>}, {transform_indices = @transform_2, window_bounds = array<i64: 1, 128>}, {transform_indices = @transform_3, window_bounds = array<i64: 16, 128>}]} {
    %c0_i32 = arith.constant 0 : i32
    %0 = arith.cmpi eq, %arg2, %c0_i32 : i32
    %1 = arith.extui %0 : i1 to i32
    %c0_i32_0 = arith.constant 0 : i32
    %2 = arith.cmpi ne, %1, %c0_i32_0 : i32
    scf.if %2 {
      %cst_10 = arith.constant 0.000000e+00 : f32
      %12 = vector.broadcast %cst_10 : f32 to vector<16x128xf32>
      %c0_11 = arith.constant 0 : index
      %c0_12 = arith.constant 0 : index
      %13 = vector.load %arg7[%c0_11, %c0_12] : memref<16x128xf32, #tpu.memory_space<vmem>>, vector<16x128xf32>
      tpu.vector_store %arg7[%c0_11, %c0_12], %12 {strides = array<i32>} : memref<16x128xf32, #tpu.memory_space<vmem>>, vector<16x128xf32>,
    } else {
    }
    %c0 = arith.constant 0 : index
    %c0_1 = arith.constant 0 : index
    %3 = vector.load %arg7[%c0, %c0_1] : memref<16x128xf32, #tpu.memory_space<vmem>>, vector<16x128xf32>
    %c0_2 = arith.constant 0 : index
    %c0_3 = arith.constant 0 : index
    %4 = vector.load %arg3[%c0_2, %c0_3] : memref<16x32xbf16, #tpu.memory_space<vmem>>, vector<16x32xbf16>
    %c0_4 = arith.constant 0 : index
    %c0_5 = arith.constant 0 : index
    %5 = vector.load %arg4[%c0_4, %c0_5] : memref<32x128xbf16, #tpu.memory_space<vmem>>, vector<32x128xbf16>
    %cst = arith.constant dense<0.000000e+00> : vector<16x128xf32>
    %6 = tpu.matmul %4, %5, %cst {dimension_numbers = #tpu.dot_dimension_numbers<[1], [0], [0], [1], [0, 0, 1, 1], [], []>} : vector<16x32xbf16>, vector<32x128xbf16>, vector<16x128xf32> -> vector<16x128xf32>
    %7 = arith.addf %3, %6 : vector<16x128xf32>
    %c0_6 = arith.constant 0 : index
    %c0_7 = arith.constant 0 : index
    %8 = vector.load %arg7[%c0_6, %c0_7] : memref<16x128xf32, #tpu.memory_space<vmem>>, vector<16x128xf32>
    tpu.vector_store %arg7[%c0_6, %c0_7], %7 {strides = array<i32>} : memref<16x128xf32, #tpu.memory_space<vmem>>, vector<16x128xf32>,
    %c0_i32_8 = arith.constant 0 : i32
    %9 = arith.cmpi eq, %arg2, %c0_i32_8 : i32
    %10 = arith.extui %9 : i1 to i32
    %c0_i32_9 = arith.constant 0 : i32
    %11 = arith.cmpi ne, %10, %c0_i32_9 : i32
    scf.if %11 {
      %c0_10 = arith.constant 0 : index
      %c0_11 = arith.constant 0 : index
      %12 = vector.load %arg7[%c0_10, %c0_11] : memref<16x128xf32, #tpu.memory_space<vmem>>, vector<16x128xf32>
      %c0_12 = arith.constant 0 : index
      %c0_13 = arith.constant 0 : index
      %13 = vector.load %arg5[%c0_12, %c0_13] : memref<1x128xf32, #tpu.memory_space<vmem>>, vector<1x128xf32>
      %14 = vector.broadcast %13 : vector<1x128xf32> to vector<16x128xf32>
      %15 = arith.addf %12, %14 : vector<16x128xf32>
      %c0_14 = arith.constant 0 : index
      %c0_15 = arith.constant 0 : index
      %16 = vector.load %arg6[%c0_14, %c0_15] : memref<16x128xf32, #tpu.memory_space<vmem>>, vector<16x128xf32>
      tpu.vector_store %arg6[%c0_14, %c0_15], %15 {strides = array<i32>} : memref<16x128xf32, #tpu.memory_space<vmem>>, vector<16x128xf32>,
    } else {
    }
    return
  }
  func.func @transform_0(%arg0: i32, %arg1: i32, %arg2: i32) -> (i32, i32) {
    %c0_i32 = arith.constant 0 : i32
    return %arg0, %arg2 : i32, i32
  }
  func.func @transform_1(%arg0: i32, %arg1: i32, %arg2: i32) -> (i32, i32) {
    %c0_i32 = arith.constant 0 : i32
    return %arg2, %arg1 : i32, i32
  }
  func.func @transform_2(%arg0: i32, %arg1: i32, %arg2: i32) -> (i32, i32) {
    %c0_i32 = arith.constant 0 : i32
    %c0_i32_0 = arith.constant 0 : i32
    return %c0_i32, %arg1 : i32, i32
  }
  func.func @transform_3(%arg0: i32, %arg1: i32, %arg2: i32) -> (i32, i32) {
    %c0_i32 = arith.constant 0 : i32
    return %arg0, %arg1 : i32, i32
  }
}

module attributes {stable_mosaic.version = 11 : i64} {
  func.func @_self_attn_ln_kernel(%arg0: i32, %arg1: memref<1x8x32xbf16, #tpu.memory_space<vmem>>, %arg2: memref<1x1x8xf32, #tpu.memory_space<vmem>>, %arg3: memref<32x96xbf16, #tpu.memory_space<vmem>>, %arg4: memref<1x96xf32, #tpu.memory_space<vmem>>, %arg5: memref<32x32xbf16, #tpu.memory_space<vmem>>, %arg6: memref<1x32xf32, #tpu.memory_space<vmem>>, %arg7: memref<1x32xf32, #tpu.memory_space<vmem>>, %arg8: memref<1x32xf32, #tpu.memory_space<vmem>>, %arg9: memref<1x8x32xbf16, #tpu.memory_space<vmem>>, %arg10: memref<8x32xf32, #tpu.memory_space<vmem>>) attributes {dimension_semantics = [#tpu.dimension_semantics<parallel>], iteration_bounds = array<i64: 2>, scalar_prefetch = 0 : i64, scratch_operands = 1 : i64, tpu.core_type = #tpu.core_type<tc>, window_params = [{transform_indices = @transform_0, window_bounds = array<i64: 1, 8, 32>}, {transform_indices = @transform_1, window_bounds = array<i64: 1, 1, 8>}, {pipeline_mode = #tpu.pipeline_mode<synchronous>, transform_indices = @transform_2, window_bounds = array<i64: 32, 96>}, {pipeline_mode = #tpu.pipeline_mode<synchronous>, transform_indices = @transform_3, window_bounds = array<i64: 1, 96>}, {pipeline_mode = #tpu.pipeline_mode<synchronous>, transform_indices = @transform_4, window_bounds = array<i64: 32, 32>}, {pipeline_mode = #tpu.pipeline_mode<synchronous>, transform_indices = @transform_5, window_bounds = array<i64: 1, 32>}, {pipeline_mode = #tpu.pipeline_mode<synchronous>, transform_indices = @transform_6, window_bounds = array<i64: 1, 32>}, {pipeline_mode = #tpu.pipeline_mode<synchronous>, transform_indices = @transform_7, window_bounds = array<i64: 1, 32>}, {transform_indices = @transform_8, window_bounds = array<i64: 1, 8, 32>}]} {
    %c0 = arith.constant 0 : index
    %c0_0 = arith.constant 0 : index
    %c0_1 = arith.constant 0 : index
    %0 = vector.load %arg1[%c0, %c0_0, %c0_1] : memref<1x8x32xbf16, #tpu.memory_space<vmem>>, vector<1x8x32xbf16>
    %1 = vector.shape_cast %0 : vector<1x8x32xbf16> to vector<8x32xbf16>
    %c0_2 = arith.constant 0 : index
    %c0_3 = arith.constant 0 : index
    %2 = vector.load %arg3[%c0_2, %c0_3] : memref<32x96xbf16, #tpu.memory_space<vmem>>, vector<32x96xbf16>
    %cst = arith.constant dense<0.000000e+00> : vector<8x96xf32>
    %3 = tpu.matmul %1, %2, %cst {dimension_numbers = #tpu.dot_dimension_numbers<[1], [0], [0], [1], [0, 0, 1, 1], [], []>} : vector<8x32xbf16>, vector<32x96xbf16>, vector<8x96xf32> -> vector<8x96xf32>
    %c0_4 = arith.constant 0 : index
    %c0_5 = arith.constant 0 : index
    %4 = vector.load %arg4[%c0_4, %c0_5] : memref<1x96xf32, #tpu.memory_space<vmem>>, vector<1x96xf32>
    %5 = vector.broadcast %4 : vector<1x96xf32> to vector<8x96xf32>
    %6 = arith.addf %3, %5 : vector<8x96xf32>
    %7 = vector.extract_strided_slice %6 {offsets = [0, 0], sizes = [8, 32], strides = [1, 1]} : vector<8x96xf32> to vector<8x32xf32>
    %8 = vector.extract_strided_slice %6 {offsets = [0, 32], sizes = [8, 32], strides = [1, 1]} : vector<8x96xf32> to vector<8x32xf32>
    %9 = vector.extract_strided_slice %6 {offsets = [0, 64], sizes = [8, 32], strides = [1, 1]} : vector<8x96xf32> to vector<8x32xf32>
    %c0_6 = arith.constant 0 : index
    %c0_7 = arith.constant 0 : index
    %c0_8 = arith.constant 0 : index
    %10 = vector.load %arg2[%c0_6, %c0_7, %c0_8] : memref<1x1x8xf32, #tpu.memory_space<vmem>>, vector<1x1x8xf32>
    %11 = vector.shape_cast %10 : vector<1x1x8xf32> to vector<1x8xf32>
    %cst_9 = arith.constant 5.000000e-01 : f32
    %12 = vector.broadcast %cst_9 : f32 to vector<1x8xf32>
    %13 = arith.cmpf ogt, %11, %12 : vector<1x8xf32>
    %14 = vector.shape_cast %13 : vector<1x8xi1> to vector<1x8xi1>
    %15 = vector.broadcast %14 : vector<1x8xi1> to vector<8x8xi1>
    %16 = tpu.iota {dimensions = array<i32: 0>} : vector<8x8xi32>
    %17 = tpu.iota {dimensions = array<i32: 1>} : vector<8x8xi32>
    %18 = arith.cmpi sle, %17, %16 : vector<8x8xi32>
    %19 = arith.andi %15, %18 : vector<8x8xi1>
    %c0_10 = arith.constant 0 : index
    %c0_11 = arith.constant 0 : index
    %20 = vector.load %arg5[%c0_10, %c0_11] : memref<32x32xbf16, #tpu.memory_space<vmem>>, vector<32x32xbf16>
    %c0_12 = arith.constant 0 : index
    %c0_13 = arith.constant 0 : index
    %21 = vector.load %arg6[%c0_12, %c0_13] : memref<1x32xf32, #tpu.memory_space<vmem>>, vector<1x32xf32>
    %22 = arith.extf %1 : vector<8x32xbf16> to vector<8x32xf32>
    %c0_14 = arith.constant 0 : index
    %c0_15 = arith.constant 0 : index
    %23 = vector.load %arg7[%c0_14, %c0_15] : memref<1x32xf32, #tpu.memory_space<vmem>>, vector<1x32xf32>
    %c0_16 = arith.constant 0 : index
    %c0_17 = arith.constant 0 : index
    %24 = vector.load %arg8[%c0_16, %c0_17] : memref<1x32xf32, #tpu.memory_space<vmem>>, vector<1x32xf32>
    %25 = arith.truncf %7 : vector<8x32xf32> to vector<8x32xbf16>
    %26 = arith.truncf %8 : vector<8x32xf32> to vector<8x32xbf16>
    %27 = arith.truncf %9 : vector<8x32xf32> to vector<8x32xbf16>
    %28 = vector.extract_strided_slice %25 {offsets = [0, 0], sizes = [8, 8], strides = [1, 1]} : vector<8x32xbf16> to vector<8x8xbf16>
    %29 = vector.extract_strided_slice %26 {offsets = [0, 0], sizes = [8, 8], strides = [1, 1]} : vector<8x32xbf16> to vector<8x8xbf16>
    %cst_18 = arith.constant dense<0.000000e+00> : vector<8x8xf32>
    %30 = tpu.matmul %28, %29, %cst_18 {dimension_numbers = #tpu.dot_dimension_numbers<[1], [1], [0], [0], [0, 0, 1, 0], [], []>} : vector<8x8xbf16>, vector<8x8xbf16>, vector<8x8xf32> -> vector<8x8xf32>
    %cst_19 = arith.constant 0.353553385 : f32
    %31 = vector.broadcast %cst_19 : f32 to vector<8x8xf32>
    %32 = arith.mulf %30, %31 : vector<8x8xf32>
    %cst_20 = arith.constant -1.000000e+09 : f32
    %33 = vector.broadcast %cst_20 : f32 to vector<8x8xf32>
    %34 = arith.select %19, %32, %33 : vector<8x8xi1>, vector<8x8xf32>
    %cst_21 = arith.constant dense<0xFF800000> : vector<8xf32>
    %35 = vector.multi_reduction <maximumf>, %34, %cst_21 [1] : vector<8x8xf32> to vector<8xf32>
    %36 = vector.shape_cast %35 : vector<8xf32> to vector<8x1xf32>
    %37 = vector.broadcast %36 : vector<8x1xf32> to vector<8x8xf32>
    %38 = arith.subf %34, %37 : vector<8x8xf32>
    %39 = math.exp %38 : vector<8x8xf32>
    %cst_22 = arith.constant dense<0.000000e+00> : vector<8xf32>
    %40 = vector.multi_reduction <add>, %39, %cst_22 [1] : vector<8x8xf32> to vector<8xf32>
    %41 = vector.shape_cast %40 : vector<8xf32> to vector<8x1xf32>
    %42 = vector.broadcast %41 : vector<8x1xf32> to vector<8x8xf32>
    %43 = arith.divf %39, %42 : vector<8x8xf32>
    %44 = arith.truncf %43 : vector<8x8xf32> to vector<8x8xbf16>
    %45 = vector.extract_strided_slice %27 {offsets = [0, 0], sizes = [8, 8], strides = [1, 1]} : vector<8x32xbf16> to vector<8x8xbf16>
    %cst_23 = arith.constant dense<0.000000e+00> : vector<8x8xf32>
    %46 = tpu.matmul %44, %45, %cst_23 {dimension_numbers = #tpu.dot_dimension_numbers<[1], [0], [0], [1], [0, 0, 1, 1], [], []>} : vector<8x8xbf16>, vector<8x8xbf16>, vector<8x8xf32> -> vector<8x8xf32>
    %c0_24 = arith.constant 0 : index
    %c0_25 = arith.constant 0 : index
    %47 = vector.load %arg10[%c0_24, %c0_25] : memref<8x32xf32, #tpu.memory_space<vmem>>, vector<8x8xf32>
    tpu.vector_store %arg10[%c0_24, %c0_25], %46 {strides = array<i32>} : memref<8x32xf32, #tpu.memory_space<vmem>>, vector<8x8xf32>,
    %48 = vector.extract_strided_slice %25 {offsets = [0, 8], sizes = [8, 8], strides = [1, 1]} : vector<8x32xbf16> to vector<8x8xbf16>
    %49 = vector.extract_strided_slice %26 {offsets = [0, 8], sizes = [8, 8], strides = [1, 1]} : vector<8x32xbf16> to vector<8x8xbf16>
    %cst_26 = arith.constant dense<0.000000e+00> : vector<8x8xf32>
    %50 = tpu.matmul %48, %49, %cst_26 {dimension_numbers = #tpu.dot_dimension_numbers<[1], [1], [0], [0], [0, 0, 1, 0], [], []>} : vector<8x8xbf16>, vector<8x8xbf16>, vector<8x8xf32> -> vector<8x8xf32>
    %cst_27 = arith.constant 0.353553385 : f32
    %51 = vector.broadcast %cst_27 : f32 to vector<8x8xf32>
    %52 = arith.mulf %50, %51 : vector<8x8xf32>
    %cst_28 = arith.constant -1.000000e+09 : f32
    %53 = vector.broadcast %cst_28 : f32 to vector<8x8xf32>
    %54 = arith.select %19, %52, %53 : vector<8x8xi1>, vector<8x8xf32>
    %cst_29 = arith.constant dense<0xFF800000> : vector<8xf32>
    %55 = vector.multi_reduction <maximumf>, %54, %cst_29 [1] : vector<8x8xf32> to vector<8xf32>
    %56 = vector.shape_cast %55 : vector<8xf32> to vector<8x1xf32>
    %57 = vector.broadcast %56 : vector<8x1xf32> to vector<8x8xf32>
    %58 = arith.subf %54, %57 : vector<8x8xf32>
    %59 = math.exp %58 : vector<8x8xf32>
    %cst_30 = arith.constant dense<0.000000e+00> : vector<8xf32>
    %60 = vector.multi_reduction <add>, %59, %cst_30 [1] : vector<8x8xf32> to vector<8xf32>
    %61 = vector.shape_cast %60 : vector<8xf32> to vector<8x1xf32>
    %62 = vector.broadcast %61 : vector<8x1xf32> to vector<8x8xf32>
    %63 = arith.divf %59, %62 : vector<8x8xf32>
    %64 = arith.truncf %63 : vector<8x8xf32> to vector<8x8xbf16>
    %65 = vector.extract_strided_slice %27 {offsets = [0, 8], sizes = [8, 8], strides = [1, 1]} : vector<8x32xbf16> to vector<8x8xbf16>
    %cst_31 = arith.constant dense<0.000000e+00> : vector<8x8xf32>
    %66 = tpu.matmul %64, %65, %cst_31 {dimension_numbers = #tpu.dot_dimension_numbers<[1], [0], [0], [1], [0, 0, 1, 1], [], []>} : vector<8x8xbf16>, vector<8x8xbf16>, vector<8x8xf32> -> vector<8x8xf32>
    %c0_32 = arith.constant 0 : index
    %c8 = arith.constant 8 : index
    %67 = vector.load %arg10[%c0_32, %c8] : memref<8x32xf32, #tpu.memory_space<vmem>>, vector<8x8xf32>
    tpu.vector_store %arg10[%c0_32, %c8], %66 {strides = array<i32>} : memref<8x32xf32, #tpu.memory_space<vmem>>, vector<8x8xf32>,
    %68 = vector.extract_strided_slice %25 {offsets = [0, 16], sizes = [8, 8], strides = [1, 1]} : vector<8x32xbf16> to vector<8x8xbf16>
    %69 = vector.extract_strided_slice %26 {offsets = [0, 16], sizes = [8, 8], strides = [1, 1]} : vector<8x32xbf16> to vector<8x8xbf16>
    %cst_33 = arith.constant dense<0.000000e+00> : vector<8x8xf32>
    %70 = tpu.matmul %68, %69, %cst_33 {dimension_numbers = #tpu.dot_dimension_numbers<[1], [1], [0], [0], [0, 0, 1, 0], [], []>} : vector<8x8xbf16>, vector<8x8xbf16>, vector<8x8xf32> -> vector<8x8xf32>
    %cst_34 = arith.constant 0.353553385 : f32
    %71 = vector.broadcast %cst_34 : f32 to vector<8x8xf32>
    %72 = arith.mulf %70, %71 : vector<8x8xf32>
    %cst_35 = arith.constant -1.000000e+09 : f32
    %73 = vector.broadcast %cst_35 : f32 to vector<8x8xf32>
    %74 = arith.select %19, %72, %73 : vector<8x8xi1>, vector<8x8xf32>
    %cst_36 = arith.constant dense<0xFF800000> : vector<8xf32>
    %75 = vector.multi_reduction <maximumf>, %74, %cst_36 [1] : vector<8x8xf32> to vector<8xf32>
    %76 = vector.shape_cast %75 : vector<8xf32> to vector<8x1xf32>
    %77 = vector.broadcast %76 : vector<8x1xf32> to vector<8x8xf32>
    %78 = arith.subf %74, %77 : vector<8x8xf32>
    %79 = math.exp %78 : vector<8x8xf32>
    %cst_37 = arith.constant dense<0.000000e+00> : vector<8xf32>
    %80 = vector.multi_reduction <add>, %79, %cst_37 [1] : vector<8x8xf32> to vector<8xf32>
    %81 = vector.shape_cast %80 : vector<8xf32> to vector<8x1xf32>
    %82 = vector.broadcast %81 : vector<8x1xf32> to vector<8x8xf32>
    %83 = arith.divf %79, %82 : vector<8x8xf32>
    %84 = arith.truncf %83 : vector<8x8xf32> to vector<8x8xbf16>
    %85 = vector.extract_strided_slice %27 {offsets = [0, 16], sizes = [8, 8], strides = [1, 1]} : vector<8x32xbf16> to vector<8x8xbf16>
    %cst_38 = arith.constant dense<0.000000e+00> : vector<8x8xf32>
    %86 = tpu.matmul %84, %85, %cst_38 {dimension_numbers = #tpu.dot_dimension_numbers<[1], [0], [0], [1], [0, 0, 1, 1], [], []>} : vector<8x8xbf16>, vector<8x8xbf16>, vector<8x8xf32> -> vector<8x8xf32>
    %c0_39 = arith.constant 0 : index
    %c16 = arith.constant 16 : index
    %87 = vector.load %arg10[%c0_39, %c16] : memref<8x32xf32, #tpu.memory_space<vmem>>, vector<8x8xf32>
    tpu.vector_store %arg10[%c0_39, %c16], %86 {strides = array<i32>} : memref<8x32xf32, #tpu.memory_space<vmem>>, vector<8x8xf32>,
    %88 = vector.extract_strided_slice %25 {offsets = [0, 24], sizes = [8, 8], strides = [1, 1]} : vector<8x32xbf16> to vector<8x8xbf16>
    %89 = vector.extract_strided_slice %26 {offsets = [0, 24], sizes = [8, 8], strides = [1, 1]} : vector<8x32xbf16> to vector<8x8xbf16>
    %cst_40 = arith.constant dense<0.000000e+00> : vector<8x8xf32>
    %90 = tpu.matmul %88, %89, %cst_40 {dimension_numbers = #tpu.dot_dimension_numbers<[1], [1], [0], [0], [0, 0, 1, 0], [], []>} : vector<8x8xbf16>, vector<8x8xbf16>, vector<8x8xf32> -> vector<8x8xf32>
    %cst_41 = arith.constant 0.353553385 : f32
    %91 = vector.broadcast %cst_41 : f32 to vector<8x8xf32>
    %92 = arith.mulf %90, %91 : vector<8x8xf32>
    %cst_42 = arith.constant -1.000000e+09 : f32
    %93 = vector.broadcast %cst_42 : f32 to vector<8x8xf32>
    %94 = arith.select %19, %92, %93 : vector<8x8xi1>, vector<8x8xf32>
    %cst_43 = arith.constant dense<0xFF800000> : vector<8xf32>
    %95 = vector.multi_reduction <maximumf>, %94, %cst_43 [1] : vector<8x8xf32> to vector<8xf32>
    %96 = vector.shape_cast %95 : vector<8xf32> to vector<8x1xf32>
    %97 = vector.broadcast %96 : vector<8x1xf32> to vector<8x8xf32>
    %98 = arith.subf %94, %97 : vector<8x8xf32>
    %99 = math.exp %98 : vector<8x8xf32>
    %cst_44 = arith.constant dense<0.000000e+00> : vector<8xf32>
    %100 = vector.multi_reduction <add>, %99, %cst_44 [1] : vector<8x8xf32> to vector<8xf32>
    %101 = vector.shape_cast %100 : vector<8xf32> to vector<8x1xf32>
    %102 = vector.broadcast %101 : vector<8x1xf32> to vector<8x8xf32>
    %103 = arith.divf %99, %102 : vector<8x8xf32>
    %104 = arith.truncf %103 : vector<8x8xf32> to vector<8x8xbf16>
    %105 = vector.extract_strided_slice %27 {offsets = [0, 24], sizes = [8, 8], strides = [1, 1]} : vector<8x32xbf16> to vector<8x8xbf16>
    %cst_45 = arith.constant dense<0.000000e+00> : vector<8x8xf32>
    %106 = tpu.matmul %104, %105, %cst_45 {dimension_numbers = #tpu.dot_dimension_numbers<[1], [0], [0], [1], [0, 0, 1, 1], [], []>} : vector<8x8xbf16>, vector<8x8xbf16>, vector<8x8xf32> -> vector<8x8xf32>
    %c0_46 = arith.constant 0 : index
    %c24 = arith.constant 24 : index
    %107 = vector.load %arg10[%c0_46, %c24] : memref<8x32xf32, #tpu.memory_space<vmem>>, vector<8x8xf32>
    tpu.vector_store %arg10[%c0_46, %c24], %106 {strides = array<i32>} : memref<8x32xf32, #tpu.memory_space<vmem>>, vector<8x8xf32>,
    %c0_47 = arith.constant 0 : index
    %c0_48 = arith.constant 0 : index
    %108 = vector.load %arg10[%c0_47, %c0_48] : memref<8x32xf32, #tpu.memory_space<vmem>>, vector<8x32xf32>
    %109 = arith.truncf %108 : vector<8x32xf32> to vector<8x32xbf16>
    %cst_49 = arith.constant dense<0.000000e+00> : vector<8x32xf32>
    %110 = tpu.matmul %109, %20, %cst_49 {dimension_numbers = #tpu.dot_dimension_numbers<[1], [0], [0], [1], [0, 0, 1, 1], [], []>} : vector<8x32xbf16>, vector<32x32xbf16>, vector<8x32xf32> -> vector<8x32xf32>
    %111 = vector.broadcast %21 : vector<1x32xf32> to vector<8x32xf32>
    %112 = arith.addf %110, %111 : vector<8x32xf32>
    %113 = arith.addf %22, %112 : vector<8x32xf32>
    %cst_50 = arith.constant dense<0.000000e+00> : vector<8xf32>
    %114 = vector.multi_reduction <add>, %113, %cst_50 [1] : vector<8x32xf32> to vector<8xf32>
    %115 = vector.shape_cast %114 : vector<8xf32> to vector<8x1xf32>
    %cst_51 = arith.constant 3.200000e+01 : f32
    %116 = vector.broadcast %cst_51 : f32 to vector<8x1xf32>
    %117 = arith.divf %115, %116 : vector<8x1xf32>
    %118 = vector.broadcast %117 : vector<8x1xf32> to vector<8x32xf32>
    %119 = arith.subf %113, %118 : vector<8x32xf32>
    %120 = arith.mulf %119, %119 : vector<8x32xf32>
    %cst_52 = arith.constant dense<0.000000e+00> : vector<8xf32>
    %121 = vector.multi_reduction <add>, %120, %cst_52 [1] : vector<8x32xf32> to vector<8xf32>
    %122 = vector.shape_cast %121 : vector<8xf32> to vector<8x1xf32>
    %cst_53 = arith.constant 3.200000e+01 : f32
    %123 = vector.broadcast %cst_53 : f32 to vector<8x1xf32>
    %124 = arith.divf %122, %123 : vector<8x1xf32>
    %cst_54 = arith.constant 9.99999974E-6 : f32
    %125 = vector.broadcast %cst_54 : f32 to vector<8x1xf32>
    %126 = arith.addf %124, %125 : vector<8x1xf32>
    %127 = math.rsqrt %126 : vector<8x1xf32>
    %128 = vector.broadcast %127 : vector<8x1xf32> to vector<8x32xf32>
    %129 = arith.mulf %119, %128 : vector<8x32xf32>
    %130 = vector.broadcast %23 : vector<1x32xf32> to vector<8x32xf32>
    %131 = arith.mulf %129, %130 : vector<8x32xf32>
    %132 = vector.broadcast %24 : vector<1x32xf32> to vector<8x32xf32>
    %133 = arith.addf %131, %132 : vector<8x32xf32>
    %134 = arith.truncf %133 : vector<8x32xf32> to vector<8x32xbf16>
    %c0_55 = arith.constant 0 : index
    %c0_56 = arith.constant 0 : index
    %c0_57 = arith.constant 0 : index
    %135 = vector.load %arg9[%c0_55, %c0_56, %c0_57] : memref<1x8x32xbf16, #tpu.memory_space<vmem>>, vector<1x8x32xbf16>
    %136 = vector.shape_cast %135 : vector<1x8x32xbf16> to vector<8x32xbf16>
    %137 = vector.shape_cast %134 : vector<8x32xbf16> to vector<1x8x32xbf16>
    tpu.vector_store %arg9[%c0_55, %c0_56, %c0_57], %137 {strides = array<i32>} : memref<1x8x32xbf16, #tpu.memory_space<vmem>>, vector<1x8x32xbf16>,
    return
  }
  func.func @transform_0(%arg0: i32) -> (i32, i32, i32) {
    %c0_i32 = arith.constant 0 : i32
    %c0_i32_0 = arith.constant 0 : i32
    %c0_i32_1 = arith.constant 0 : i32
    return %arg0, %c0_i32, %c0_i32_0 : i32, i32, i32
  }
  func.func @transform_1(%arg0: i32) -> (i32, i32, i32) {
    %c0_i32 = arith.constant 0 : i32
    %c0_i32_0 = arith.constant 0 : i32
    %c0_i32_1 = arith.constant 0 : i32
    return %arg0, %c0_i32, %c0_i32_0 : i32, i32, i32
  }
  func.func @transform_2(%arg0: i32) -> (i32, i32) {
    %c0_i32 = arith.constant 0 : i32
    %c0_i32_0 = arith.constant 0 : i32
    %c0_i32_1 = arith.constant 0 : i32
    return %c0_i32, %c0_i32_0 : i32, i32
  }
  func.func @transform_3(%arg0: i32) -> (i32, i32) {
    %c0_i32 = arith.constant 0 : i32
    %c0_i32_0 = arith.constant 0 : i32
    %c0_i32_1 = arith.constant 0 : i32
    return %c0_i32, %c0_i32_0 : i32, i32
  }
  func.func @transform_4(%arg0: i32) -> (i32, i32) {
    %c0_i32 = arith.constant 0 : i32
    %c0_i32_0 = arith.constant 0 : i32
    %c0_i32_1 = arith.constant 0 : i32
    return %c0_i32, %c0_i32_0 : i32, i32
  }
  func.func @transform_5(%arg0: i32) -> (i32, i32) {
    %c0_i32 = arith.constant 0 : i32
    %c0_i32_0 = arith.constant 0 : i32
    %c0_i32_1 = arith.constant 0 : i32
    return %c0_i32, %c0_i32_0 : i32, i32
  }
  func.func @transform_6(%arg0: i32) -> (i32, i32) {
    %c0_i32 = arith.constant 0 : i32
    %c0_i32_0 = arith.constant 0 : i32
    %c0_i32_1 = arith.constant 0 : i32
    return %c0_i32, %c0_i32_0 : i32, i32
  }
  func.func @transform_7(%arg0: i32) -> (i32, i32) {
    %c0_i32 = arith.constant 0 : i32
    %c0_i32_0 = arith.constant 0 : i32
    %c0_i32_1 = arith.constant 0 : i32
    return %c0_i32, %c0_i32_0 : i32, i32
  }
  func.func @transform_8(%arg0: i32) -> (i32, i32, i32) {
    %c0_i32 = arith.constant 0 : i32
    %c0_i32_0 = arith.constant 0 : i32
    %c0_i32_1 = arith.constant 0 : i32
    return %arg0, %c0_i32, %c0_i32_0 : i32, i32, i32
  }
}

</mosaic_0001>

<llo_original>
// kernel: transformer_forward.12
$region0: #{transformer_forward.12}
  #allocation0 [shape = 'u32[]', space=smem, size = 0x4, offset = 0x4, fixed_abs, tag = 'smem constant byte address 0x4 - core index']
  #allocation1 [shape = 'u32[72,128]{1,0:T(1,128)}', space=vmem, size = 0x9000, scoped, tag = 'internal scratch']
  %s0 = inlined_call_operand.vmem [shape: bf16[16,32], index: 0, kind: input, shape index: {}]
  %s1 = inlined_call_operand.vmem [shape: bf16[32,64], index: 1, kind: input, shape index: {}]
  %s2 = inlined_call_operand.vmem [shape: f32[1,64], index: 2, kind: input, shape index: {}]
  %s3 = inlined_call_operand.vmem [shape: bf16[64,32], index: 3, kind: input, shape index: {}]
  %s4 = inlined_call_operand.vmem [shape: f32[1,32], index: 4, kind: input, shape index: {}]
  %s5 = inlined_call_operand.vmem [shape: f32[1,32], index: 5, kind: input, shape index: {}]
  %s6 = inlined_call_operand.vmem [shape: f32[1,32], index: 6, kind: input, shape index: {}]
  %s7 = inlined_call_operand.vmem [shape: bf16[16,32], index: 7, kind: output, shape index: {}]
  %s8 = sld [smem:[#allocation0]]
  $region38: #{transformer_forward.12} parent=0
    _
  %s10 = ssub.s32 1, %s8
  %s11 = scalar_select 0, %s10, %s8
  // Predicated region
  $region2: #{transformer_forward.12} parent=0 // pred_check
    _
  $region3: #{transformer_forward.12} parent=0 // pred_check_branch
    %13 = sbr.rel (0) target = $region5
  $region4: #{transformer_forward.12} parent=0 // pred_region
    _
  $region5: #{transformer_forward.12} parent=0 // pred_fallthru
    _
  // Predicated region
  $region6: #{transformer_forward.12} parent=0 // pred_check
    _
  $region7: #{transformer_forward.12} parent=0 // pred_check_branch
    %15 = sbr.rel (0) target = $region9
  $region8: #{transformer_forward.12} parent=0 // pred_region
    _
  $region9: #{transformer_forward.12} parent=0 // pred_fallthru
    _
  // Predicated region
  $region10: #{transformer_forward.12} parent=0 // pred_check
    _
  $region11: #{transformer_forward.12} parent=0 // pred_check_branch
    %17 = sbr.rel (0) target = $region13
  $region12: #{transformer_forward.12} parent=0 // pred_region
    _
  $region13: #{transformer_forward.12} parent=0 // pred_fallthru
    _
  // Predicated region
  $region14: #{transformer_forward.12} parent=0 // pred_check
    _
  $region15: #{transformer_forward.12} parent=0 // pred_check_branch
    %19 = sbr.rel (0) target = $region17
  $region16: #{transformer_forward.12} parent=0 // pred_region
    _
  $region17: #{transformer_forward.12} parent=0 // pred_fallthru
    _
  // Predicated region
  $region18: #{transformer_forward.12} parent=0 // pred_check
    _
  $region19: #{transformer_forward.12} parent=0 // pred_check_branch
    %21 = sbr.rel (0) target = $region21
  $region20: #{transformer_forward.12} parent=0 // pred_region
    _
  $region21: #{transformer_forward.12} parent=0 // pred_fallthru
    _
  // Predicated region
  $region22: #{transformer_forward.12} parent=0 // pred_check
    _
  $region23: #{transformer_forward.12} parent=0 // pred_check_branch
    %23 = sbr.rel (0) target = $region25
  $region24: #{transformer_forward.12} parent=0 // pred_region
    _
  $region25: #{transformer_forward.12} parent=0 // pred_fallthru
    _
  // Predicated region
  $region26: #{transformer_forward.12} parent=0 // pred_check
    _
  $region27: #{transformer_forward.12} parent=0 // pred_check_branch
    %25 = sbr.rel (0) target = $region29
  $region28: #{transformer_forward.12} parent=0 // pred_region
    _
  $region29: #{transformer_forward.12} parent=0 // pred_fallthru
    _
  %v27 = vld [vmem:[%s0] sm:$0xf]
  %v28 = vld [vmem:[%s0 + $0x4] sm:$0xf]
  %v29 = vld [vmem:[%s1] sm:$0xf]
  %v30 = vld [vmem:[%s1 + $0x4] sm:$0xf]
  %v31 = vld [vmem:[%s1 + $0x8] sm:$0xf]
  %v32 = vld [vmem:[%s1 + $0xc] sm:$0xf]
  %v33 = vld [vmem:[%s2] sm:$0x1]
  %v35 = vperm.slane %v33, 0
  %v39 = vunpack.c.l.b16 %v27
  %v40 = vunpack.c.l.b16 %v28
  %v41 = vpack.c.b16 %v40, %v39
  %v46 = vunpack.c.l.b16 %v29
  %v47 = vunpack.c.l.b16 %v30
  %v48 = vunpack.c.l.b16 %v31
  %v49 = vunpack.c.l.b16 %v32
  %v50 = vpack.c.b16 %v47, %v46
  %v51 = vpack.c.b16 %v49, %v48
  %vm54 = vcmask 261120
  %v56 = vsel %vm54, %v41, 0
  %58 = vmatpush.bf16.msra.mxu0 0
  %59 = vmatpush.bf16.msra.mxu0 0
  %60 = vmatpush.bf16.msra.mxu0 0
  %61 = vmatpush.bf16.msra.mxu0 0
  %62 = vmatpush.bf16.msra.mxu0 0
  %63 = vmatpush.bf16.msra.mxu0 0
  %64 = vmatpush.bf16.msra.mxu0 %v51
  %65 = vmatpush.bf16.msra.mxu0 %v50
  %66 = vmatmul.bf16.gmra.mxu0 %v56
  %v67 = vpop.f32.mrf.mxu0
  %v68 = vadd.f32 %v35, %v67
  %v69 = vpop.f32.mrf.mxu0
  %v70 = vadd.f32 %v35, %v69
  %71 = vdwg.mxu0
  %v72 = vmax.f32 %v68, 0.0
  %v73 = vmax.f32 %v70, 0.0
  %v74 = vpack.c.bf16 %v73, %v72
  %v75 = vld [vmem:[%s3] sm:$0xf]
  %v76 = vld [vmem:[%s3 + $0x4] sm:$0xf]
  %v77 = vld [vmem:[%s3 + $0x8] sm:$0xf]
  %v78 = vld [vmem:[%s3 + $0xc] sm:$0xf]
  %v79 = vld [vmem:[%s3 + $0x10] sm:$0xf]
  %v80 = vld [vmem:[%s3 + $0x14] sm:$0xf]
  %v81 = vld [vmem:[%s3 + $0x18] sm:$0xf]
  %v82 = vld [vmem:[%s3 + $0x1c] sm:$0xf]
  %v83 = vld [vmem:[%s4] sm:$0x1]
  %v85 = vperm.slane %v83, 0
  %v95 = vunpack.c.l.b16 %v75
  %v96 = vunpack.c.l.b16 %v76
  %v97 = vunpack.c.l.b16 %v77
  %v98 = vunpack.c.l.b16 %v78
  %v99 = vunpack.c.l.b16 %v79
  %v100 = vunpack.c.l.b16 %v80
  %v101 = vunpack.c.l.b16 %v81
  %v102 = vunpack.c.l.b16 %v82
  %v103 = vpack.c.b16 %v96, %v95
  %v104 = vpack.c.b16 %v98, %v97
  %v105 = vpack.c.b16 %v100, %v99
  %v106 = vpack.c.b16 %v102, %v101
  %vm111 = vcmask 523264
  %v113 = vsel %vm111, %v74, 0
  %115 = vmatpush.bf16.msra.mxu0 0
  %116 = vmatpush.bf16.msra.mxu0 0
  %117 = vmatpush.bf16.msra.mxu0 0
  %118 = vmatpush.bf16.msra.mxu0 0
  %119 = vmatpush.bf16.msra.mxu0 %v106
  %120 = vmatpush.bf16.msra.mxu0 %v105
  %121 = vmatpush.bf16.msra.mxu0 %v104
  %122 = vmatpush.bf16.msra.mxu0 %v103
  %123 = vmatmul.bf16.gmra.mxu0 %v113
  %v124 = vpop.f32.mrf.mxu0
  %v125 = vadd.f32 %v85, %v124
  %v126 = vpop.f32.mrf.mxu0
  %v127 = vadd.f32 %v85, %v126
  %128 = vdwg.mxu0
  %v129 = vunpack.c.l.bf16 %v27
  %v130 = vunpack.c.l.bf16 %v28
  %v131 = vadd.f32 %v129, %v125
  %v132 = vadd.f32 %v130, %v127
  %v133 = vsel %vm54, %v131, 0.0
  %134 = vadd.xlane.f32.xlu0 %v133
  %v135 = vpop.xlane.xlu0 %134
  %v136 = vsel %vm54, %v132, 0.0
  %137 = vadd.xlane.f32.xlu0 %v136
  %v138 = vpop.xlane.xlu0 %137
  %v139 = vrcp.pop 32.0
  %v140 = vmul.f32 32.0, %v139
  %v141 = vsub.f32 1.0, %v140
  %v142 = vmul.f32 %v139, %v141
  %v143 = vadd.f32 %v139, %v142
  %vm144 = vweird.f32 %v139
  %v145 = vsel %vm144, %v139, %v143
  %v146 = vmul.f32 %v135, %v145
  %v147 = vmul.f32 %v138, %v145
  %v148 = vsub.f32 %v131, %v146
  %v149 = vsub.f32 %v132, %v147
  %v150 = vmul.f32 %v148, %v148
  %v151 = vmul.f32 %v149, %v149
  %v152 = vsel %vm54, %v150, 0.0
  %153 = vadd.xlane.f32.xlu0 %v152
  %v154 = vpop.xlane.xlu0 %153
  %v155 = vsel %vm54, %v151, 0.0
  %156 = vadd.xlane.f32.xlu0 %v155
  %v157 = vpop.xlane.xlu0 %156
  %v158 = vmul.f32 %v154, %v145
  %v159 = vmul.f32 %v157, %v145
  %v160 = vadd.f32 %v158, 1e-05
  %v161 = vadd.f32 %v159, 1e-05
  %v162 = vrsqrt.pop %v160
  %v163 = vmul.f32 %v162, %v160
  %v164 = vmul.f32 %v163, %v162
  %v165 = vmul.f32 0.5, %v164
  %v166 = vsub.f32 1.5, %v165
  %v167 = vmul.f32 %v162, %v166
  %vm168 = vweird.f32 %v160
  %vm169 = vweird.f32 %v162
  %vm170 = vmor %vm168, %vm169
  %v171 = vsel %vm170, %v162, %v167
  %v172 = vrsqrt.pop %v161
  %v173 = vmul.f32 %v172, %v161
  %v174 = vmul.f32 %v173, %v172
  %v175 = vmul.f32 0.5, %v174
  %v176 = vsub.f32 1.5, %v175
  %v177 = vmul.f32 %v172, %v176
  %vm178 = vweird.f32 %v161
  %vm179 = vweird.f32 %v172
  %vm180 = vmor %vm178, %vm179
  %v181 = vsel %vm180, %v172, %v177
  %v182 = vmul.f32 %v148, %v171
  %v183 = vmul.f32 %v149, %v181
  %v184 = vld [vmem:[%s5] sm:$0x1]
  %v186 = vperm.slane %v184, 0
  %v188 = vmul.f32 %v182, %v186
  %v189 = vmul.f32 %v183, %v186
  %v190 = vld [vmem:[%s6] sm:$0x1]
  %v192 = vperm.slane %v190, 0
  %v194 = vadd.f32 %v188, %v192
  %v195 = vadd.f32 %v189, %v192
  %v196 = vpack.c.bf16 %v194, %v194
  %v197 = vpack.c.bf16 %v195, %v195
  %vm198 = vcmask 257024
  %199 = vst.msk [vmem:[%s7] sm:$0xf] %vm198, %v196
  %200 = vst.msk [vmem:[%s7 + $0x4] sm:$0xf] %vm198, %v197
  // Predicated region
  $region30: #{transformer_forward.12} parent=0 // pred_check
    _
  $region31: #{transformer_forward.12} parent=0 // pred_check_branch
    %202 = sbr.rel (0) target = $region33
  $region32: #{transformer_forward.12} parent=0 // pred_region
    _
  $region33: #{transformer_forward.12} parent=0 // pred_fallthru
    _
  // Predicated region
  $region34: #{transformer_forward.12} parent=0 // pred_check
    _
  $region35: #{transformer_forward.12} parent=0 // pred_check_branch
    %204 = sbr.rel (0) target = $region37
  $region36: #{transformer_forward.12} parent=0 // pred_region
    _
  $region37: #{transformer_forward.12} parent=0 // pred_fallthru
    _

// kernel: transformer_forward.15
$region0: #{transformer_forward.15}
  #allocation0 [shape = 'u32[]', space=smem, size = 0x4, offset = 0x4, fixed_abs, tag = 'smem constant byte address 0x4 - core index']
  #allocation1 [shape = 'u32[72,128]{1,0:T(1,128)}', space=vmem, size = 0x9000, scoped, tag = 'internal scratch']
  #allocation2 [shape = 'f32[8,32]{1,0:T(8,128)}', space=vmem, size = 0x1000, scoped, tag = 'scratch operand']
  %s0 = inlined_call_operand.vmem [shape: bf16[2,8,32], index: 0, kind: input, shape index: {}]
  %s1 = inlined_call_operand.vmem [shape: f32[2,1,8], index: 1, kind: input, shape index: {}]
  %s2 = inlined_call_operand.vmem [shape: bf16[32,96], index: 2, kind: input, shape index: {}]
  %s3 = inlined_call_operand.vmem [shape: f32[1,96], index: 3, kind: input, shape index: {}]
  %s4 = inlined_call_operand.vmem [shape: bf16[32,32], index: 4, kind: input, shape index: {}]
  %s5 = inlined_call_operand.vmem [shape: f32[1,32], index: 5, kind: input, shape index: {}]
  %s6 = inlined_call_operand.vmem [shape: f32[1,32], index: 6, kind: input, shape index: {}]
  %s7 = inlined_call_operand.vmem [shape: f32[1,32], index: 7, kind: input, shape index: {}]
  %s8 = inlined_call_operand.vmem [shape: bf16[2,8,32], index: 8, kind: output, shape index: {}]
  %s9 = sld [smem:[#allocation0]]
  $region65: #{transformer_forward.15} parent=0
    _
  %s11 = ssub.s32 1, %s9
  %s12 = scalar_select 0, %s11, %s9
  loop: start=0, step=1, limit=4
  $region2: #{transformer_forward.15} parent=0 // loop_pre_header
    _
  $region3: #{transformer_forward.15} parent=0 // loop_header
    %s14 = sphi 0, %s18
    %p15 = scmp.ge.s32.totalorder %s14, 4
    %s24 = sphi 0, %s26
    %s27 = sphi 0, %s24
    %s28 = sphi 0, %s27
    %s44 = sphi 0, %s28
    %s50 = sphi 0, %s52
    %s53 = sphi 0, %s50
    %s54 = sphi 0, %s53
    %s70 = sphi 0, %s54
    %s74 = sphi 0, %s74
    %s76 = sphi 0, %s74
    %s77 = sphi 0, %s76
    %s91 = sphi 0, %s77
    %s95 = sphi 0, %s95
    %s97 = sphi 0, %s95
    %s98 = sphi 0, %s97
    %s112 = sphi 0, %s98
    %s116 = sphi 0, %s116
    %s118 = sphi 0, %s116
    %s119 = sphi 0, %s118
    %s133 = sphi 0, %s119
    %s137 = sphi 0, %s137
    %s139 = sphi 0, %s137
    %s140 = sphi 0, %s139
    %s154 = sphi 0, %s140
    %s158 = sphi 0, %s158
    %s160 = sphi 0, %s158
    %s161 = sphi 0, %s160
    %s175 = sphi 0, %s161
    %s179 = sphi 0, %s179
    %s181 = sphi 0, %s179
    %s182 = sphi 0, %s181
    %s196 = sphi 0, %s182
    %s202 = sphi 0, %s204
    %s205 = sphi 0, %s202
    %s206 = sphi 0, %s205
    %s222 = sphi 0, %s206
  $region4: #{transformer_forward.15} parent=0 // loop_header_branch
    %17 = sbr.rel (%p15) target = $region8
  $region5: #{transformer_forward.15} parent=0 // loop_body
    %s19 = ssub.s32 %s14, 1
    %s20 = ssub.s32 %s14, 2
    %s21 = sadd.s32 %s14, 1
    %s22 = ssub.s32 %s14, %s21
    %p23 = scmp.eq.s32.totalorder %s22, 0
    %s25 = sadd.s32 %s24, 1
    %s26 = scalar_select %p23, %s24, %s25
    %p29 = pneg %p23
    %p30 = scmp.eq.s32.totalorder %s14, 1
    %p31 = por %p29, %p30
    %p32 = scmp.ne.s32.totalorder %s24, %s27
    %p33 = scmp.eq.s32.totalorder %s14, 0
    %p34 = por %p32, %p33
    %p35 = scmp.ne.s32.totalorder %s24, %s27
    %p36 = scmp.eq.s32.totalorder %s19, 1
    %p37 = por %p35, %p36
    %p38 = scmp.ne.s32.totalorder %s27, %s28
    %p39 = scmp.eq.s32.totalorder %s19, 0
    %p40 = por %p38, %p39
    %p41 = scmp.ne.s32.totalorder %s27, %s28
    %p42 = scmp.eq.s32.totalorder %s20, 1
    %p43 = por %p41, %p42
    %p45 = scmp.ne.s32.totalorder %s28, %s44
    %p46 = scmp.eq.s32.totalorder %s20, 0
    %p47 = por %p45, %p46
    %s48 = ssub.s32 %s14, %s21
    %p49 = scmp.eq.s32.totalorder %s48, 0
    %s51 = sadd.s32 %s50, 1
    %s52 = scalar_select %p49, %s50, %s51
    %p55 = pneg %p49
    %p56 = scmp.eq.s32.totalorder %s14, 1
    %p57 = por %p55, %p56
    %p58 = scmp.ne.s32.totalorder %s50, %s53
    %p59 = scmp.eq.s32.totalorder %s14, 0
    %p60 = por %p58, %p59
    %p61 = scmp.ne.s32.totalorder %s50, %s53
    %p62 = scmp.eq.s32.totalorder %s19, 1
    %p63 = por %p61, %p62
    %p64 = scmp.ne.s32.totalorder %s53, %s54
    %p65 = scmp.eq.s32.totalorder %s19, 0
    %p66 = por %p64, %p65
    %p67 = scmp.ne.s32.totalorder %s53, %s54
    %p68 = scmp.eq.s32.totalorder %s20, 1
    %p69 = por %p67, %p68
    %p71 = scmp.ne.s32.totalorder %s54, %s70
    %p72 = scmp.eq.s32.totalorder %s20, 0
    %p73 = por %p71, %p72
    %s75 = sadd.s32 %s74, 1
    %p78 = scmp.eq.s32.totalorder %s14, 1
    %p79 = scmp.ne.s32.totalorder %s74, %s76
    %p80 = scmp.eq.s32.totalorder %s14, 0
    %p81 = por %p79, %p80
    %p82 = scmp.ne.s32.totalorder %s74, %s76
    %p83 = scmp.eq.s32.totalorder %s19, 1
    %p84 = por %p82, %p83
    %p85 = scmp.ne.s32.totalorder %s76, %s77
    %p86 = scmp.eq.s32.totalorder %s19, 0
    %p87 = por %p85, %p86
    %p88 = scmp.ne.s32.totalorder %s76, %s77
    %p89 = scmp.eq.s32.totalorder %s20, 1
    %p90 = por %p88, %p89
    %p92 = scmp.ne.s32.totalorder %s77, %s91
    %p93 = scmp.eq.s32.totalorder %s20, 0
    %p94 = por %p92, %p93
    %s96 = sadd.s32 %s95, 1
    %p99 = scmp.eq.s32.totalorder %s14, 1
    %p100 = scmp.ne.s32.totalorder %s95, %s97
    %p101 = scmp.eq.s32.totalorder %s14, 0
    %p102 = por %p100, %p101
    %p103 = scmp.ne.s32.totalorder %s95, %s97
    %p104 = scmp.eq.s32.totalorder %s19, 1
    %p105 = por %p103, %p104
    %p106 = scmp.ne.s32.totalorder %s97, %s98
    %p107 = scmp.eq.s32.totalorder %s19, 0
    %p108 = por %p106, %p107
    %p109 = scmp.ne.s32.totalorder %s97, %s98
    %p110 = scmp.eq.s32.totalorder %s20, 1
    %p111 = por %p109, %p110
    %p113 = scmp.ne.s32.totalorder %s98, %s112
    %p114 = scmp.eq.s32.totalorder %s20, 0
    %p115 = por %p113, %p114
    %s117 = sadd.s32 %s116, 1
    %p120 = scmp.eq.s32.totalorder %s14, 1
    %p121 = scmp.ne.s32.totalorder %s116, %s118
    %p122 = scmp.eq.s32.totalorder %s14, 0
    %p123 = por %p121, %p122
    %p124 = scmp.ne.s32.totalorder %s116, %s118
    %p125 = scmp.eq.s32.totalorder %s19, 1
    %p126 = por %p124, %p125
    %p127 = scmp.ne.s32.totalorder %s118, %s119
    %p128 = scmp.eq.s32.totalorder %s19, 0
    %p129 = por %p127, %p128
    %p130 = scmp.ne.s32.totalorder %s118, %s119
    %p131 = scmp.eq.s32.totalorder %s20, 1
    %p132 = por %p130, %p131
    %p134 = scmp.ne.s32.totalorder %s119, %s133
    %p135 = scmp.eq.s32.totalorder %s20, 0
    %p136 = por %p134, %p135
    %s138 = sadd.s32 %s137, 1
    %p141 = scmp.eq.s32.totalorder %s14, 1
    %p142 = scmp.ne.s32.totalorder %s137, %s139
    %p143 = scmp.eq.s32.totalorder %s14, 0
    %p144 = por %p142, %p143
    %p145 = scmp.ne.s32.totalorder %s137, %s139
    %p146 = scmp.eq.s32.totalorder %s19, 1
    %p147 = por %p145, %p146
    %p148 = scmp.ne.s32.totalorder %s139, %s140
    %p149 = scmp.eq.s32.totalorder %s19, 0
    %p150 = por %p148, %p149
    %p151 = scmp.ne.s32.totalorder %s139, %s140
    %p152 = scmp.eq.s32.totalorder %s20, 1
    %p153 = por %p151, %p152
    %p155 = scmp.ne.s32.totalorder %s140, %s154
    %p156 = scmp.eq.s32.totalorder %s20, 0
    %p157 = por %p155, %p156
    %s159 = sadd.s32 %s158, 1
    %p162 = scmp.eq.s32.totalorder %s14, 1
    %p163 = scmp.ne.s32.totalorder %s158, %s160
    %p164 = scmp.eq.s32.totalorder %s14, 0
    %p165 = por %p163, %p164
    %p166 = scmp.ne.s32.totalorder %s158, %s160
    %p167 = scmp.eq.s32.totalorder %s19, 1
    %p168 = por %p166, %p167
    %p169 = scmp.ne.s32.totalorder %s160, %s161
    %p170 = scmp.eq.s32.totalorder %s19, 0
    %p171 = por %p169, %p170
    %p172 = scmp.ne.s32.totalorder %s160, %s161
    %p173 = scmp.eq.s32.totalorder %s20, 1
    %p174 = por %p172, %p173
    %p176 = scmp.ne.s32.totalorder %s161, %s175
    %p177 = scmp.eq.s32.totalorder %s20, 0
    %p178 = por %p176, %p177
    %s180 = sadd.s32 %s179, 1
    %p183 = scmp.eq.s32.totalorder %s14, 1
    %p184 = scmp.ne.s32.totalorder %s179, %s181
    %p185 = scmp.eq.s32.totalorder %s14, 0
    %p186 = por %p184, %p185
    %p187 = scmp.ne.s32.totalorder %s179, %s181
    %p188 = scmp.eq.s32.totalorder %s19, 1
    %p189 = por %p187, %p188
    %p190 = scmp.ne.s32.totalorder %s181, %s182
    %p191 = scmp.eq.s32.totalorder %s19, 0
    %p192 = por %p190, %p191
    %p193 = scmp.ne.s32.totalorder %s181, %s182
    %p194 = scmp.eq.s32.totalorder %s20, 1
    %p195 = por %p193, %p194
    %p197 = scmp.ne.s32.totalorder %s182, %s196
    %p198 = scmp.eq.s32.totalorder %s20, 0
    %p199 = por %p197, %p198
    %s200 = ssub.s32 %s14, %s21
    %p201 = scmp.eq.s32.totalorder %s200, 0
    %s203 = sadd.s32 %s202, 1
    %s204 = scalar_select %p201, %s202, %s203
    %p207 = pneg %p201
    %p208 = scmp.eq.s32.totalorder %s14, 1
    %p209 = por %p207, %p208
    %p210 = scmp.ne.s32.totalorder %s202, %s205
    %p211 = scmp.eq.s32.totalorder %s14, 0
    %p212 = por %p210, %p211
    %p213 = scmp.ne.s32.totalorder %s202, %s205
    %p214 = scmp.eq.s32.totalorder %s19, 1
    %p215 = por %p213, %p214
    %p216 = scmp.ne.s32.totalorder %s205, %s206
    %p217 = scmp.eq.s32.totalorder %s19, 0
    %p218 = por %p216, %p217
    %p219 = scmp.ne.s32.totalorder %s205, %s206
    %p220 = scmp.eq.s32.totalorder %s20, 1
    %p221 = por %p219, %p220
    %p223 = scmp.ne.s32.totalorder %s206, %s222
    %p224 = scmp.eq.s32.totalorder %s20, 0
    %p225 = por %p223, %p224
    %p226 = scmp.le.s32.totalorder 1, %s14
    %p227 = scmp.lt.s32.totalorder %s14, 3
    %p228 = pnand %p226, %p227
    %p229 = pneg %p228
    // Predicated region
    $region9: #{transformer_forward.15} parent=5 // pred_check
      _
    $region10: #{transformer_forward.15} parent=5 // pred_check_branch
      %231 = sbr.rel (%p228) target = $region12
    $region11: #{transformer_forward.15} parent=5 // pred_region
      %s232 = ssub.s32 %s14, 1
      // Predicated region
      $region13: #{transformer_forward.15} parent=11 // pred_check
        %p233 = pneg %p87
      $region14: #{transformer_forward.15} parent=11 // pred_check_branch
        %235 = sbr.rel (%p233) target = $region16
      $region15: #{transformer_forward.15} parent=11 // pred_region
        _
      $region16: #{transformer_forward.15} parent=11 // pred_fallthru
        _
      // Predicated region
      $region17: #{transformer_forward.15} parent=11 // pred_check
        %p236 = pneg %p108
      $region18: #{transformer_forward.15} parent=11 // pred_check_branch
        %238 = sbr.rel (%p236) target = $region20
      $region19: #{transformer_forward.15} parent=11 // pred_region
        _
      $region20: #{transformer_forward.15} parent=11 // pred_fallthru
        _
      // Predicated region
      $region21: #{transformer_forward.15} parent=11 // pred_check
        %p239 = pneg %p129
      $region22: #{transformer_forward.15} parent=11 // pred_check_branch
        %241 = sbr.rel (%p239) target = $region24
      $region23: #{transformer_forward.15} parent=11 // pred_region
        _
      $region24: #{transformer_forward.15} parent=11 // pred_fallthru
        _
      // Predicated region
      $region25: #{transformer_forward.15} parent=11 // pred_check
        %p242 = pneg %p150
      $region26: #{transformer_forward.15} parent=11 // pred_check_branch
        %244 = sbr.rel (%p242) target = $region28
      $region27: #{transformer_forward.15} parent=11 // pred_region
        _
      $region28: #{transformer_forward.15} parent=11 // pred_fallthru
        _
      // Predicated region
      $region29: #{transformer_forward.15} parent=11 // pred_check
        %p245 = pneg %p171
      $region30: #{transformer_forward.15} parent=11 // pred_check_branch
        %247 = sbr.rel (%p245) target = $region32
      $region31: #{transformer_forward.15} parent=11 // pred_region
        _
      $region32: #{transformer_forward.15} parent=11 // pred_fallthru
        _
      // Predicated region
      $region33: #{transformer_forward.15} parent=11 // pred_check
        %p248 = pneg %p192
      $region34: #{transformer_forward.15} parent=11 // pred_check_branch
        %250 = sbr.rel (%p248) target = $region36
      $region35: #{transformer_forward.15} parent=11 // pred_region
        _
      $region36: #{transformer_forward.15} parent=11 // pred_fallthru
        _
    $region12: #{transformer_forward.15} parent=5 // pred_fallthru
      _
    %p251 = scmp.lt.s32.totalorder %s14, 2
    // Predicated region
    $region37: #{transformer_forward.15} parent=5 // pred_check
      %p252 = pneg %p251
    $region38: #{transformer_forward.15} parent=5 // pred_check_branch
      %254 = sbr.rel (%p252) target = $region40
    $region39: #{transformer_forward.15} parent=5 // pred_region
      // Predicated region
      $region41: #{transformer_forward.15} parent=39 // pred_check
        %p255 = pneg %p34
      $region42: #{transformer_forward.15} parent=39 // pred_check_branch
        %257 = sbr.rel (%p255) target = $region44
      $region43: #{transformer_forward.15} parent=39 // pred_region
        %p258 = scmp.lt.s32.totalorder %s14, 1
        %s259 = scalar_select %p258, %s14, 1
        %s260 = smul.addr %s259, 4
        %s261 = scalar_lea.vmem %s0, %s260
      $region44: #{transformer_forward.15} parent=39 // pred_fallthru
        _
      // Predicated region
      $region45: #{transformer_forward.15} parent=39 // pred_check
        %p262 = pneg %p60
      $region46: #{transformer_forward.15} parent=39 // pred_check_branch
        %264 = sbr.rel (%p262) target = $region48
      $region47: #{transformer_forward.15} parent=39 // pred_region
        %p265 = scmp.lt.s32.totalorder %s14, 1
        %s266 = scalar_select %p265, %s14, 1
        %s267 = scalar_lea.vmem %s1, %s266
      $region48: #{transformer_forward.15} parent=39 // pred_fallthru
        _
    $region40: #{transformer_forward.15} parent=5 // pred_fallthru
      _
    %p268 = scmp.le.s32.totalorder 1, %s14
    %p269 = scmp.lt.s32.totalorder %s14, 3
    %p270 = pnand %p268, %p269
    %p271 = pneg %p270
    // Predicated region
    $region49: #{transformer_forward.15} parent=5 // pred_check
      _
    $region50: #{transformer_forward.15} parent=5 // pred_check_branch
      %273 = sbr.rel (%p270) target = $region52
    $region51: #{transformer_forward.15} parent=5 // pred_region
      %s274 = ssub.s32 %s14, 1
      %p275 = scmp.lt.s32.totalorder %s19, 1
      %s276 = scalar_select %p275, %s19, 1
      %s277 = smul.addr %s276, 4
      %s278 = scalar_lea.vmem %s0, %s277
      %p279 = pneg %p40
      %p280 = pneg %p37
      %p281 = scmp.lt.s32.totalorder %s19, 1
      %s282 = scalar_select %p281, %s19, 1
      %s283 = scalar_lea.vmem %s1, %s282
      %p284 = pneg %p66
      %p285 = pneg %p63
      %p286 = pneg %p87
      %p287 = pneg %p84
      %p288 = pneg %p108
      %p289 = pneg %p105
      %p290 = pneg %p129
      %p291 = pneg %p126
      %p292 = pneg %p150
      %p293 = pneg %p147
      %p294 = pneg %p171
      %p295 = pneg %p168
      %p296 = pneg %p192
      %p297 = pneg %p189
      %p298 = pneg %p218
      %p299 = pneg %p215
      %p300 = scmp.lt.s32.totalorder %s19, 1
      %s301 = scalar_select %p300, %s19, 1
      %s302 = smul.addr %s301, 4
      %s303 = scalar_lea.vmem %s8, %s302
      %p304 = scmp.lt.s32.totalorder %s19, 1
      %s305 = scalar_select %p304, %s19, 1
      %s306 = smul.addr %s305, 4
      %s307 = scalar_lea.vmem %s0, %s306
      %p308 = scmp.lt.s32.totalorder %s19, 1
      %s309 = scalar_select %p308, %s19, 1
      %s310 = scalar_lea.vmem %s1, %s309
      %p311 = scmp.lt.s32.totalorder %s19, 1
      %s312 = scalar_select %p311, %s19, 1
      %s313 = smul.addr %s312, 4
      %s314 = scalar_lea.vmem %s8, %s313
      %v316 = vld [vmem:[%s307] sm:$0xf]
      %v317 = vld [vmem:[%s2] sm:$0xf]
      %v318 = vld [vmem:[%s2 + $0x4] sm:$0xf]
      %v319 = vld [vmem:[%s2 + $0x8] sm:$0xf]
      %v320 = vld [vmem:[%s2 + $0xc] sm:$0xf]
      %v321 = vld [vmem:[%s3] sm:$0x1]
      %v323 = vperm.slane %v321, 0
      %v329 = vunpack.c.l.b16 %v317
      %v330 = vunpack.c.l.b16 %v318
      %v331 = vunpack.c.l.b16 %v319
      %v332 = vunpack.c.l.b16 %v320
      %v333 = vpack.c.b16 %v330, %v329
      %v334 = vpack.c.b16 %v332, %v331
      %vm337 = vcmask 261120
      %v339 = vsel %vm337, %v316, 0
      %341 = vmatpush.bf16.msra.mxu0 0
      %342 = vmatpush.bf16.msra.mxu0 0
      %343 = vmatpush.bf16.msra.mxu0 0
      %344 = vmatpush.bf16.msra.mxu0 0
      %345 = vmatpush.bf16.msra.mxu0 0
      %346 = vmatpush.bf16.msra.mxu0 0
      %347 = vmatpush.bf16.msra.mxu0 %v334
      %348 = vmatpush.bf16.msra.mxu0 %v333
      %349 = vmatmul.bf16.gmra.mxu0 %v339
      %v350 = vpop.f32.mrf.mxu0
      %v351 = vadd.f32 %v323, %v350
      %v352 = vpop.f32.mrf.mxu0
      %353 = vdwg.mxu0
      %v354 = vld [vmem:[%s310] sm:$0x1]
      %vm355 = vcmp.gt.f32.partialorder %v354, 0.5
      %v356 = vsel %vm355, 1, 0
      %v357 = vperm.slane %v356, 0
      %vm358 = vcmp.eq.s32.totalorder %v357, 1
      %v359 = vlaneseq
      %v360 = vshrl.u32 %v359, 7
      %v361 = vlaneseq
      %v362 = vand.u32 %v361, 127
      %vm363 = vcmp.le.s32.totalorder %v362, %v360
      %vm364 = vmand %vm358, %vm363
      %v365 = vld [vmem:[%s4] sm:$0xf]
      %v366 = vld [vmem:[%s4 + $0x4] sm:$0xf]
      %v367 = vld [vmem:[%s4 + $0x8] sm:$0xf]
      %v368 = vld [vmem:[%s4 + $0xc] sm:$0xf]
      %v369 = vld [vmem:[%s5] sm:$0x1]
      %v370 = vunpack.c.l.bf16 %v316
      %v371 = vld [vmem:[%s6] sm:$0x1]
      %v372 = vld [vmem:[%s7] sm:$0x1]
      %v373 = vpack.c.bf16 %v351, %v351
      %v375 = vunpack.c.l.b16 %v373
      %v376 = vpack.c.b16 %v375, %v375
      %377 = vrot.lane.b32.xlu0 %v376, 96
      %v378 = vpop.permute.xlu0 %377
      %vm379 = vcmask 64512
      %v381 = vsel %vm379, %v373, 0
      %v384 = vsel %vm379, %v378, 0
      %386 = vmatpush.bf16.xpose.msra.mxu0 0
      %387 = vmatpush.bf16.xpose.msra.mxu0 0
      %388 = vmatpush.bf16.xpose.msra.mxu0 0
      %389 = vmatpush.bf16.xpose.msra.mxu0 0
      %390 = vmatpush.bf16.xpose.msra.mxu0 0
      %391 = vmatpush.bf16.xpose.msra.mxu0 0
      %392 = vmatpush.bf16.xpose.msra.mxu0 0
      %393 = vmatpush.bf16.xpose.msra.mxu0 %v384
      %394 = vmatmul.bf16.gmra.mxu0 %v381
      %v395 = vpop.f32.mrf.mxu0
      %v396 = vadd.f32 0.0, %v395
      %v397 = vpop.f32.mrf.mxu0
      %398 = vdwg.mxu0
      %v399 = vmul.f32 %v396, 0.35355338
      %v400 = vsel %vm364, %v399, -1e+09
      %v401 = vsel %vm379, %v400, -inf
      %402 = vmax.xlane.f32.xlu0 %v401
      %v403 = vpop.xlane.xlu0 %402
      %v404 = vsub.f32 %v400, %v403
      %v405 = vmul.f32 %v404, 1.442695
      %v406 = vpow.pop %v405
      %v407 = vsel %vm379, %v406, 0.0
      %408 = vadd.xlane.f32.xlu0 %v407
      %v409 = vpop.xlane.xlu0 %408
      %v410 = vrcp.pop %v409
      %v411 = vmul.f32 %v409, %v410
      %v412 = vsub.f32 1.0, %v411
      %v413 = vmul.f32 %v410, %v412
      %v414 = vadd.f32 %v410, %v413
      %vm415 = vweird.f32 %v409
      %vm416 = vweird.f32 %v410
      %vm417 = vmor %vm415, %vm416
      %v418 = vsel %vm417, %v410, %v414
      %v419 = vand.u32 2147483647, %v409
      %vm420 = vcmp.eq.f32.partialorder %v419, 8.507059e+37
      %v421 = vand.u32 %v409, 2147483648
      %v422 = vor.u32 1.1754944e-38, %v421
      %v423 = vsel %vm420, %v422, %v418
      %v424 = vmul.f32 %v406, %v423
      %v425 = vpack.c.bf16 %v424, %v424
      %426 = vrot.lane.b32.xlu0 %v376, 64
      %v427 = vpop.permute.xlu0 %426
      %v429 = vsel %vm379, %v425, 0
      %vm431 = vcmask 1043456
      %v433 = vsel %vm431, %v427, 0
      %435 = vmatpush.bf16.msra.mxu0 0
      %436 = vmatpush.bf16.msra.mxu0 0
      %437 = vmatpush.bf16.msra.mxu0 0
      %438 = vmatpush.bf16.msra.mxu0 0
      %439 = vmatpush.bf16.msra.mxu0 0
      %440 = vmatpush.bf16.msra.mxu0 0
      %441 = vmatpush.bf16.msra.mxu0 0
      %442 = vmatpush.bf16.msra.mxu0 %v433
      %443 = vmatmul.bf16.gmra.mxu0 %v429
      %v444 = vpop.f32.mrf.mxu0
      %v445 = vadd.f32 0.0, %v444
      %v446 = vpop.f32.mrf.mxu0
      %447 = vdwg.mxu0
      %448 = vst.msk [vmem:[#allocation2] sm:$0xff] %vm379, %v445
      %449 = vrot.lane.b32.xlu0 %v376, 120
      %v450 = vpop.permute.xlu0 %449
      %451 = vrot.lane.b32.xlu0 %v376, 88
      %v452 = vpop.permute.xlu0 %451
      %v454 = vsel %vm379, %v450, 0
      %v457 = vsel %vm379, %v452, 0
      %459 = vmatpush.bf16.xpose.msra.mxu0 0
      %460 = vmatpush.bf16.xpose.msra.mxu0 0
      %461 = vmatpush.bf16.xpose.msra.mxu0 0
      %462 = vmatpush.bf16.xpose.msra.mxu0 0
      %463 = vmatpush.bf16.xpose.msra.mxu0 0
      %464 = vmatpush.bf16.xpose.msra.mxu0 0
      %465 = vmatpush.bf16.xpose.msra.mxu0 0
      %466 = vmatpush.bf16.xpose.msra.mxu0 %v457
      %467 = vmatmul.bf16.gmra.mxu0 %v454
      %v468 = vpop.f32.mrf.mxu0
      %v469 = vadd.f32 0.0, %v468
      %v470 = vpop.f32.mrf.mxu0
      %471 = vdwg.mxu0
      %v472 = vmul.f32 %v469, 0.35355338
      %v473 = vsel %vm364, %v472, -1e+09
      %v474 = vsel %vm379, %v473, -inf
      %475 = vmax.xlane.f32.xlu0 %v474
      %v476 = vpop.xlane.xlu0 %475
      %v477 = vsub.f32 %v473, %v476
      %v478 = vmul.f32 %v477, 1.442695
      %v479 = vpow.pop %v478
      %v480 = vsel %vm379, %v479, 0.0
      %481 = vadd.xlane.f32.xlu0 %v480
      %v482 = vpop.xlane.xlu0 %481
      %v483 = vrcp.pop %v482
      %v484 = vmul.f32 %v482, %v483
      %v485 = vsub.f32 1.0, %v484
      %v486 = vmul.f32 %v483, %v485
      %v487 = vadd.f32 %v483, %v486
      %vm488 = vweird.f32 %v482
      %vm489 = vweird.f32 %v483
      %vm490 = vmor %vm488, %vm489
      %v491 = vsel %vm490, %v483, %v487
      %v492 = vand.u32 2147483647, %v482
      %vm493 = vcmp.eq.f32.partialorder %v492, 8.507059e+37
      %v494 = vand.u32 %v482, 2147483648
      %v495 = vor.u32 1.1754944e-38, %v494
      %v496 = vsel %vm493, %v495, %v491
      %v497 = vmul.f32 %v479, %v496
      %v498 = vpack.c.bf16 %v497, %v497
      %499 = vrot.lane.b32.xlu0 %v376, 56
      %v500 = vpop.permute.xlu0 %499
      %v502 = vsel %vm379, %v498, 0
      %v505 = vsel %vm431, %v500, 0
      %507 = vmatpush.bf16.msra.mxu0 0
      %508 = vmatpush.bf16.msra.mxu0 0
      %509 = vmatpush.bf16.msra.mxu0 0
      %510 = vmatpush.bf16.msra.mxu0 0
      %511 = vmatpush.bf16.msra.mxu0 0
      %512 = vmatpush.bf16.msra.mxu0 0
      %513 = vmatpush.bf16.msra.mxu0 0
      %514 = vmatpush.bf16.msra.mxu0 %v505
      %515 = vmatmul.bf16.gmra.mxu0 %v502
      %v516 = vpop.f32.mrf.mxu0
      %v517 = vadd.f32 0.0, %v516
      %v518 = vpop.f32.mrf.mxu0
      %519 = vdwg.mxu0
      %521 = vrot.lane.b32.xlu0 %v517, 8
      %v522 = vpop.permute.xlu0 %521
      %vm524 = vcmask 130112
      %525 = vst.msk [vmem:[#allocation2] sm:$0xff] %vm524, %v522
      %526 = vrot.lane.b32.xlu0 %v376, 112
      %v527 = vpop.permute.xlu0 %526
      %528 = vrot.lane.b32.xlu0 %v376, 80
      %v529 = vpop.permute.xlu0 %528
      %v531 = vsel %vm379, %v527, 0
      %v534 = vsel %vm379, %v529, 0
      %536 = vmatpush.bf16.xpose.msra.mxu0 0
      %537 = vmatpush.bf16.xpose.msra.mxu0 0
      %538 = vmatpush.bf16.xpose.msra.mxu0 0
      %539 = vmatpush.bf16.xpose.msra.mxu0 0
      %540 = vmatpush.bf16.xpose.msra.mxu0 0
      %541 = vmatpush.bf16.xpose.msra.mxu0 0
      %542 = vmatpush.bf16.xpose.msra.mxu0 0
      %543 = vmatpush.bf16.xpose.msra.mxu0 %v534
      %544 = vmatmul.bf16.gmra.mxu0 %v531
      %v545 = vpop.f32.mrf.mxu0
      %v546 = vadd.f32 0.0, %v545
      %v547 = vpop.f32.mrf.mxu0
      %548 = vdwg.mxu0
      %v549 = vmul.f32 %v546, 0.35355338
      %v550 = vsel %vm364, %v549, -1e+09
      %v551 = vsel %vm379, %v550, -inf
      %552 = vmax.xlane.f32.xlu0 %v551
      %v553 = vpop.xlane.xlu0 %552
      %v554 = vsub.f32 %v550, %v553
      %v555 = vmul.f32 %v554, 1.442695
      %v556 = vpow.pop %v555
      %v557 = vsel %vm379, %v556, 0.0
      %558 = vadd.xlane.f32.xlu0 %v557
      %v559 = vpop.xlane.xlu0 %558
      %v560 = vrcp.pop %v559
      %v561 = vmul.f32 %v559, %v560
      %v562 = vsub.f32 1.0, %v561
      %v563 = vmul.f32 %v560, %v562
      %v564 = vadd.f32 %v560, %v563
      %vm565 = vweird.f32 %v559
      %vm566 = vweird.f32 %v560
      %vm567 = vmor %vm565, %vm566
      %v568 = vsel %vm567, %v560, %v564
      %v569 = vand.u32 2147483647, %v559
      %vm570 = vcmp.eq.f32.partialorder %v569, 8.507059e+37
      %v571 = vand.u32 %v559, 2147483648
      %v572 = vor.u32 1.1754944e-38, %v571
      %v573 = vsel %vm570, %v572, %v568
      %v574 = vmul.f32 %v556, %v573
      %v575 = vpack.c.bf16 %v574, %v574
      %576 = vrot.lane.b32.xlu0 %v376, 48
      %v577 = vpop.permute.xlu0 %576
      %v579 = vsel %vm379, %v575, 0
      %v582 = vsel %vm431, %v577, 0
      %584 = vmatpush.bf16.msra.mxu0 0
      %585 = vmatpush.bf16.msra.mxu0 0
      %586 = vmatpush.bf16.msra.mxu0 0
      %587 = vmatpush.bf16.msra.mxu0 0
      %588 = vmatpush.bf16.msra.mxu0 0
      %589 = vmatpush.bf16.msra.mxu0 0
      %590 = vmatpush.bf16.msra.mxu0 0
      %591 = vmatpush.bf16.msra.mxu0 %v582
      %592 = vmatmul.bf16.gmra.mxu0 %v579
      %v593 = vpop.f32.mrf.mxu0
      %v594 = vadd.f32 0.0, %v593
      %v595 = vpop.f32.mrf.mxu0
      %596 = vdwg.mxu0
      %598 = vrot.lane.b32.xlu0 %v594, 16
      %v599 = vpop.permute.xlu0 %598
      %vm601 = vcmask 195712
      %602 = vst.msk [vmem:[#allocation2] sm:$0xff] %vm601, %v599
      %603 = vrot.lane.b32.xlu0 %v376, 104
      %v604 = vpop.permute.xlu0 %603
      %605 = vrot.lane.b32.xlu0 %v376, 72
      %v606 = vpop.permute.xlu0 %605
      %v608 = vsel %vm379, %v604, 0
      %v611 = vsel %vm379, %v606, 0
      %613 = vmatpush.bf16.xpose.msra.mxu0 0
      %614 = vmatpush.bf16.xpose.msra.mxu0 0
      %615 = vmatpush.bf16.xpose.msra.mxu0 0
      %616 = vmatpush.bf16.xpose.msra.mxu0 0
      %617 = vmatpush.bf16.xpose.msra.mxu0 0
      %618 = vmatpush.bf16.xpose.msra.mxu0 0
      %619 = vmatpush.bf16.xpose.msra.mxu0 0
      %620 = vmatpush.bf16.xpose.msra.mxu0 %v611
      %621 = vmatmul.bf16.gmra.mxu0 %v608
      %v622 = vpop.f32.mrf.mxu0
      %v623 = vadd.f32 0.0, %v622
      %v624 = vpop.f32.mrf.mxu0
      %625 = vdwg.mxu0
      %v626 = vmul.f32 %v623, 0.35355338
      %v627 = vsel %vm364, %v626, -1e+09
      %v628 = vsel %vm379, %v627, -inf
      %629 = vmax.xlane.f32.xlu0 %v628
      %v630 = vpop.xlane.xlu0 %629
      %v631 = vsub.f32 %v627, %v630
      %v632 = vmul.f32 %v631, 1.442695
      %v633 = vpow.pop %v632
      %v634 = vsel %vm379, %v633, 0.0
      %635 = vadd.xlane.f32.xlu0 %v634
      %v636 = vpop.xlane.xlu0 %635
      %v637 = vrcp.pop %v636
      %v638 = vmul.f32 %v636, %v637
      %v639 = vsub.f32 1.0, %v638
      %v640 = vmul.f32 %v637, %v639
      %v641 = vadd.f32 %v637, %v640
      %vm642 = vweird.f32 %v636
      %vm643 = vweird.f32 %v637
      %vm644 = vmor %vm642, %vm643
      %v645 = vsel %vm644, %v637, %v641
      %v646 = vand.u32 2147483647, %v636
      %vm647 = vcmp.eq.f32.partialorder %v646, 8.507059e+37
      %v648 = vand.u32 %v636, 2147483648
      %v649 = vor.u32 1.1754944e-38, %v648
      %v650 = vsel %vm647, %v649, %v645
      %v651 = vmul.f32 %v633, %v650
      %v652 = vpack.c.bf16 %v651, %v651
      %653 = vrot.lane.b32.xlu0 %v376, 40
      %v654 = vpop.permute.xlu0 %653
      %v656 = vsel %vm379, %v652, 0
      %v659 = vsel %vm431, %v654, 0
      %661 = vmatpush.bf16.msra.mxu0 0
      %662 = vmatpush.bf16.msra.mxu0 0
      %663 = vmatpush.bf16.msra.mxu0 0
      %664 = vmatpush.bf16.msra.mxu0 0
      %665 = vmatpush.bf16.msra.mxu0 0
      %666 = vmatpush.bf16.msra.mxu0 0
      %667 = vmatpush.bf16.msra.mxu0 0
      %668 = vmatpush.bf16.msra.mxu0 %v659
      %669 = vmatmul.bf16.gmra.mxu0 %v656
      %v670 = vpop.f32.mrf.mxu0
      %v671 = vadd.f32 0.0, %v670
      %v672 = vpop.f32.mrf.mxu0
      %673 = vdwg.mxu0
      %675 = vrot.lane.b32.xlu0 %v671, 24
      %v676 = vpop.permute.xlu0 %675
      %vm678 = vcmask 261312
      %679 = vst.msk [vmem:[#allocation2] sm:$0xff] %vm678, %v676
      %v680 = vld [vmem:[#allocation2] sm:$0xff]
      %v681 = vpack.c.bf16 %v680, %v680
      %v683 = vperm.slane %v369, 0
      %v689 = vunpack.c.l.b16 %v365
      %v690 = vunpack.c.l.b16 %v366
      %v691 = vunpack.c.l.b16 %v367
      %v692 = vunpack.c.l.b16 %v368
      %v693 = vpack.c.b16 %v690, %v689
      %v694 = vpack.c.b16 %v692, %v691
      %v698 = vsel %vm337, %v681, 0
      %700 = vmatpush.bf16.msra.mxu0 0
      %701 = vmatpush.bf16.msra.mxu0 0
      %702 = vmatpush.bf16.msra.mxu0 0
      %703 = vmatpush.bf16.msra.mxu0 0
      %704 = vmatpush.bf16.msra.mxu0 0
      %705 = vmatpush.bf16.msra.mxu0 0
      %706 = vmatpush.bf16.msra.mxu0 %v694
      %707 = vmatpush.bf16.msra.mxu0 %v693
      %708 = vmatmul.bf16.gmra.mxu0 %v698
      %v709 = vpop.f32.mrf.mxu0
      %v710 = vadd.f32 %v683, %v709
      %v711 = vpop.f32.mrf.mxu0
      %712 = vdwg.mxu0
      %v713 = vadd.f32 %v370, %v710
      %v714 = vsel %vm337, %v713, 0.0
      %715 = vadd.xlane.f32.xlu0 %v714
      %v716 = vpop.xlane.xlu0 %715
      %v717 = vrcp.pop 32.0
      %v718 = vmul.f32 32.0, %v717
      %v719 = vsub.f32 1.0, %v718
      %v720 = vmul.f32 %v717, %v719
      %v721 = vadd.f32 %v717, %v720
      %vm722 = vweird.f32 %v717
      %v723 = vsel %vm722, %v717, %v721
      %v724 = vmul.f32 %v716, %v723
      %v725 = vsub.f32 %v713, %v724
      %v726 = vmul.f32 %v725, %v725
      %v727 = vsel %vm337, %v726, 0.0
      %728 = vadd.xlane.f32.xlu0 %v727
      %v729 = vpop.xlane.xlu0 %728
      %v730 = vmul.f32 %v729, %v723
      %v731 = vadd.f32 %v730, 1e-05
      %v732 = vrsqrt.pop %v731
      %v733 = vmul.f32 %v732, %v731
      %v734 = vmul.f32 %v733, %v732
      %v735 = vmul.f32 0.5, %v734
      %v736 = vsub.f32 1.5, %v735
      %v737 = vmul.f32 %v732, %v736
      %vm738 = vweird.f32 %v731
      %vm739 = vweird.f32 %v732
      %vm740 = vmor %vm738, %vm739
      %v741 = vsel %vm740, %v732, %v737
      %v742 = vmul.f32 %v725, %v741
      %v744 = vperm.slane %v371, 0
      %v746 = vmul.f32 %v742, %v744
      %v748 = vperm.slane %v372, 0
      %v750 = vadd.f32 %v746, %v748
      %v751 = vpack.c.bf16 %v750, %v750
      %vm752 = vcmask 257024
      %753 = vst.msk [vmem:[%s314] sm:$0xf] %vm752, %v751
      %p754 = scmp.lt.s32.totalorder %s19, 1
      %s755 = scalar_select %p754, %s19, 1
      %s756 = smul.addr %s755, 4
      %s757 = scalar_lea.vmem %s8, %s756
      // Predicated region
      $region53: #{transformer_forward.15} parent=51 // pred_check
        %p758 = pneg %p215
      $region54: #{transformer_forward.15} parent=51 // pred_check_branch
        %760 = sbr.rel (%p758) target = $region56
      $region55: #{transformer_forward.15} parent=51 // pred_region
        _
      $region56: #{transformer_forward.15} parent=51 // pred_fallthru
        _
    $region52: #{transformer_forward.15} parent=5 // pred_fallthru
      _
    %p761 = scmp.le.s32.totalorder 2, %s14
    // Predicated region
    $region57: #{transformer_forward.15} parent=5 // pred_check
      %p762 = pneg %p761
    $region58: #{transformer_forward.15} parent=5 // pred_check_branch
      %764 = sbr.rel (%p762) target = $region60
    $region59: #{transformer_forward.15} parent=5 // pred_region
      %s765 = ssub.s32 %s14, 2
      // Predicated region
      $region61: #{transformer_forward.15} parent=59 // pred_check
        %p766 = pneg %p221
      $region62: #{transformer_forward.15} parent=59 // pred_check_branch
        %768 = sbr.rel (%p766) target = $region64
      $region63: #{transformer_forward.15} parent=59 // pred_region
        %p769 = scmp.lt.s32.totalorder %s20, 1
        %s770 = scalar_select %p769, %s20, 1
        %s771 = smul.addr %s770, 4
        %s772 = scalar_lea.vmem %s8, %s771
      $region64: #{transformer_forward.15} parent=59 // pred_fallthru
        _
    $region60: #{transformer_forward.15} parent=5 // pred_fallthru
      _
  $region6: #{transformer_forward.15} parent=0 // loop_footer
    %s18 = sadd.s32 1, %s14
  $region7: #{transformer_forward.15} parent=0 // loop_footer_branch
    %13 = sbr.rel target = $region3
  $region8: #{transformer_forward.15} parent=0 // loop_exit
    _

// kernel: transformer_forward.11
$region0: #{transformer_forward.11}
  #allocation0 [shape = 'u32[]', space=smem, size = 0x4, offset = 0x4, fixed_abs, tag = 'smem constant byte address 0x4 - core index']
  #allocation1 [shape = 'u32[72,128]{1,0:T(1,128)}', space=vmem, size = 0x9000, scoped, tag = 'internal scratch']
  #allocation2 [shape = 'f32[8,32]{1,0:T(8,128)}', space=vmem, size = 0x1000, scoped, tag = 'scratch operand']
  %s0 = inlined_call_operand.vmem [shape: bf16[2,8,32], index: 0, kind: input, shape index: {}]
  %s1 = inlined_call_operand.vmem [shape: f32[2,1,8], index: 1, kind: input, shape index: {}]
  %s2 = inlined_call_operand.vmem [shape: bf16[32,96], index: 2, kind: input, shape index: {}]
  %s3 = inlined_call_operand.vmem [shape: f32[1,96], index: 3, kind: input, shape index: {}]
  %s4 = inlined_call_operand.vmem [shape: bf16[32,32], index: 4, kind: input, shape index: {}]
  %s5 = inlined_call_operand.vmem [shape: f32[1,32], index: 5, kind: input, shape index: {}]
  %s6 = inlined_call_operand.vmem [shape: f32[1,32], index: 6, kind: input, shape index: {}]
  %s7 = inlined_call_operand.vmem [shape: f32[1,32], index: 7, kind: input, shape index: {}]
  %s8 = inlined_call_operand.vmem [shape: bf16[2,8,32], index: 8, kind: output, shape index: {}]
  %s9 = sld [smem:[#allocation0]]
  $region65: #{transformer_forward.11} parent=0
    _
  %s11 = ssub.s32 1, %s9
  %s12 = scalar_select 0, %s11, %s9
  loop: start=0, step=1, limit=4
  $region2: #{transformer_forward.11} parent=0 // loop_pre_header
    _
  $region3: #{transformer_forward.11} parent=0 // loop_header
    %s14 = sphi 0, %s18
    %p15 = scmp.ge.s32.totalorder %s14, 4
    %s24 = sphi 0, %s26
    %s27 = sphi 0, %s24
    %s28 = sphi 0, %s27
    %s44 = sphi 0, %s28
    %s50 = sphi 0, %s52
    %s53 = sphi 0, %s50
    %s54 = sphi 0, %s53
    %s70 = sphi 0, %s54
    %s74 = sphi 0, %s74
    %s76 = sphi 0, %s74
    %s77 = sphi 0, %s76
    %s91 = sphi 0, %s77
    %s95 = sphi 0, %s95
    %s97 = sphi 0, %s95
    %s98 = sphi 0, %s97
    %s112 = sphi 0, %s98
    %s116 = sphi 0, %s116
    %s118 = sphi 0, %s116
    %s119 = sphi 0, %s118
    %s133 = sphi 0, %s119
    %s137 = sphi 0, %s137
    %s139 = sphi 0, %s137
    %s140 = sphi 0, %s139
    %s154 = sphi 0, %s140
    %s158 = sphi 0, %s158
    %s160 = sphi 0, %s158
    %s161 = sphi 0, %s160
    %s175 = sphi 0, %s161
    %s179 = sphi 0, %s179
    %s181 = sphi 0, %s179
    %s182 = sphi 0, %s181
    %s196 = sphi 0, %s182
    %s202 = sphi 0, %s204
    %s205 = sphi 0, %s202
    %s206 = sphi 0, %s205
    %s222 = sphi 0, %s206
  $region4: #{transformer_forward.11} parent=0 // loop_header_branch
    %17 = sbr.rel (%p15) target = $region8
  $region5: #{transformer_forward.11} parent=0 // loop_body
    %s19 = ssub.s32 %s14, 1
    %s20 = ssub.s32 %s14, 2
    %s21 = sadd.s32 %s14, 1
    %s22 = ssub.s32 %s14, %s21
    %p23 = scmp.eq.s32.totalorder %s22, 0
    %s25 = sadd.s32 %s24, 1
    %s26 = scalar_select %p23, %s24, %s25
    %p29 = pneg %p23
    %p30 = scmp.eq.s32.totalorder %s14, 1
    %p31 = por %p29, %p30
    %p32 = scmp.ne.s32.totalorder %s24, %s27
    %p33 = scmp.eq.s32.totalorder %s14, 0
    %p34 = por %p32, %p33
    %p35 = scmp.ne.s32.totalorder %s24, %s27
    %p36 = scmp.eq.s32.totalorder %s19, 1
    %p37 = por %p35, %p36
    %p38 = scmp.ne.s32.totalorder %s27, %s28
    %p39 = scmp.eq.s32.totalorder %s19, 0
    %p40 = por %p38, %p39
    %p41 = scmp.ne.s32.totalorder %s27, %s28
    %p42 = scmp.eq.s32.totalorder %s20, 1
    %p43 = por %p41, %p42
    %p45 = scmp.ne.s32.totalorder %s28, %s44
    %p46 = scmp.eq.s32.totalorder %s20, 0
    %p47 = por %p45, %p46
    %s48 = ssub.s32 %s14, %s21
    %p49 = scmp.eq.s32.totalorder %s48, 0
    %s51 = sadd.s32 %s50, 1
    %s52 = scalar_select %p49, %s50, %s51
    %p55 = pneg %p49
    %p56 = scmp.eq.s32.totalorder %s14, 1
    %p57 = por %p55, %p56
    %p58 = scmp.ne.s32.totalorder %s50, %s53
    %p59 = scmp.eq.s32.totalorder %s14, 0
    %p60 = por %p58, %p59
    %p61 = scmp.ne.s32.totalorder %s50, %s53
    %p62 = scmp.eq.s32.totalorder %s19, 1
    %p63 = por %p61, %p62
    %p64 = scmp.ne.s32.totalorder %s53, %s54
    %p65 = scmp.eq.s32.totalorder %s19, 0
    %p66 = por %p64, %p65
    %p67 = scmp.ne.s32.totalorder %s53, %s54
    %p68 = scmp.eq.s32.totalorder %s20, 1
    %p69 = por %p67, %p68
    %p71 = scmp.ne.s32.totalorder %s54, %s70
    %p72 = scmp.eq.s32.totalorder %s20, 0
    %p73 = por %p71, %p72
    %s75 = sadd.s32 %s74, 1
    %p78 = scmp.eq.s32.totalorder %s14, 1
    %p79 = scmp.ne.s32.totalorder %s74, %s76
    %p80 = scmp.eq.s32.totalorder %s14, 0
    %p81 = por %p79, %p80
    %p82 = scmp.ne.s32.totalorder %s74, %s76
    %p83 = scmp.eq.s32.totalorder %s19, 1
    %p84 = por %p82, %p83
    %p85 = scmp.ne.s32.totalorder %s76, %s77
    %p86 = scmp.eq.s32.totalorder %s19, 0
    %p87 = por %p85, %p86
    %p88 = scmp.ne.s32.totalorder %s76, %s77
    %p89 = scmp.eq.s32.totalorder %s20, 1
    %p90 = por %p88, %p89
    %p92 = scmp.ne.s32.totalorder %s77, %s91
    %p93 = scmp.eq.s32.totalorder %s20, 0
    %p94 = por %p92, %p93
    %s96 = sadd.s32 %s95, 1
    %p99 = scmp.eq.s32.totalorder %s14, 1
    %p100 = scmp.ne.s32.totalorder %s95, %s97
    %p101 = scmp.eq.s32.totalorder %s14, 0
    %p102 = por %p100, %p101
    %p103 = scmp.ne.s32.totalorder %s95, %s97
    %p104 = scmp.eq.s32.totalorder %s19, 1
    %p105 = por %p103, %p104
    %p106 = scmp.ne.s32.totalorder %s97, %s98
    %p107 = scmp.eq.s32.totalorder %s19, 0
    %p108 = por %p106, %p107
    %p109 = scmp.ne.s32.totalorder %s97, %s98
    %p110 = scmp.eq.s32.totalorder %s20, 1
    %p111 = por %p109, %p110
    %p113 = scmp.ne.s32.totalorder %s98, %s112
    %p114 = scmp.eq.s32.totalorder %s20, 0
    %p115 = por %p113, %p114
    %s117 = sadd.s32 %s116, 1
    %p120 = scmp.eq.s32.totalorder %s14, 1
    %p121 = scmp.ne.s32.totalorder %s116, %s118
    %p122 = scmp.eq.s32.totalorder %s14, 0
    %p123 = por %p121, %p122
    %p124 = scmp.ne.s32.totalorder %s116, %s118
    %p125 = scmp.eq.s32.totalorder %s19, 1
    %p126 = por %p124, %p125
    %p127 = scmp.ne.s32.totalorder %s118, %s119
    %p128 = scmp.eq.s32.totalorder %s19, 0
    %p129 = por %p127, %p128
    %p130 = scmp.ne.s32.totalorder %s118, %s119
    %p131 = scmp.eq.s32.totalorder %s20, 1
    %p132 = por %p130, %p131
    %p134 = scmp.ne.s32.totalorder %s119, %s133
    %p135 = scmp.eq.s32.totalorder %s20, 0
    %p136 = por %p134, %p135
    %s138 = sadd.s32 %s137, 1
    %p141 = scmp.eq.s32.totalorder %s14, 1
    %p142 = scmp.ne.s32.totalorder %s137, %s139
    %p143 = scmp.eq.s32.totalorder %s14, 0
    %p144 = por %p142, %p143
    %p145 = scmp.ne.s32.totalorder %s137, %s139
    %p146 = scmp.eq.s32.totalorder %s19, 1
    %p147 = por %p145, %p146
    %p148 = scmp.ne.s32.totalorder %s139, %s140
    %p149 = scmp.eq.s32.totalorder %s19, 0
    %p150 = por %p148, %p149
    %p151 = scmp.ne.s32.totalorder %s139, %s140
    %p152 = scmp.eq.s32.totalorder %s20, 1
    %p153 = por %p151, %p152
    %p155 = scmp.ne.s32.totalorder %s140, %s154
    %p156 = scmp.eq.s32.totalorder %s20, 0
    %p157 = por %p155, %p156
    %s159 = sadd.s32 %s158, 1
    %p162 = scmp.eq.s32.totalorder %s14, 1
    %p163 = scmp.ne.s32.totalorder %s158, %s160
    %p164 = scmp.eq.s32.totalorder %s14, 0
    %p165 = por %p163, %p164
    %p166 = scmp.ne.s32.totalorder %s158, %s160
    %p167 = scmp.eq.s32.totalorder %s19, 1
    %p168 = por %p166, %p167
    %p169 = scmp.ne.s32.totalorder %s160, %s161
    %p170 = scmp.eq.s32.totalorder %s19, 0
    %p171 = por %p169, %p170
    %p172 = scmp.ne.s32.totalorder %s160, %s161
    %p173 = scmp.eq.s32.totalorder %s20, 1
    %p174 = por %p172, %p173
    %p176 = scmp.ne.s32.totalorder %s161, %s175
    %p177 = scmp.eq.s32.totalorder %s20, 0
    %p178 = por %p176, %p177
    %s180 = sadd.s32 %s179, 1
    %p183 = scmp.eq.s32.totalorder %s14, 1
    %p184 = scmp.ne.s32.totalorder %s179, %s181
    %p185 = scmp.eq.s32.totalorder %s14, 0
    %p186 = por %p184, %p185
    %p187 = scmp.ne.s32.totalorder %s179, %s181
    %p188 = scmp.eq.s32.totalorder %s19, 1
    %p189 = por %p187, %p188
    %p190 = scmp.ne.s32.totalorder %s181, %s182
    %p191 = scmp.eq.s32.totalorder %s19, 0
    %p192 = por %p190, %p191
    %p193 = scmp.ne.s32.totalorder %s181, %s182
    %p194 = scmp.eq.s32.totalorder %s20, 1
    %p195 = por %p193, %p194
    %p197 = scmp.ne.s32.totalorder %s182, %s196
    %p198 = scmp.eq.s32.totalorder %s20, 0
    %p199 = por %p197, %p198
    %s200 = ssub.s32 %s14, %s21
    %p201 = scmp.eq.s32.totalorder %s200, 0
    %s203 = sadd.s32 %s202, 1
    %s204 = scalar_select %p201, %s202, %s203
    %p207 = pneg %p201
    %p208 = scmp.eq.s32.totalorder %s14, 1
    %p209 = por %p207, %p208
    %p210 = scmp.ne.s32.totalorder %s202, %s205
    %p211 = scmp.eq.s32.totalorder %s14, 0
    %p212 = por %p210, %p211
    %p213 = scmp.ne.s32.totalorder %s202, %s205
    %p214 = scmp.eq.s32.totalorder %s19, 1
    %p215 = por %p213, %p214
    %p216 = scmp.ne.s32.totalorder %s205, %s206
    %p217 = scmp.eq.s32.totalorder %s19, 0
    %p218 = por %p216, %p217
    %p219 = scmp.ne.s32.totalorder %s205, %s206
    %p220 = scmp.eq.s32.totalorder %s20, 1
    %p221 = por %p219, %p220
    %p223 = scmp.ne.s32.totalorder %s206, %s222
    %p224 = scmp.eq.s32.totalorder %s20, 0
    %p225 = por %p223, %p224
    %p226 = scmp.le.s32.totalorder 1, %s14
    %p227 = scmp.lt.s32.totalorder %s14, 3
    %p228 = pnand %p226, %p227
    %p229 = pneg %p228
    // Predicated region
    $region9: #{transformer_forward.11} parent=5 // pred_check
      _
    $region10: #{transformer_forward.11} parent=5 // pred_check_branch
      %231 = sbr.rel (%p228) target = $region12
    $region11: #{transformer_forward.11} parent=5 // pred_region
      %s232 = ssub.s32 %s14, 1
      // Predicated region
      $region13: #{transformer_forward.11} parent=11 // pred_check
        %p233 = pneg %p87
      $region14: #{transformer_forward.11} parent=11 // pred_check_branch
        %235 = sbr.rel (%p233) target = $region16
      $region15: #{transformer_forward.11} parent=11 // pred_region
        _
      $region16: #{transformer_forward.11} parent=11 // pred_fallthru
        _
      // Predicated region
      $region17: #{transformer_forward.11} parent=11 // pred_check
        %p236 = pneg %p108
      $region18: #{transformer_forward.11} parent=11 // pred_check_branch
        %238 = sbr.rel (%p236) target = $region20
      $region19: #{transformer_forward.11} parent=11 // pred_region
        _
      $region20: #{transformer_forward.11} parent=11 // pred_fallthru
        _
      // Predicated region
      $region21: #{transformer_forward.11} parent=11 // pred_check
        %p239 = pneg %p129
      $region22: #{transformer_forward.11} parent=11 // pred_check_branch
        %241 = sbr.rel (%p239) target = $region24
      $region23: #{transformer_forward.11} parent=11 // pred_region
        _
      $region24: #{transformer_forward.11} parent=11 // pred_fallthru
        _
      // Predicated region
      $region25: #{transformer_forward.11} parent=11 // pred_check
        %p242 = pneg %p150
      $region26: #{transformer_forward.11} parent=11 // pred_check_branch
        %244 = sbr.rel (%p242) target = $region28
      $region27: #{transformer_forward.11} parent=11 // pred_region
        _
      $region28: #{transformer_forward.11} parent=11 // pred_fallthru
        _
      // Predicated region
      $region29: #{transformer_forward.11} parent=11 // pred_check
        %p245 = pneg %p171
      $region30: #{transformer_forward.11} parent=11 // pred_check_branch
        %247 = sbr.rel (%p245) target = $region32
      $region31: #{transformer_forward.11} parent=11 // pred_region
        _
      $region32: #{transformer_forward.11} parent=11 // pred_fallthru
        _
      // Predicated region
      $region33: #{transformer_forward.11} parent=11 // pred_check
        %p248 = pneg %p192
      $region34: #{transformer_forward.11} parent=11 // pred_check_branch
        %250 = sbr.rel (%p248) target = $region36
      $region35: #{transformer_forward.11} parent=11 // pred_region
        _
      $region36: #{transformer_forward.11} parent=11 // pred_fallthru
        _
    $region12: #{transformer_forward.11} parent=5 // pred_fallthru
      _
    %p251 = scmp.lt.s32.totalorder %s14, 2
    // Predicated region
    $region37: #{transformer_forward.11} parent=5 // pred_check
      %p252 = pneg %p251
    $region38: #{transformer_forward.11} parent=5 // pred_check_branch
      %254 = sbr.rel (%p252) target = $region40
    $region39: #{transformer_forward.11} parent=5 // pred_region
      // Predicated region
      $region41: #{transformer_forward.11} parent=39 // pred_check
        %p255 = pneg %p34
      $region42: #{transformer_forward.11} parent=39 // pred_check_branch
        %257 = sbr.rel (%p255) target = $region44
      $region43: #{transformer_forward.11} parent=39 // pred_region
        %p258 = scmp.lt.s32.totalorder %s14, 1
        %s259 = scalar_select %p258, %s14, 1
        %s260 = smul.addr %s259, 4
        %s261 = scalar_lea.vmem %s0, %s260
      $region44: #{transformer_forward.11} parent=39 // pred_fallthru
        _
      // Predicated region
      $region45: #{transformer_forward.11} parent=39 // pred_check
        %p262 = pneg %p60
      $region46: #{transformer_forward.11} parent=39 // pred_check_branch
        %264 = sbr.rel (%p262) target = $region48
      $region47: #{transformer_forward.11} parent=39 // pred_region
        %p265 = scmp.lt.s32.totalorder %s14, 1
        %s266 = scalar_select %p265, %s14, 1
        %s267 = scalar_lea.vmem %s1, %s266
      $region48: #{transformer_forward.11} parent=39 // pred_fallthru
        _
    $region40: #{transformer_forward.11} parent=5 // pred_fallthru
      _
    %p268 = scmp.le.s32.totalorder 1, %s14
    %p269 = scmp.lt.s32.totalorder %s14, 3
    %p270 = pnand %p268, %p269
    %p271 = pneg %p270
    // Predicated region
    $region49: #{transformer_forward.11} parent=5 // pred_check
      _
    $region50: #{transformer_forward.11} parent=5 // pred_check_branch
      %273 = sbr.rel (%p270) target = $region52
    $region51: #{transformer_forward.11} parent=5 // pred_region
      %s274 = ssub.s32 %s14, 1
      %p275 = scmp.lt.s32.totalorder %s19, 1
      %s276 = scalar_select %p275, %s19, 1
      %s277 = smul.addr %s276, 4
      %s278 = scalar_lea.vmem %s0, %s277
      %p279 = pneg %p40
      %p280 = pneg %p37
      %p281 = scmp.lt.s32.totalorder %s19, 1
      %s282 = scalar_select %p281, %s19, 1
      %s283 = scalar_lea.vmem %s1, %s282
      %p284 = pneg %p66
      %p285 = pneg %p63
      %p286 = pneg %p87
      %p287 = pneg %p84
      %p288 = pneg %p108
      %p289 = pneg %p105
      %p290 = pneg %p129
      %p291 = pneg %p126
      %p292 = pneg %p150
      %p293 = pneg %p147
      %p294 = pneg %p171
      %p295 = pneg %p168
      %p296 = pneg %p192
      %p297 = pneg %p189
      %p298 = pneg %p218
      %p299 = pneg %p215
      %p300 = scmp.lt.s32.totalorder %s19, 1
      %s301 = scalar_select %p300, %s19, 1
      %s302 = smul.addr %s301, 4
      %s303 = scalar_lea.vmem %s8, %s302
      %p304 = scmp.lt.s32.totalorder %s19, 1
      %s305 = scalar_select %p304, %s19, 1
      %s306 = smul.addr %s305, 4
      %s307 = scalar_lea.vmem %s0, %s306
      %p308 = scmp.lt.s32.totalorder %s19, 1
      %s309 = scalar_select %p308, %s19, 1
      %s310 = scalar_lea.vmem %s1, %s309
      %p311 = scmp.lt.s32.totalorder %s19, 1
      %s312 = scalar_select %p311, %s19, 1
      %s313 = smul.addr %s312, 4
      %s314 = scalar_lea.vmem %s8, %s313
      %v316 = vld [vmem:[%s307] sm:$0xf]
      %v317 = vld [vmem:[%s2] sm:$0xf]
      %v318 = vld [vmem:[%s2 + $0x4] sm:$0xf]
      %v319 = vld [vmem:[%s2 + $0x8] sm:$0xf]
      %v320 = vld [vmem:[%s2 + $0xc] sm:$0xf]
      %v321 = vld [vmem:[%s3] sm:$0x1]
      %v323 = vperm.slane %v321, 0
      %v329 = vunpack.c.l.b16 %v317
      %v330 = vunpack.c.l.b16 %v318
      %v331 = vunpack.c.l.b16 %v319
      %v332 = vunpack.c.l.b16 %v320
      %v333 = vpack.c.b16 %v330, %v329
      %v334 = vpack.c.b16 %v332, %v331
      %vm337 = vcmask 261120
      %v339 = vsel %vm337, %v316, 0
      %341 = vmatpush.bf16.msra.mxu0 0
      %342 = vmatpush.bf16.msra.mxu0 0
      %343 = vmatpush.bf16.msra.mxu0 0
      %344 = vmatpush.bf16.msra.mxu0 0
      %345 = vmatpush.bf16.msra.mxu0 0
      %346 = vmatpush.bf16.msra.mxu0 0
      %347 = vmatpush.bf16.msra.mxu0 %v334
      %348 = vmatpush.bf16.msra.mxu0 %v333
      %349 = vmatmul.bf16.gmra.mxu0 %v339
      %v350 = vpop.f32.mrf.mxu0
      %v351 = vadd.f32 %v323, %v350
      %v352 = vpop.f32.mrf.mxu0
      %353 = vdwg.mxu0
      %v354 = vld [vmem:[%s310] sm:$0x1]
      %vm355 = vcmp.gt.f32.partialorder %v354, 0.5
      %v356 = vsel %vm355, 1, 0
      %v357 = vperm.slane %v356, 0
      %vm358 = vcmp.eq.s32.totalorder %v357, 1
      %v359 = vld [vmem:[%s4] sm:$0xf]
      %v360 = vld [vmem:[%s4 + $0x4] sm:$0xf]
      %v361 = vld [vmem:[%s4 + $0x8] sm:$0xf]
      %v362 = vld [vmem:[%s4 + $0xc] sm:$0xf]
      %v363 = vld [vmem:[%s5] sm:$0x1]
      %v364 = vunpack.c.l.bf16 %v316
      %v365 = vld [vmem:[%s6] sm:$0x1]
      %v366 = vld [vmem:[%s7] sm:$0x1]
      %v367 = vpack.c.bf16 %v351, %v351
      %v369 = vunpack.c.l.b16 %v367
      %v370 = vpack.c.b16 %v369, %v369
      %371 = vrot.lane.b32.xlu0 %v370, 96
      %v372 = vpop.permute.xlu0 %371
      %vm373 = vcmask 64512
      %v375 = vsel %vm373, %v367, 0
      %v378 = vsel %vm373, %v372, 0
      %380 = vmatpush.bf16.xpose.msra.mxu0 0
      %381 = vmatpush.bf16.xpose.msra.mxu0 0
      %382 = vmatpush.bf16.xpose.msra.mxu0 0
      %383 = vmatpush.bf16.xpose.msra.mxu0 0
      %384 = vmatpush.bf16.xpose.msra.mxu0 0
      %385 = vmatpush.bf16.xpose.msra.mxu0 0
      %386 = vmatpush.bf16.xpose.msra.mxu0 0
      %387 = vmatpush.bf16.xpose.msra.mxu0 %v378
      %388 = vmatmul.bf16.gmra.mxu0 %v375
      %v389 = vpop.f32.mrf.mxu0
      %v390 = vadd.f32 0.0, %v389
      %v391 = vpop.f32.mrf.mxu0
      %392 = vdwg.mxu0
      %v393 = vmul.f32 %v390, 0.35355338
      %v394 = vsel %vm358, %v393, -1e+09
      %v395 = vsel %vm373, %v394, -inf
      %396 = vmax.xlane.f32.xlu0 %v395
      %v397 = vpop.xlane.xlu0 %396
      %v398 = vsub.f32 %v394, %v397
      %v399 = vmul.f32 %v398, 1.442695
      %v400 = vpow.pop %v399
      %v401 = vsel %vm373, %v400, 0.0
      %402 = vadd.xlane.f32.xlu0 %v401
      %v403 = vpop.xlane.xlu0 %402
      %v404 = vrcp.pop %v403
      %v405 = vmul.f32 %v403, %v404
      %v406 = vsub.f32 1.0, %v405
      %v407 = vmul.f32 %v404, %v406
      %v408 = vadd.f32 %v404, %v407
      %vm409 = vweird.f32 %v403
      %vm410 = vweird.f32 %v404
      %vm411 = vmor %vm409, %vm410
      %v412 = vsel %vm411, %v404, %v408
      %v413 = vand.u32 2147483647, %v403
      %vm414 = vcmp.eq.f32.partialorder %v413, 8.507059e+37
      %v415 = vand.u32 %v403, 2147483648
      %v416 = vor.u32 1.1754944e-38, %v415
      %v417 = vsel %vm414, %v416, %v412
      %v418 = vmul.f32 %v400, %v417
      %v419 = vpack.c.bf16 %v418, %v418
      %420 = vrot.lane.b32.xlu0 %v370, 64
      %v421 = vpop.permute.xlu0 %420
      %v423 = vsel %vm373, %v419, 0
      %vm425 = vcmask 1043456
      %v427 = vsel %vm425, %v421, 0
      %429 = vmatpush.bf16.msra.mxu0 0
      %430 = vmatpush.bf16.msra.mxu0 0
      %431 = vmatpush.bf16.msra.mxu0 0
      %432 = vmatpush.bf16.msra.mxu0 0
      %433 = vmatpush.bf16.msra.mxu0 0
      %434 = vmatpush.bf16.msra.mxu0 0
      %435 = vmatpush.bf16.msra.mxu0 0
      %436 = vmatpush.bf16.msra.mxu0 %v427
      %437 = vmatmul.bf16.gmra.mxu0 %v423
      %v438 = vpop.f32.mrf.mxu0
      %v439 = vadd.f32 0.0, %v438
      %v440 = vpop.f32.mrf.mxu0
      %441 = vdwg.mxu0
      %442 = vst.msk [vmem:[#allocation2] sm:$0xff] %vm373, %v439
      %443 = vrot.lane.b32.xlu0 %v370, 120
      %v444 = vpop.permute.xlu0 %443
      %445 = vrot.lane.b32.xlu0 %v370, 88
      %v446 = vpop.permute.xlu0 %445
      %v448 = vsel %vm373, %v444, 0
      %v451 = vsel %vm373, %v446, 0
      %453 = vmatpush.bf16.xpose.msra.mxu0 0
      %454 = vmatpush.bf16.xpose.msra.mxu0 0
      %455 = vmatpush.bf16.xpose.msra.mxu0 0
      %456 = vmatpush.bf16.xpose.msra.mxu0 0
      %457 = vmatpush.bf16.xpose.msra.mxu0 0
      %458 = vmatpush.bf16.xpose.msra.mxu0 0
      %459 = vmatpush.bf16.xpose.msra.mxu0 0
      %460 = vmatpush.bf16.xpose.msra.mxu0 %v451
      %461 = vmatmul.bf16.gmra.mxu0 %v448
      %v462 = vpop.f32.mrf.mxu0
      %v463 = vadd.f32 0.0, %v462
      %v464 = vpop.f32.mrf.mxu0
      %465 = vdwg.mxu0
      %v466 = vmul.f32 %v463, 0.35355338
      %v467 = vsel %vm358, %v466, -1e+09
      %v468 = vsel %vm373, %v467, -inf
      %469 = vmax.xlane.f32.xlu0 %v468
      %v470 = vpop.xlane.xlu0 %469
      %v471 = vsub.f32 %v467, %v470
      %v472 = vmul.f32 %v471, 1.442695
      %v473 = vpow.pop %v472
      %v474 = vsel %vm373, %v473, 0.0
      %475 = vadd.xlane.f32.xlu0 %v474
      %v476 = vpop.xlane.xlu0 %475
      %v477 = vrcp.pop %v476
      %v478 = vmul.f32 %v476, %v477
      %v479 = vsub.f32 1.0, %v478
      %v480 = vmul.f32 %v477, %v479
      %v481 = vadd.f32 %v477, %v480
      %vm482 = vweird.f32 %v476
      %vm483 = vweird.f32 %v477
      %vm484 = vmor %vm482, %vm483
      %v485 = vsel %vm484, %v477, %v481
      %v486 = vand.u32 2147483647, %v476
      %vm487 = vcmp.eq.f32.partialorder %v486, 8.507059e+37
      %v488 = vand.u32 %v476, 2147483648
      %v489 = vor.u32 1.1754944e-38, %v488
      %v490 = vsel %vm487, %v489, %v485
      %v491 = vmul.f32 %v473, %v490
      %v492 = vpack.c.bf16 %v491, %v491
      %493 = vrot.lane.b32.xlu0 %v370, 56
      %v494 = vpop.permute.xlu0 %493
      %v496 = vsel %vm373, %v492, 0
      %v499 = vsel %vm425, %v494, 0
      %501 = vmatpush.bf16.msra.mxu0 0
      %502 = vmatpush.bf16.msra.mxu0 0
      %503 = vmatpush.bf16.msra.mxu0 0
      %504 = vmatpush.bf16.msra.mxu0 0
      %505 = vmatpush.bf16.msra.mxu0 0
      %506 = vmatpush.bf16.msra.mxu0 0
      %507 = vmatpush.bf16.msra.mxu0 0
      %508 = vmatpush.bf16.msra.mxu0 %v499
      %509 = vmatmul.bf16.gmra.mxu0 %v496
      %v510 = vpop.f32.mrf.mxu0
      %v511 = vadd.f32 0.0, %v510
      %v512 = vpop.f32.mrf.mxu0
      %513 = vdwg.mxu0
      %515 = vrot.lane.b32.xlu0 %v511, 8
      %v516 = vpop.permute.xlu0 %515
      %vm518 = vcmask 130112
      %519 = vst.msk [vmem:[#allocation2] sm:$0xff] %vm518, %v516
      %520 = vrot.lane.b32.xlu0 %v370, 112
      %v521 = vpop.permute.xlu0 %520
      %522 = vrot.lane.b32.xlu0 %v370, 80
      %v523 = vpop.permute.xlu0 %522
      %v525 = vsel %vm373, %v521, 0
      %v528 = vsel %vm373, %v523, 0
      %530 = vmatpush.bf16.xpose.msra.mxu0 0
      %531 = vmatpush.bf16.xpose.msra.mxu0 0
      %532 = vmatpush.bf16.xpose.msra.mxu0 0
      %533 = vmatpush.bf16.xpose.msra.mxu0 0
      %534 = vmatpush.bf16.xpose.msra.mxu0 0
      %535 = vmatpush.bf16.xpose.msra.mxu0 0
      %536 = vmatpush.bf16.xpose.msra.mxu0 0
      %537 = vmatpush.bf16.xpose.msra.mxu0 %v528
      %538 = vmatmul.bf16.gmra.mxu0 %v525
      %v539 = vpop.f32.mrf.mxu0
      %v540 = vadd.f32 0.0, %v539
      %v541 = vpop.f32.mrf.mxu0
      %542 = vdwg.mxu0
      %v543 = vmul.f32 %v540, 0.35355338
      %v544 = vsel %vm358, %v543, -1e+09
      %v545 = vsel %vm373, %v544, -inf
      %546 = vmax.xlane.f32.xlu0 %v545
      %v547 = vpop.xlane.xlu0 %546
      %v548 = vsub.f32 %v544, %v547
      %v549 = vmul.f32 %v548, 1.442695
      %v550 = vpow.pop %v549
      %v551 = vsel %vm373, %v550, 0.0
      %552 = vadd.xlane.f32.xlu0 %v551
      %v553 = vpop.xlane.xlu0 %552
      %v554 = vrcp.pop %v553
      %v555 = vmul.f32 %v553, %v554
      %v556 = vsub.f32 1.0, %v555
      %v557 = vmul.f32 %v554, %v556
      %v558 = vadd.f32 %v554, %v557
      %vm559 = vweird.f32 %v553
      %vm560 = vweird.f32 %v554
      %vm561 = vmor %vm559, %vm560
      %v562 = vsel %vm561, %v554, %v558
      %v563 = vand.u32 2147483647, %v553
      %vm564 = vcmp.eq.f32.partialorder %v563, 8.507059e+37
      %v565 = vand.u32 %v553, 2147483648
      %v566 = vor.u32 1.1754944e-38, %v565
      %v567 = vsel %vm564, %v566, %v562
      %v568 = vmul.f32 %v550, %v567
      %v569 = vpack.c.bf16 %v568, %v568
      %570 = vrot.lane.b32.xlu0 %v370, 48
      %v571 = vpop.permute.xlu0 %570
      %v573 = vsel %vm373, %v569, 0
      %v576 = vsel %vm425, %v571, 0
      %578 = vmatpush.bf16.msra.mxu0 0
      %579 = vmatpush.bf16.msra.mxu0 0
      %580 = vmatpush.bf16.msra.mxu0 0
      %581 = vmatpush.bf16.msra.mxu0 0
      %582 = vmatpush.bf16.msra.mxu0 0
      %583 = vmatpush.bf16.msra.mxu0 0
      %584 = vmatpush.bf16.msra.mxu0 0
      %585 = vmatpush.bf16.msra.mxu0 %v576
      %586 = vmatmul.bf16.gmra.mxu0 %v573
      %v587 = vpop.f32.mrf.mxu0
      %v588 = vadd.f32 0.0, %v587
      %v589 = vpop.f32.mrf.mxu0
      %590 = vdwg.mxu0
      %592 = vrot.lane.b32.xlu0 %v588, 16
      %v593 = vpop.permute.xlu0 %592
      %vm595 = vcmask 195712
      %596 = vst.msk [vmem:[#allocation2] sm:$0xff] %vm595, %v593
      %597 = vrot.lane.b32.xlu0 %v370, 104
      %v598 = vpop.permute.xlu0 %597
      %599 = vrot.lane.b32.xlu0 %v370, 72
      %v600 = vpop.permute.xlu0 %599
      %v602 = vsel %vm373, %v598, 0
      %v605 = vsel %vm373, %v600, 0
      %607 = vmatpush.bf16.xpose.msra.mxu0 0
      %608 = vmatpush.bf16.xpose.msra.mxu0 0
      %609 = vmatpush.bf16.xpose.msra.mxu0 0
      %610 = vmatpush.bf16.xpose.msra.mxu0 0
      %611 = vmatpush.bf16.xpose.msra.mxu0 0
      %612 = vmatpush.bf16.xpose.msra.mxu0 0
      %613 = vmatpush.bf16.xpose.msra.mxu0 0
      %614 = vmatpush.bf16.xpose.msra.mxu0 %v605
      %615 = vmatmul.bf16.gmra.mxu0 %v602
      %v616 = vpop.f32.mrf.mxu0
      %v617 = vadd.f32 0.0, %v616
      %v618 = vpop.f32.mrf.mxu0
      %619 = vdwg.mxu0
      %v620 = vmul.f32 %v617, 0.35355338
      %v621 = vsel %vm358, %v620, -1e+09
      %v622 = vsel %vm373, %v621, -inf
      %623 = vmax.xlane.f32.xlu0 %v622
      %v624 = vpop.xlane.xlu0 %623
      %v625 = vsub.f32 %v621, %v624
      %v626 = vmul.f32 %v625, 1.442695
      %v627 = vpow.pop %v626
      %v628 = vsel %vm373, %v627, 0.0
      %629 = vadd.xlane.f32.xlu0 %v628
      %v630 = vpop.xlane.xlu0 %629
      %v631 = vrcp.pop %v630
      %v632 = vmul.f32 %v630, %v631
      %v633 = vsub.f32 1.0, %v632
      %v634 = vmul.f32 %v631, %v633
      %v635 = vadd.f32 %v631, %v634
      %vm636 = vweird.f32 %v630
      %vm637 = vweird.f32 %v631
      %vm638 = vmor %vm636, %vm637
      %v639 = vsel %vm638, %v631, %v635
      %v640 = vand.u32 2147483647, %v630
      %vm641 = vcmp.eq.f32.partialorder %v640, 8.507059e+37
      %v642 = vand.u32 %v630, 2147483648
      %v643 = vor.u32 1.1754944e-38, %v642
      %v644 = vsel %vm641, %v643, %v639
      %v645 = vmul.f32 %v627, %v644
      %v646 = vpack.c.bf16 %v645, %v645
      %647 = vrot.lane.b32.xlu0 %v370, 40
      %v648 = vpop.permute.xlu0 %647
      %v650 = vsel %vm373, %v646, 0
      %v653 = vsel %vm425, %v648, 0
      %655 = vmatpush.bf16.msra.mxu0 0
      %656 = vmatpush.bf16.msra.mxu0 0
      %657 = vmatpush.bf16.msra.mxu0 0
      %658 = vmatpush.bf16.msra.mxu0 0
      %659 = vmatpush.bf16.msra.mxu0 0
      %660 = vmatpush.bf16.msra.mxu0 0
      %661 = vmatpush.bf16.msra.mxu0 0
      %662 = vmatpush.bf16.msra.mxu0 %v653
      %663 = vmatmul.bf16.gmra.mxu0 %v650
      %v664 = vpop.f32.mrf.mxu0
      %v665 = vadd.f32 0.0, %v664
      %v666 = vpop.f32.mrf.mxu0
      %667 = vdwg.mxu0
      %669 = vrot.lane.b32.xlu0 %v665, 24
      %v670 = vpop.permute.xlu0 %669
      %vm672 = vcmask 261312
      %673 = vst.msk [vmem:[#allocation2] sm:$0xff] %vm672, %v670
      %v674 = vld [vmem:[#allocation2] sm:$0xff]
      %v675 = vpack.c.bf16 %v674, %v674
      %v677 = vperm.slane %v363, 0
      %v683 = vunpack.c.l.b16 %v359
      %v684 = vunpack.c.l.b16 %v360
      %v685 = vunpack.c.l.b16 %v361
      %v686 = vunpack.c.l.b16 %v362
      %v687 = vpack.c.b16 %v684, %v683
      %v688 = vpack.c.b16 %v686, %v685
      %v692 = vsel %vm337, %v675, 0
      %694 = vmatpush.bf16.msra.mxu0 0
      %695 = vmatpush.bf16.msra.mxu0 0
      %696 = vmatpush.bf16.msra.mxu0 0
      %697 = vmatpush.bf16.msra.mxu0 0
      %698 = vmatpush.bf16.msra.mxu0 0
      %699 = vmatpush.bf16.msra.mxu0 0
      %700 = vmatpush.bf16.msra.mxu0 %v688
      %701 = vmatpush.bf16.msra.mxu0 %v687
      %702 = vmatmul.bf16.gmra.mxu0 %v692
      %v703 = vpop.f32.mrf.mxu0
      %v704 = vadd.f32 %v677, %v703
      %v705 = vpop.f32.mrf.mxu0
      %706 = vdwg.mxu0
      %v707 = vadd.f32 %v364, %v704
      %v708 = vsel %vm337, %v707, 0.0
      %709 = vadd.xlane.f32.xlu0 %v708
      %v710 = vpop.xlane.xlu0 %709
      %v711 = vrcp.pop 32.0
      %v712 = vmul.f32 32.0, %v711
      %v713 = vsub.f32 1.0, %v712
      %v714 = vmul.f32 %v711, %v713
      %v715 = vadd.f32 %v711, %v714
      %vm716 = vweird.f32 %v711
      %v717 = vsel %vm716, %v711, %v715
      %v718 = vmul.f32 %v710, %v717
      %v719 = vsub.f32 %v707, %v718
      %v720 = vmul.f32 %v719, %v719
      %v721 = vsel %vm337, %v720, 0.0
      %722 = vadd.xlane.f32.xlu0 %v721
      %v723 = vpop.xlane.xlu0 %722
      %v724 = vmul.f32 %v723, %v717
      %v725 = vadd.f32 %v724, 1e-05
      %v726 = vrsqrt.pop %v725
      %v727 = vmul.f32 %v726, %v725
      %v728 = vmul.f32 %v727, %v726
      %v729 = vmul.f32 0.5, %v728
      %v730 = vsub.f32 1.5, %v729
      %v731 = vmul.f32 %v726, %v730
      %vm732 = vweird.f32 %v725
      %vm733 = vweird.f32 %v726
      %vm734 = vmor %vm732, %vm733
      %v735 = vsel %vm734, %v726, %v731
      %v736 = vmul.f32 %v719, %v735
      %v738 = vperm.slane %v365, 0
      %v740 = vmul.f32 %v736, %v738
      %v742 = vperm.slane %v366, 0
      %v744 = vadd.f32 %v740, %v742
      %v745 = vpack.c.bf16 %v744, %v744
      %vm746 = vcmask 257024
      %747 = vst.msk [vmem:[%s314] sm:$0xf] %vm746, %v745
      %p748 = scmp.lt.s32.totalorder %s19, 1
      %s749 = scalar_select %p748, %s19, 1
      %s750 = smul.addr %s749, 4
      %s751 = scalar_lea.vmem %s8, %s750
      // Predicated region
      $region53: #{transformer_forward.11} parent=51 // pred_check
        %p752 = pneg %p215
      $region54: #{transformer_forward.11} parent=51 // pred_check_branch
        %754 = sbr.rel (%p752) target = $region56
      $region55: #{transformer_forward.11} parent=51 // pred_region
        _
      $region56: #{transformer_forward.11} parent=51 // pred_fallthru
        _
    $region52: #{transformer_forward.11} parent=5 // pred_fallthru
      _
    %p755 = scmp.le.s32.totalorder 2, %s14
    // Predicated region
    $region57: #{transformer_forward.11} parent=5 // pred_check
      %p756 = pneg %p755
    $region58: #{transformer_forward.11} parent=5 // pred_check_branch
      %758 = sbr.rel (%p756) target = $region60
    $region59: #{transformer_forward.11} parent=5 // pred_region
      %s759 = ssub.s32 %s14, 2
      // Predicated region
      $region61: #{transformer_forward.11} parent=59 // pred_check
        %p760 = pneg %p221
      $region62: #{transformer_forward.11} parent=59 // pred_check_branch
        %762 = sbr.rel (%p760) target = $region64
      $region63: #{transformer_forward.11} parent=59 // pred_region
        %p763 = scmp.lt.s32.totalorder %s20, 1
        %s764 = scalar_select %p763, %s20, 1
        %s765 = smul.addr %s764, 4
        %s766 = scalar_lea.vmem %s8, %s765
      $region64: #{transformer_forward.11} parent=59 // pred_fallthru
        _
    $region60: #{transformer_forward.11} parent=5 // pred_fallthru
      _
  $region6: #{transformer_forward.11} parent=0 // loop_footer
    %s18 = sadd.s32 1, %s14
  $region7: #{transformer_forward.11} parent=0 // loop_footer_branch
    %13 = sbr.rel target = $region3
  $region8: #{transformer_forward.11} parent=0 // loop_exit
    _

// kernel: transformer_forward.16
$region0: #{transformer_forward.16}
  #allocation0 [shape = 'u32[]', space=smem, size = 0x4, offset = 0x4, fixed_abs, tag = 'smem constant byte address 0x4 - core index']
  #allocation1 [shape = 'u32[72,128]{1,0:T(1,128)}', space=vmem, size = 0x9000, scoped, tag = 'internal scratch']
  #allocation2 [shape = 'f32[8,32]{1,0:T(8,128)}', space=vmem, size = 0x1000, scoped, tag = 'scratch operand']
  %s0 = inlined_call_operand.vmem [shape: bf16[2,8,32], index: 0, kind: input, shape index: {}]
  %s1 = inlined_call_operand.vmem [shape: bf16[2,8,32], index: 1, kind: input, shape index: {}]
  %s2 = inlined_call_operand.vmem [shape: f32[2,1,8], index: 2, kind: input, shape index: {}]
  %s3 = inlined_call_operand.vmem [shape: bf16[32,32], index: 3, kind: input, shape index: {}]
  %s4 = inlined_call_operand.vmem [shape: f32[1,32], index: 4, kind: input, shape index: {}]
  %s5 = inlined_call_operand.vmem [shape: bf16[32,64], index: 5, kind: input, shape index: {}]
  %s6 = inlined_call_operand.hbm [shape: f32[1,64], index: 6, kind: input, shape index: {}]
  %s7 = inlined_call_operand.vmem [shape: bf16[32,32], index: 7, kind: input, shape index: {}]
  %s8 = inlined_call_operand.hbm [shape: f32[1,32], index: 8, kind: input, shape index: {}]
  %s9 = inlined_call_operand.hbm [shape: f32[1,32], index: 9, kind: input, shape index: {}]
  %s10 = inlined_call_operand.hbm [shape: f32[1,32], index: 10, kind: input, shape index: {}]
  %s11 = inlined_call_operand.vmem [shape: bf16[2,8,32], index: 11, kind: output, shape index: {}]
  %s12 = sld [smem:[#allocation0]]
  $region93: #{transformer_forward.16} parent=0
    _
  %s14 = ssub.s32 1, %s12
  %s15 = scalar_select 0, %s14, %s12
  $region1: #{transformer_forward.16} parent=0
    #allocation3 [shape = 'u8[512]{0}', space=vmem, size = 0x400, scoped, tag = 'input window, operand 6, single buffered']
    #allocation4 [shape = 's32[2]{0}', space=sflag, size = 0x8, scoped, tag = 'scoped memory for transformer_forward.16']
    #allocation5 [shape = 'u8[512]{0}', space=vmem, size = 0x400, scoped, tag = 'input window, operand 8, single buffered']
    #allocation6 [shape = 's32[1]{0}', space=sflag, size = 0x4, scoped, tag = 'scoped memory for transformer_forward.16']
    #allocation7 [shape = 'u8[512]{0}', space=vmem, size = 0x400, scoped, tag = 'input window, operand 9, single buffered']
    #allocation8 [shape = 'u8[512]{0}', space=vmem, size = 0x400, scoped, tag = 'input window, operand 10, single buffered']
    #allocation9 [shape = 's32[1]{0}', space=sflag, size = 0x4, scoped, tag = 'scoped memory for transformer_forward.16']
    %16 = vsyncpa [#allocation4], 0
    %17 = vsyncpa [#allocation6], 0
    %18 = vsyncpa [#allocation9], 0
    loop: start=0, step=1, limit=4
    $region2: #{transformer_forward.16} parent=1 // loop_pre_header
      _
    $region3: #{transformer_forward.16} parent=1 // loop_header
      %s20 = sphi 0, %s24
      %p21 = scmp.ge.s32.totalorder %s20, 4
      %s30 = sphi 0, %s32
      %s33 = sphi 0, %s30
      %s34 = sphi 0, %s33
      %s50 = sphi 0, %s34
      %s56 = sphi 0, %s58
      %s59 = sphi 0, %s56
      %s60 = sphi 0, %s59
      %s76 = sphi 0, %s60
      %s82 = sphi 0, %s84
      %s85 = sphi 0, %s82
      %s86 = sphi 0, %s85
      %s102 = sphi 0, %s86
      %s106 = sphi 0, %s106
      %s108 = sphi 0, %s106
      %s109 = sphi 0, %s108
      %s123 = sphi 0, %s109
      %s127 = sphi 0, %s127
      %s129 = sphi 0, %s127
      %s130 = sphi 0, %s129
      %s144 = sphi 0, %s130
      %s148 = sphi 0, %s148
      %s150 = sphi 0, %s148
      %s151 = sphi 0, %s150
      %s165 = sphi 0, %s151
      %s169 = sphi 0, %s169
      %s171 = sphi 0, %s169
      %s172 = sphi 0, %s171
      %s186 = sphi 0, %s172
      %s190 = sphi 0, %s190
      %s192 = sphi 0, %s190
      %s193 = sphi 0, %s192
      %s207 = sphi 0, %s193
      %s211 = sphi 0, %s211
      %s213 = sphi 0, %s211
      %s214 = sphi 0, %s213
      %s228 = sphi 0, %s214
      %s232 = sphi 0, %s232
      %s234 = sphi 0, %s232
      %s235 = sphi 0, %s234
      %s249 = sphi 0, %s235
      %s253 = sphi 0, %s253
      %s255 = sphi 0, %s253
      %s256 = sphi 0, %s255
      %s270 = sphi 0, %s256
      %s276 = sphi 0, %s278
      %s279 = sphi 0, %s276
      %s280 = sphi 0, %s279
      %s296 = sphi 0, %s280
    $region4: #{transformer_forward.16} parent=1 // loop_header_branch
      %23 = sbr.rel (%p21) target = $region8
    $region5: #{transformer_forward.16} parent=1 // loop_body
      %s25 = ssub.s32 %s20, 1
      %s26 = ssub.s32 %s20, 2
      %s27 = sadd.s32 %s20, 1
      %s28 = ssub.s32 %s20, %s27
      %p29 = scmp.eq.s32.totalorder %s28, 0
      %s31 = sadd.s32 %s30, 1
      %s32 = scalar_select %p29, %s30, %s31
      %p35 = pneg %p29
      %p36 = scmp.eq.s32.totalorder %s20, 1
      %p37 = por %p35, %p36
      %p38 = scmp.ne.s32.totalorder %s30, %s33
      %p39 = scmp.eq.s32.totalorder %s20, 0
      %p40 = por %p38, %p39
      %p41 = scmp.ne.s32.totalorder %s30, %s33
      %p42 = scmp.eq.s32.totalorder %s25, 1
      %p43 = por %p41, %p42
      %p44 = scmp.ne.s32.totalorder %s33, %s34
      %p45 = scmp.eq.s32.totalorder %s25, 0
      %p46 = por %p44, %p45
      %p47 = scmp.ne.s32.totalorder %s33, %s34
      %p48 = scmp.eq.s32.totalorder %s26, 1
      %p49 = por %p47, %p48
      %p51 = scmp.ne.s32.totalorder %s34, %s50
      %p52 = scmp.eq.s32.totalorder %s26, 0
      %p53 = por %p51, %p52
      %s54 = ssub.s32 %s20, %s27
      %p55 = scmp.eq.s32.totalorder %s54, 0
      %s57 = sadd.s32 %s56, 1
      %s58 = scalar_select %p55, %s56, %s57
      %p61 = pneg %p55
      %p62 = scmp.eq.s32.totalorder %s20, 1
      %p63 = por %p61, %p62
      %p64 = scmp.ne.s32.totalorder %s56, %s59
      %p65 = scmp.eq.s32.totalorder %s20, 0
      %p66 = por %p64, %p65
      %p67 = scmp.ne.s32.totalorder %s56, %s59
      %p68 = scmp.eq.s32.totalorder %s25, 1
      %p69 = por %p67, %p68
      %p70 = scmp.ne.s32.totalorder %s59, %s60
      %p71 = scmp.eq.s32.totalorder %s25, 0
      %p72 = por %p70, %p71
      %p73 = scmp.ne.s32.totalorder %s59, %s60
      %p74 = scmp.eq.s32.totalorder %s26, 1
      %p75 = por %p73, %p74
      %p77 = scmp.ne.s32.totalorder %s60, %s76
      %p78 = scmp.eq.s32.totalorder %s26, 0
      %p79 = por %p77, %p78
      %s80 = ssub.s32 %s20, %s27
      %p81 = scmp.eq.s32.totalorder %s80, 0
      %s83 = sadd.s32 %s82, 1
      %s84 = scalar_select %p81, %s82, %s83
      %p87 = pneg %p81
      %p88 = scmp.eq.s32.totalorder %s20, 1
      %p89 = por %p87, %p88
      %p90 = scmp.ne.s32.totalorder %s82, %s85
      %p91 = scmp.eq.s32.totalorder %s20, 0
      %p92 = por %p90, %p91
      %p93 = scmp.ne.s32.totalorder %s82, %s85
      %p94 = scmp.eq.s32.totalorder %s25, 1
      %p95 = por %p93, %p94
      %p96 = scmp.ne.s32.totalorder %s85, %s86
      %p97 = scmp.eq.s32.totalorder %s25, 0
      %p98 = por %p96, %p97
      %p99 = scmp.ne.s32.totalorder %s85, %s86
      %p100 = scmp.eq.s32.totalorder %s26, 1
      %p101 = por %p99, %p100
      %p103 = scmp.ne.s32.totalorder %s86, %s102
      %p104 = scmp.eq.s32.totalorder %s26, 0
      %p105 = por %p103, %p104
      %s107 = sadd.s32 %s106, 1
      %p110 = scmp.eq.s32.totalorder %s20, 1
      %p111 = scmp.ne.s32.totalorder %s106, %s108
      %p112 = scmp.eq.s32.totalorder %s20, 0
      %p113 = por %p111, %p112
      %p114 = scmp.ne.s32.totalorder %s106, %s108
      %p115 = scmp.eq.s32.totalorder %s25, 1
      %p116 = por %p114, %p115
      %p117 = scmp.ne.s32.totalorder %s108, %s109
      %p118 = scmp.eq.s32.totalorder %s25, 0
      %p119 = por %p117, %p118
      %p120 = scmp.ne.s32.totalorder %s108, %s109
      %p121 = scmp.eq.s32.totalorder %s26, 1
      %p122 = por %p120, %p121
      %p124 = scmp.ne.s32.totalorder %s109, %s123
      %p125 = scmp.eq.s32.totalorder %s26, 0
      %p126 = por %p124, %p125
      %s128 = sadd.s32 %s127, 1
      %p131 = scmp.eq.s32.totalorder %s20, 1
      %p132 = scmp.ne.s32.totalorder %s127, %s129
      %p133 = scmp.eq.s32.totalorder %s20, 0
      %p134 = por %p132, %p133
      %p135 = scmp.ne.s32.totalorder %s127, %s129
      %p136 = scmp.eq.s32.totalorder %s25, 1
      %p137 = por %p135, %p136
      %p138 = scmp.ne.s32.totalorder %s129, %s130
      %p139 = scmp.eq.s32.totalorder %s25, 0
      %p140 = por %p138, %p139
      %p141 = scmp.ne.s32.totalorder %s129, %s130
      %p142 = scmp.eq.s32.totalorder %s26, 1
      %p143 = por %p141, %p142
      %p145 = scmp.ne.s32.totalorder %s130, %s144
      %p146 = scmp.eq.s32.totalorder %s26, 0
      %p147 = por %p145, %p146
      %s149 = sadd.s32 %s148, 1
      %p152 = scmp.eq.s32.totalorder %s20, 1
      %p153 = scmp.ne.s32.totalorder %s148, %s150
      %p154 = scmp.eq.s32.totalorder %s20, 0
      %p155 = por %p153, %p154
      %p156 = scmp.ne.s32.totalorder %s148, %s150
      %p157 = scmp.eq.s32.totalorder %s25, 1
      %p158 = por %p156, %p157
      %p159 = scmp.ne.s32.totalorder %s150, %s151
      %p160 = scmp.eq.s32.totalorder %s25, 0
      %p161 = por %p159, %p160
      %p162 = scmp.ne.s32.totalorder %s150, %s151
      %p163 = scmp.eq.s32.totalorder %s26, 1
      %p164 = por %p162, %p163
      %p166 = scmp.ne.s32.totalorder %s151, %s165
      %p167 = scmp.eq.s32.totalorder %s26, 0
      %p168 = por %p166, %p167
      %s170 = sadd.s32 %s169, 1
      %p173 = scmp.eq.s32.totalorder %s20, 1
      %p174 = scmp.ne.s32.totalorder %s169, %s171
      %p175 = scmp.eq.s32.totalorder %s20, 0
      %p176 = por %p174, %p175
      %p177 = scmp.ne.s32.totalorder %s169, %s171
      %p178 = scmp.eq.s32.totalorder %s25, 1
      %p179 = por %p177, %p178
      %p180 = scmp.ne.s32.totalorder %s171, %s172
      %p181 = scmp.eq.s32.totalorder %s25, 0
      %p182 = por %p180, %p181
      %p183 = scmp.ne.s32.totalorder %s171, %s172
      %p184 = scmp.eq.s32.totalorder %s26, 1
      %p185 = por %p183, %p184
      %p187 = scmp.ne.s32.totalorder %s172, %s186
      %p188 = scmp.eq.s32.totalorder %s26, 0
      %p189 = por %p187, %p188
      %s191 = sadd.s32 %s190, 1
      %p194 = scmp.eq.s32.totalorder %s20, 1
      %p195 = scmp.ne.s32.totalorder %s190, %s192
      %p196 = scmp.eq.s32.totalorder %s20, 0
      %p197 = por %p195, %p196
      %p198 = scmp.ne.s32.totalorder %s190, %s192
      %p199 = scmp.eq.s32.totalorder %s25, 1
      %p200 = por %p198, %p199
      %p201 = scmp.ne.s32.totalorder %s192, %s193
      %p202 = scmp.eq.s32.totalorder %s25, 0
      %p203 = por %p201, %p202
      %p204 = scmp.ne.s32.totalorder %s192, %s193
      %p205 = scmp.eq.s32.totalorder %s26, 1
      %p206 = por %p204, %p205
      %p208 = scmp.ne.s32.totalorder %s193, %s207
      %p209 = scmp.eq.s32.totalorder %s26, 0
      %p210 = por %p208, %p209
      %s212 = sadd.s32 %s211, 1
      %p215 = scmp.eq.s32.totalorder %s20, 1
      %p216 = scmp.ne.s32.totalorder %s211, %s213
      %p217 = scmp.eq.s32.totalorder %s20, 0
      %p218 = por %p216, %p217
      %p219 = scmp.ne.s32.totalorder %s211, %s213
      %p220 = scmp.eq.s32.totalorder %s25, 1
      %p221 = por %p219, %p220
      %p222 = scmp.ne.s32.totalorder %s213, %s214
      %p223 = scmp.eq.s32.totalorder %s25, 0
      %p224 = por %p222, %p223
      %p225 = scmp.ne.s32.totalorder %s213, %s214
      %p226 = scmp.eq.s32.totalorder %s26, 1
      %p227 = por %p225, %p226
      %p229 = scmp.ne.s32.totalorder %s214, %s228
      %p230 = scmp.eq.s32.totalorder %s26, 0
      %p231 = por %p229, %p230
      %s233 = sadd.s32 %s232, 1
      %p236 = scmp.eq.s32.totalorder %s20, 1
      %p237 = scmp.ne.s32.totalorder %s232, %s234
      %p238 = scmp.eq.s32.totalorder %s20, 0
      %p239 = por %p237, %p238
      %p240 = scmp.ne.s32.totalorder %s232, %s234
      %p241 = scmp.eq.s32.totalorder %s25, 1
      %p242 = por %p240, %p241
      %p243 = scmp.ne.s32.totalorder %s234, %s235
      %p244 = scmp.eq.s32.totalorder %s25, 0
      %p245 = por %p243, %p244
      %p246 = scmp.ne.s32.totalorder %s234, %s235
      %p247 = scmp.eq.s32.totalorder %s26, 1
      %p248 = por %p246, %p247
      %p250 = scmp.ne.s32.totalorder %s235, %s249
      %p251 = scmp.eq.s32.totalorder %s26, 0
      %p252 = por %p250, %p251
      %s254 = sadd.s32 %s253, 1
      %p257 = scmp.eq.s32.totalorder %s20, 1
      %p258 = scmp.ne.s32.totalorder %s253, %s255
      %p259 = scmp.eq.s32.totalorder %s20, 0
      %p260 = por %p258, %p259
      %p261 = scmp.ne.s32.totalorder %s253, %s255
      %p262 = scmp.eq.s32.totalorder %s25, 1
      %p263 = por %p261, %p262
      %p264 = scmp.ne.s32.totalorder %s255, %s256
      %p265 = scmp.eq.s32.totalorder %s25, 0
      %p266 = por %p264, %p265
      %p267 = scmp.ne.s32.totalorder %s255, %s256
      %p268 = scmp.eq.s32.totalorder %s26, 1
      %p269 = por %p267, %p268
      %p271 = scmp.ne.s32.totalorder %s256, %s270
      %p272 = scmp.eq.s32.totalorder %s26, 0
      %p273 = por %p271, %p272
      %s274 = ssub.s32 %s20, %s27
      %p275 = scmp.eq.s32.totalorder %s274, 0
      %s277 = sadd.s32 %s276, 1
      %s278 = scalar_select %p275, %s276, %s277
      %p281 = pneg %p275
      %p282 = scmp.eq.s32.totalorder %s20, 1
      %p283 = por %p281, %p282
      %p284 = scmp.ne.s32.totalorder %s276, %s279
      %p285 = scmp.eq.s32.totalorder %s20, 0
      %p286 = por %p284, %p285
      %p287 = scmp.ne.s32.totalorder %s276, %s279
      %p288 = scmp.eq.s32.totalorder %s25, 1
      %p289 = por %p287, %p288
      %p290 = scmp.ne.s32.totalorder %s279, %s280
      %p291 = scmp.eq.s32.totalorder %s25, 0
      %p292 = por %p290, %p291
      %p293 = scmp.ne.s32.totalorder %s279, %s280
      %p294 = scmp.eq.s32.totalorder %s26, 1
      %p295 = por %p293, %p294
      %p297 = scmp.ne.s32.totalorder %s280, %s296
      %p298 = scmp.eq.s32.totalorder %s26, 0
      %p299 = por %p297, %p298
      %p300 = scmp.le.s32.totalorder 1, %s20
      %p301 = scmp.lt.s32.totalorder %s20, 3
      %p302 = pnand %p300, %p301
      %p303 = pneg %p302
      // Predicated region
      $region9: #{transformer_forward.16} parent=5 // pred_check
        _
      $region10: #{transformer_forward.16} parent=5 // pred_check_branch
        %305 = sbr.rel (%p302) target = $region12
      $region11: #{transformer_forward.16} parent=5 // pred_region
        %s306 = ssub.s32 %s20, 1
        // Predicated region
        $region13: #{transformer_forward.16} parent=11 // pred_check
          %p307 = pneg %p119
        $region14: #{transformer_forward.16} parent=11 // pred_check_branch
          %309 = sbr.rel (%p307) target = $region16
        $region15: #{transformer_forward.16} parent=11 // pred_region
          _
        $region16: #{transformer_forward.16} parent=11 // pred_fallthru
          _
        // Predicated region
        $region17: #{transformer_forward.16} parent=11 // pred_check
          %p310 = pneg %p140
        $region18: #{transformer_forward.16} parent=11 // pred_check_branch
          %312 = sbr.rel (%p310) target = $region20
        $region19: #{transformer_forward.16} parent=11 // pred_region
          _
        $region20: #{transformer_forward.16} parent=11 // pred_fallthru
          _
        // Predicated region
        $region21: #{transformer_forward.16} parent=11 // pred_check
          %p313 = pneg %p161
        $region22: #{transformer_forward.16} parent=11 // pred_check_branch
          %315 = sbr.rel (%p313) target = $region24
        $region23: #{transformer_forward.16} parent=11 // pred_region
          _
        $region24: #{transformer_forward.16} parent=11 // pred_fallthru
          _
        // Predicated region
        $region25: #{transformer_forward.16} parent=11 // pred_check
          %p316 = pneg %p182
        $region26: #{transformer_forward.16} parent=11 // pred_check_branch
          %318 = sbr.rel (%p316) target = $region28
        $region27: #{transformer_forward.16} parent=11 // pred_region
          %320 = vsyncadd [#allocation4], 0
          %s322 = sshll.u32 %s6, 4
          %s323 = int_to_ptr.hbm [resolvable:$true] %s322
          %s324 = sshll.u32 [#allocation3], 4
          %s325 = int_to_ptr.vmem [resolvable:$true] %s324
          %327 = dma.hbm_to_vmem [thread:$0]  %s323, 16, %s325, [#allocation4]
        $region28: #{transformer_forward.16} parent=11 // pred_fallthru
          _
        // Predicated region
        $region29: #{transformer_forward.16} parent=11 // pred_check
          %p328 = pneg %p203
        $region30: #{transformer_forward.16} parent=11 // pred_check_branch
          %330 = sbr.rel (%p328) target = $region32
        $region31: #{transformer_forward.16} parent=11 // pred_region
          _
        $region32: #{transformer_forward.16} parent=11 // pred_fallthru
          _
        // Predicated region
        $region33: #{transformer_forward.16} parent=11 // pred_check
          %p331 = pneg %p224
        $region34: #{transformer_forward.16} parent=11 // pred_check_branch
          %333 = sbr.rel (%p331) target = $region36
        $region35: #{transformer_forward.16} parent=11 // pred_region
          %335 = vsyncadd [#allocation6], 0
          %s337 = sshll.u32 %s8, 4
          %s338 = int_to_ptr.hbm [resolvable:$true] %s337
          %s339 = sshll.u32 [#allocation5], 4
          %s340 = int_to_ptr.vmem [resolvable:$true] %s339
          %342 = dma.hbm_to_vmem [thread:$0]  %s338, 16, %s340, [#allocation6]
        $region36: #{transformer_forward.16} parent=11 // pred_fallthru
          _
        // Predicated region
        $region37: #{transformer_forward.16} parent=11 // pred_check
          %p343 = pneg %p245
        $region38: #{transformer_forward.16} parent=11 // pred_check_branch
          %345 = sbr.rel (%p343) target = $region40
        $region39: #{transformer_forward.16} parent=11 // pred_region
          %347 = vsyncadd [#allocation6], 0
          %s349 = sshll.u32 %s9, 4
          %s350 = int_to_ptr.hbm [resolvable:$true] %s349
          %s351 = sshll.u32 [#allocation7], 4
          %s352 = int_to_ptr.vmem [resolvable:$true] %s351
          %354 = dma.hbm_to_vmem [thread:$0]  %s350, 16, %s352, [#allocation6]
        $region40: #{transformer_forward.16} parent=11 // pred_fallthru
          _
        // Predicated region
        $region41: #{transformer_forward.16} parent=11 // pred_check
          %p355 = pneg %p266
        $region42: #{transformer_forward.16} parent=11 // pred_check_branch
          %357 = sbr.rel (%p355) target = $region44
        $region43: #{transformer_forward.16} parent=11 // pred_region
          %359 = vsyncadd [#allocation9], 0
          %s361 = sshll.u32 %s10, 4
          %s362 = int_to_ptr.hbm [resolvable:$true] %s361
          %s363 = sshll.u32 [#allocation8], 4
          %s364 = int_to_ptr.vmem [resolvable:$true] %s363
          %366 = dma.hbm_to_vmem [thread:$0]  %s362, 16, %s364, [#allocation9]
        $region44: #{transformer_forward.16} parent=11 // pred_fallthru
          _
      $region12: #{transformer_forward.16} parent=5 // pred_fallthru
        _
      %p367 = scmp.lt.s32.totalorder %s20, 2
      // Predicated region
      $region45: #{transformer_forward.16} parent=5 // pred_check
        %p368 = pneg %p367
      $region46: #{transformer_forward.16} parent=5 // pred_check_branch
        %370 = sbr.rel (%p368) target = $region48
      $region47: #{transformer_forward.16} parent=5 // pred_region
        // Predicated region
        $region49: #{transformer_forward.16} parent=47 // pred_check
          %p371 = pneg %p40
        $region50: #{transformer_forward.16} parent=47 // pred_check_branch
          %373 = sbr.rel (%p371) target = $region52
        $region51: #{transformer_forward.16} parent=47 // pred_region
          %p374 = scmp.lt.s32.totalorder %s20, 1
          %s375 = scalar_select %p374, %s20, 1
          %s376 = smul.addr %s375, 4
          %s377 = scalar_lea.vmem %s0, %s376
        $region52: #{transformer_forward.16} parent=47 // pred_fallthru
          _
        // Predicated region
        $region53: #{transformer_forward.16} parent=47 // pred_check
          %p378 = pneg %p66
        $region54: #{transformer_forward.16} parent=47 // pred_check_branch
          %380 = sbr.rel (%p378) target = $region56
        $region55: #{transformer_forward.16} parent=47 // pred_region
          %p381 = scmp.lt.s32.totalorder %s20, 1
          %s382 = scalar_select %p381, %s20, 1
          %s383 = smul.addr %s382, 4
          %s384 = scalar_lea.vmem %s1, %s383
        $region56: #{transformer_forward.16} parent=47 // pred_fallthru
          _
        // Predicated region
        $region57: #{transformer_forward.16} parent=47 // pred_check
          %p385 = pneg %p92
        $region58: #{transformer_forward.16} parent=47 // pred_check_branch
          %387 = sbr.rel (%p385) target = $region60
        $region59: #{transformer_forward.16} parent=47 // pred_region
          %p388 = scmp.lt.s32.totalorder %s20, 1
          %s389 = scalar_select %p388, %s20, 1
          %s390 = scalar_lea.vmem %s2, %s389
        $region60: #{transformer_forward.16} parent=47 // pred_fallthru
          _
      $region48: #{transformer_forward.16} parent=5 // pred_fallthru
        _
      %p391 = scmp.le.s32.totalorder 1, %s20
      %p392 = scmp.lt.s32.totalorder %s20, 3
      %p393 = pnand %p391, %p392
      %p394 = pneg %p393
      // Predicated region
      $region61: #{transformer_forward.16} parent=5 // pred_check
        _
      $region62: #{transformer_forward.16} parent=5 // pred_check_branch
        %396 = sbr.rel (%p393) target = $region64
      $region63: #{transformer_forward.16} parent=5 // pred_region
        %s397 = ssub.s32 %s20, 1
        // Predicated region
        $region65: #{transformer_forward.16} parent=63 // pred_check
          %p398 = pneg %p182
        $region66: #{transformer_forward.16} parent=63 // pred_check_branch
          %400 = sbr.rel (%p398) target = $region68
        $region67: #{transformer_forward.16} parent=63 // pred_region
          %402 = dma.done [#allocation4], 16
        $region68: #{transformer_forward.16} parent=63 // pred_fallthru
          _
        // Predicated region
        $region69: #{transformer_forward.16} parent=63 // pred_check
          %p403 = pneg %p224
        $region70: #{transformer_forward.16} parent=63 // pred_check_branch
          %405 = sbr.rel (%p403) target = $region72
        $region71: #{transformer_forward.16} parent=63 // pred_region
          %407 = dma.done [#allocation6], 16
        $region72: #{transformer_forward.16} parent=63 // pred_fallthru
          _
        // Predicated region
        $region73: #{transformer_forward.16} parent=63 // pred_check
          %p408 = pneg %p245
        $region74: #{transformer_forward.16} parent=63 // pred_check_branch
          %410 = sbr.rel (%p408) target = $region76
        $region75: #{transformer_forward.16} parent=63 // pred_region
          %412 = dma.done [#allocation6], 16
        $region76: #{transformer_forward.16} parent=63 // pred_fallthru
          _
        // Predicated region
        $region77: #{transformer_forward.16} parent=63 // pred_check
          %p413 = pneg %p266
        $region78: #{transformer_forward.16} parent=63 // pred_check_branch
          %415 = sbr.rel (%p413) target = $region80
        $region79: #{transformer_forward.16} parent=63 // pred_region
          %417 = dma.done [#allocation9], 16
        $region80: #{transformer_forward.16} parent=63 // pred_fallthru
          _
        %p418 = scmp.lt.s32.totalorder %s25, 1
        %s419 = scalar_select %p418, %s25, 1
        %s420 = smul.addr %s419, 4
        %s421 = scalar_lea.vmem %s0, %s420
        %p422 = pneg %p46
        %p423 = pneg %p43
        %p424 = scmp.lt.s32.totalorder %s25, 1
        %s425 = scalar_select %p424, %s25, 1
        %s426 = smul.addr %s425, 4
        %s427 = scalar_lea.vmem %s1, %s426
        %p428 = pneg %p72
        %p429 = pneg %p69
        %p430 = scmp.lt.s32.totalorder %s25, 1
        %s431 = scalar_select %p430, %s25, 1
        %s432 = scalar_lea.vmem %s2, %s431
        %p433 = pneg %p98
        %p434 = pneg %p95
        %p435 = pneg %p119
        %p436 = pneg %p116
        %p437 = pneg %p140
        %p438 = pneg %p137
        %p439 = pneg %p161
        %p440 = pneg %p158
        %p441 = pneg %p182
        %p442 = pneg %p179
        %p443 = pneg %p203
        %p444 = pneg %p200
        %p445 = pneg %p224
        %p446 = pneg %p221
        %p447 = pneg %p245
        %p448 = pneg %p242
        %p449 = pneg %p266
        %p450 = pneg %p263
        %p451 = pneg %p292
        %p452 = pneg %p289
        %p453 = scmp.lt.s32.totalorder %s25, 1
        %s454 = scalar_select %p453, %s25, 1
        %s455 = smul.addr %s454, 4
        %s456 = scalar_lea.vmem %s11, %s455
        %p457 = scmp.lt.s32.totalorder %s25, 1
        %s458 = scalar_select %p457, %s25, 1
        %s459 = smul.addr %s458, 4
        %s460 = scalar_lea.vmem %s0, %s459
        %p461 = scmp.lt.s32.totalorder %s25, 1
        %s462 = scalar_select %p461, %s25, 1
        %s463 = smul.addr %s462, 4
        %s464 = scalar_lea.vmem %s1, %s463
        %p465 = scmp.lt.s32.totalorder %s25, 1
        %s466 = scalar_select %p465, %s25, 1
        %s467 = scalar_lea.vmem %s2, %s466
        %p468 = scmp.lt.s32.totalorder %s25, 1
        %s469 = scalar_select %p468, %s25, 1
        %s470 = smul.addr %s469, 4
        %s471 = scalar_lea.vmem %s11, %s470
        %v473 = vld [vmem:[%s460] sm:$0xf]
        %v474 = vld [vmem:[%s464] sm:$0xf]
        %v475 = vld [vmem:[%s3] sm:$0xf]
        %v476 = vld [vmem:[%s3 + $0x4] sm:$0xf]
        %v477 = vld [vmem:[%s3 + $0x8] sm:$0xf]
        %v478 = vld [vmem:[%s3 + $0xc] sm:$0xf]
        %v479 = vld [vmem:[%s4] sm:$0x1]
        %v481 = vperm.slane %v479, 0
        %v487 = vunpack.c.l.b16 %v475
        %v488 = vunpack.c.l.b16 %v476
        %v489 = vunpack.c.l.b16 %v477
        %v490 = vunpack.c.l.b16 %v478
        %v491 = vpack.c.b16 %v488, %v487
        %v492 = vpack.c.b16 %v490, %v489
        %vm495 = vcmask 261120
        %v497 = vsel %vm495, %v473, 0
        %499 = vmatpush.bf16.msra.mxu0 0
        %500 = vmatpush.bf16.msra.mxu0 0
        %501 = vmatpush.bf16.msra.mxu0 0
        %502 = vmatpush.bf16.msra.mxu0 0
        %503 = vmatpush.bf16.msra.mxu0 0
        %504 = vmatpush.bf16.msra.mxu0 0
        %505 = vmatpush.bf16.msra.mxu0 %v492
        %506 = vmatpush.bf16.msra.mxu0 %v491
        %507 = vmatmul.bf16.gmra.mxu0 %v497
        %v508 = vpop.f32.mrf.mxu0
        %v509 = vadd.f32 %v481, %v508
        %v510 = vpop.f32.mrf.mxu0
        %511 = vdwg.mxu0
        %v512 = vld [vmem:[%s5] sm:$0xf]
        %v513 = vld [vmem:[%s5 + $0x4] sm:$0xf]
        %v514 = vld [vmem:[%s5 + $0x8] sm:$0xf]
        %v515 = vld [vmem:[%s5 + $0xc] sm:$0xf]
        %v516 = vld [vmem:[#allocation3] sm:$0x1]
        %v518 = vperm.slane %v516, 0
        %v524 = vunpack.c.l.b16 %v512
        %v525 = vunpack.c.l.b16 %v513
        %v526 = vunpack.c.l.b16 %v514
        %v527 = vunpack.c.l.b16 %v515
        %v528 = vpack.c.b16 %v525, %v524
        %v529 = vpack.c.b16 %v527, %v526
        %v533 = vsel %vm495, %v474, 0
        %535 = vmatpush.bf16.msra.mxu0 0
        %536 = vmatpush.bf16.msra.mxu0 0
        %537 = vmatpush.bf16.msra.mxu0 0
        %538 = vmatpush.bf16.msra.mxu0 0
        %539 = vmatpush.bf16.msra.mxu0 0
        %540 = vmatpush.bf16.msra.mxu0 0
        %541 = vmatpush.bf16.msra.mxu0 %v529
        %542 = vmatpush.bf16.msra.mxu0 %v528
        %543 = vmatmul.bf16.gmra.mxu0 %v533
        %v544 = vpop.f32.mrf.mxu0
        %v545 = vadd.f32 %v518, %v544
        %v546 = vpop.f32.mrf.mxu0
        %547 = vdwg.mxu0
        %v548 = vld [vmem:[%s467] sm:$0x1]
        %vm549 = vcmp.gt.f32.partialorder %v548, 0.5
        %v550 = vsel %vm549, 1, 0
        %v551 = vperm.slane %v550, 0
        %vm552 = vcmp.eq.s32.totalorder %v551, 1
        %v553 = vld [vmem:[%s7] sm:$0xf]
        %v554 = vld [vmem:[%s7 + $0x4] sm:$0xf]
        %v555 = vld [vmem:[%s7 + $0x8] sm:$0xf]
        %v556 = vld [vmem:[%s7 + $0xc] sm:$0xf]
        %v557 = vld [vmem:[#allocation5] sm:$0x1]
        %v558 = vunpack.c.l.bf16 %v473
        %v559 = vld [vmem:[#allocation7] sm:$0x1]
        %v560 = vld [vmem:[#allocation8] sm:$0x1]
        %v561 = vpack.c.bf16 %v509, %v509
        %v562 = vpack.c.bf16 %v545, %v545
        %vm563 = vcmask 64512
        %v565 = vsel %vm563, %v561, 0
        %v568 = vsel %vm563, %v562, 0
        %570 = vmatpush.bf16.xpose.msra.mxu0 0
        %571 = vmatpush.bf16.xpose.msra.mxu0 0
        %572 = vmatpush.bf16.xpose.msra.mxu0 0
        %573 = vmatpush.bf16.xpose.msra.mxu0 0
        %574 = vmatpush.bf16.xpose.msra.mxu0 0
        %575 = vmatpush.bf16.xpose.msra.mxu0 0
        %576 = vmatpush.bf16.xpose.msra.mxu0 0
        %577 = vmatpush.bf16.xpose.msra.mxu0 %v568
        %578 = vmatmul.bf16.gmra.mxu0 %v565
        %v579 = vpop.f32.mrf.mxu0
        %v580 = vadd.f32 0.0, %v579
        %v581 = vpop.f32.mrf.mxu0
        %582 = vdwg.mxu0
        %v583 = vmul.f32 %v580, 0.35355338
        %v584 = vsel %vm552, %v583, -1e+09
        %v585 = vsel %vm563, %v584, -inf
        %586 = vmax.xlane.f32.xlu0 %v585
        %v587 = vpop.xlane.xlu0 %586
        %v588 = vsub.f32 %v584, %v587
        %v589 = vmul.f32 %v588, 1.442695
        %v590 = vpow.pop %v589
        %v591 = vsel %vm563, %v590, 0.0
        %592 = vadd.xlane.f32.xlu0 %v591
        %v593 = vpop.xlane.xlu0 %592
        %v594 = vrcp.pop %v593
        %v595 = vmul.f32 %v593, %v594
        %v596 = vsub.f32 1.0, %v595
        %v597 = vmul.f32 %v594, %v596
        %v598 = vadd.f32 %v594, %v597
        %vm599 = vweird.f32 %v593
        %vm600 = vweird.f32 %v594
        %vm601 = vmor %vm599, %vm600
        %v602 = vsel %vm601, %v594, %v598
        %v603 = vand.u32 2147483647, %v593
        %vm604 = vcmp.eq.f32.partialorder %v603, 8.507059e+37
        %v605 = vand.u32 %v593, 2147483648
        %v606 = vor.u32 1.1754944e-38, %v605
        %v607 = vsel %vm604, %v606, %v602
        %v608 = vmul.f32 %v590, %v607
        %v609 = vpack.c.bf16 %v608, %v608
        %v611 = vunpack.c.l.b16 %v562
        %v612 = vpack.c.b16 %v611, %v611
        %613 = vrot.lane.b32.xlu0 %v612, 96
        %v614 = vpop.permute.xlu0 %613
        %v616 = vsel %vm563, %v609, 0
        %vm618 = vcmask 1043456
        %v620 = vsel %vm618, %v614, 0
        %622 = vmatpush.bf16.msra.mxu0 0
        %623 = vmatpush.bf16.msra.mxu0 0
        %624 = vmatpush.bf16.msra.mxu0 0
        %625 = vmatpush.bf16.msra.mxu0 0
        %626 = vmatpush.bf16.msra.mxu0 0
        %627 = vmatpush.bf16.msra.mxu0 0
        %628 = vmatpush.bf16.msra.mxu0 0
        %629 = vmatpush.bf16.msra.mxu0 %v620
        %630 = vmatmul.bf16.gmra.mxu0 %v616
        %v631 = vpop.f32.mrf.mxu0
        %v632 = vadd.f32 0.0, %v631
        %v633 = vpop.f32.mrf.mxu0
        %634 = vdwg.mxu0
        %635 = vst.msk [vmem:[#allocation2] sm:$0xff] %vm563, %v632
        %v637 = vunpack.c.l.b16 %v561
        %v638 = vpack.c.b16 %v637, %v637
        %639 = vrot.lane.b32.xlu0 %v638, 120
        %v640 = vpop.permute.xlu0 %639
        %641 = vrot.lane.b32.xlu0 %v612, 120
        %v642 = vpop.permute.xlu0 %641
        %v644 = vsel %vm563, %v640, 0
        %v647 = vsel %vm563, %v642, 0
        %649 = vmatpush.bf16.xpose.msra.mxu0 0
        %650 = vmatpush.bf16.xpose.msra.mxu0 0
        %651 = vmatpush.bf16.xpose.msra.mxu0 0
        %652 = vmatpush.bf16.xpose.msra.mxu0 0
        %653 = vmatpush.bf16.xpose.msra.mxu0 0
        %654 = vmatpush.bf16.xpose.msra.mxu0 0
        %655 = vmatpush.bf16.xpose.msra.mxu0 0
        %656 = vmatpush.bf16.xpose.msra.mxu0 %v647
        %657 = vmatmul.bf16.gmra.mxu0 %v644
        %v658 = vpop.f32.mrf.mxu0
        %v659 = vadd.f32 0.0, %v658
        %v660 = vpop.f32.mrf.mxu0
        %661 = vdwg.mxu0
        %v662 = vmul.f32 %v659, 0.35355338
        %v663 = vsel %vm552, %v662, -1e+09
        %v664 = vsel %vm563, %v663, -inf
        %665 = vmax.xlane.f32.xlu0 %v664
        %v666 = vpop.xlane.xlu0 %665
        %v667 = vsub.f32 %v663, %v666
        %v668 = vmul.f32 %v667, 1.442695
        %v669 = vpow.pop %v668
        %v670 = vsel %vm563, %v669, 0.0
        %671 = vadd.xlane.f32.xlu0 %v670
        %v672 = vpop.xlane.xlu0 %671
        %v673 = vrcp.pop %v672
        %v674 = vmul.f32 %v672, %v673
        %v675 = vsub.f32 1.0, %v674
        %v676 = vmul.f32 %v673, %v675
        %v677 = vadd.f32 %v673, %v676
        %vm678 = vweird.f32 %v672
        %vm679 = vweird.f32 %v673
        %vm680 = vmor %vm678, %vm679
        %v681 = vsel %vm680, %v673, %v677
        %v682 = vand.u32 2147483647, %v672
        %vm683 = vcmp.eq.f32.partialorder %v682, 8.507059e+37
        %v684 = vand.u32 %v672, 2147483648
        %v685 = vor.u32 1.1754944e-38, %v684
        %v686 = vsel %vm683, %v685, %v681
        %v687 = vmul.f32 %v669, %v686
        %v688 = vpack.c.bf16 %v687, %v687
        %689 = vrot.lane.b32.xlu0 %v612, 88
        %v690 = vpop.permute.xlu0 %689
        %v692 = vsel %vm563, %v688, 0
        %v695 = vsel %vm618, %v690, 0
        %697 = vmatpush.bf16.msra.mxu0 0
        %698 = vmatpush.bf16.msra.mxu0 0
        %699 = vmatpush.bf16.msra.mxu0 0
        %700 = vmatpush.bf16.msra.mxu0 0
        %701 = vmatpush.bf16.msra.mxu0 0
        %702 = vmatpush.bf16.msra.mxu0 0
        %703 = vmatpush.bf16.msra.mxu0 0
        %704 = vmatpush.bf16.msra.mxu0 %v695
        %705 = vmatmul.bf16.gmra.mxu0 %v692
        %v706 = vpop.f32.mrf.mxu0
        %v707 = vadd.f32 0.0, %v706
        %v708 = vpop.f32.mrf.mxu0
        %709 = vdwg.mxu0
        %711 = vrot.lane.b32.xlu0 %v707, 8
        %v712 = vpop.permute.xlu0 %711
        %vm714 = vcmask 130112
        %715 = vst.msk [vmem:[#allocation2] sm:$0xff] %vm714, %v712
        %716 = vrot.lane.b32.xlu0 %v638, 112
        %v717 = vpop.permute.xlu0 %716
        %718 = vrot.lane.b32.xlu0 %v612, 112
        %v719 = vpop.permute.xlu0 %718
        %v721 = vsel %vm563, %v717, 0
        %v724 = vsel %vm563, %v719, 0
        %726 = vmatpush.bf16.xpose.msra.mxu0 0
        %727 = vmatpush.bf16.xpose.msra.mxu0 0
        %728 = vmatpush.bf16.xpose.msra.mxu0 0
        %729 = vmatpush.bf16.xpose.msra.mxu0 0
        %730 = vmatpush.bf16.xpose.msra.mxu0 0
        %731 = vmatpush.bf16.xpose.msra.mxu0 0
        %732 = vmatpush.bf16.xpose.msra.mxu0 0
        %733 = vmatpush.bf16.xpose.msra.mxu0 %v724
        %734 = vmatmul.bf16.gmra.mxu0 %v721
        %v735 = vpop.f32.mrf.mxu0
        %v736 = vadd.f32 0.0, %v735
        %v737 = vpop.f32.mrf.mxu0
        %738 = vdwg.mxu0
        %v739 = vmul.f32 %v736, 0.35355338
        %v740 = vsel %vm552, %v739, -1e+09
        %v741 = vsel %vm563, %v740, -inf
        %742 = vmax.xlane.f32.xlu0 %v741
        %v743 = vpop.xlane.xlu0 %742
        %v744 = vsub.f32 %v740, %v743
        %v745 = vmul.f32 %v744, 1.442695
        %v746 = vpow.pop %v745
        %v747 = vsel %vm563, %v746, 0.0
        %748 = vadd.xlane.f32.xlu0 %v747
        %v749 = vpop.xlane.xlu0 %748
        %v750 = vrcp.pop %v749
        %v751 = vmul.f32 %v749, %v750
        %v752 = vsub.f32 1.0, %v751
        %v753 = vmul.f32 %v750, %v752
        %v754 = vadd.f32 %v750, %v753
        %vm755 = vweird.f32 %v749
        %vm756 = vweird.f32 %v750
        %vm757 = vmor %vm755, %vm756
        %v758 = vsel %vm757, %v750, %v754
        %v759 = vand.u32 2147483647, %v749
        %vm760 = vcmp.eq.f32.partialorder %v759, 8.507059e+37
        %v761 = vand.u32 %v749, 2147483648
        %v762 = vor.u32 1.1754944e-38, %v761
        %v763 = vsel %vm760, %v762, %v758
        %v764 = vmul.f32 %v746, %v763
        %v765 = vpack.c.bf16 %v764, %v764
        %766 = vrot.lane.b32.xlu0 %v612, 80
        %v767 = vpop.permute.xlu0 %766
        %v769 = vsel %vm563, %v765, 0
        %v772 = vsel %vm618, %v767, 0
        %774 = vmatpush.bf16.msra.mxu0 0
        %775 = vmatpush.bf16.msra.mxu0 0
        %776 = vmatpush.bf16.msra.mxu0 0
        %777 = vmatpush.bf16.msra.mxu0 0
        %778 = vmatpush.bf16.msra.mxu0 0
        %779 = vmatpush.bf16.msra.mxu0 0
        %780 = vmatpush.bf16.msra.mxu0 0
        %781 = vmatpush.bf16.msra.mxu0 %v772
        %782 = vmatmul.bf16.gmra.mxu0 %v769
        %v783 = vpop.f32.mrf.mxu0
        %v784 = vadd.f32 0.0, %v783
        %v785 = vpop.f32.mrf.mxu0
        %786 = vdwg.mxu0
        %788 = vrot.lane.b32.xlu0 %v784, 16
        %v789 = vpop.permute.xlu0 %788
        %vm791 = vcmask 195712
        %792 = vst.msk [vmem:[#allocation2] sm:$0xff] %vm791, %v789
        %793 = vrot.lane.b32.xlu0 %v638, 104
        %v794 = vpop.permute.xlu0 %793
        %795 = vrot.lane.b32.xlu0 %v612, 104
        %v796 = vpop.permute.xlu0 %795
        %v798 = vsel %vm563, %v794, 0
        %v801 = vsel %vm563, %v796, 0
        %803 = vmatpush.bf16.xpose.msra.mxu0 0
        %804 = vmatpush.bf16.xpose.msra.mxu0 0
        %805 = vmatpush.bf16.xpose.msra.mxu0 0
        %806 = vmatpush.bf16.xpose.msra.mxu0 0
        %807 = vmatpush.bf16.xpose.msra.mxu0 0
        %808 = vmatpush.bf16.xpose.msra.mxu0 0
        %809 = vmatpush.bf16.xpose.msra.mxu0 0
        %810 = vmatpush.bf16.xpose.msra.mxu0 %v801
        %811 = vmatmul.bf16.gmra.mxu0 %v798
        %v812 = vpop.f32.mrf.mxu0
        %v813 = vadd.f32 0.0, %v812
        %v814 = vpop.f32.mrf.mxu0
        %815 = vdwg.mxu0
        %v816 = vmul.f32 %v813, 0.35355338
        %v817 = vsel %vm552, %v816, -1e+09
        %v818 = vsel %vm563, %v817, -inf
        %819 = vmax.xlane.f32.xlu0 %v818
        %v820 = vpop.xlane.xlu0 %819
        %v821 = vsub.f32 %v817, %v820
        %v822 = vmul.f32 %v821, 1.442695
        %v823 = vpow.pop %v822
        %v824 = vsel %vm563, %v823, 0.0
        %825 = vadd.xlane.f32.xlu0 %v824
        %v826 = vpop.xlane.xlu0 %825
        %v827 = vrcp.pop %v826
        %v828 = vmul.f32 %v826, %v827
        %v829 = vsub.f32 1.0, %v828
        %v830 = vmul.f32 %v827, %v829
        %v831 = vadd.f32 %v827, %v830
        %vm832 = vweird.f32 %v826
        %vm833 = vweird.f32 %v827
        %vm834 = vmor %vm832, %vm833
        %v835 = vsel %vm834, %v827, %v831
        %v836 = vand.u32 2147483647, %v826
        %vm837 = vcmp.eq.f32.partialorder %v836, 8.507059e+37
        %v838 = vand.u32 %v826, 2147483648
        %v839 = vor.u32 1.1754944e-38, %v838
        %v840 = vsel %vm837, %v839, %v835
        %v841 = vmul.f32 %v823, %v840
        %v842 = vpack.c.bf16 %v841, %v841
        %843 = vrot.lane.b32.xlu0 %v612, 72
        %v844 = vpop.permute.xlu0 %843
        %v846 = vsel %vm563, %v842, 0
        %v849 = vsel %vm618, %v844, 0
        %851 = vmatpush.bf16.msra.mxu0 0
        %852 = vmatpush.bf16.msra.mxu0 0
        %853 = vmatpush.bf16.msra.mxu0 0
        %854 = vmatpush.bf16.msra.mxu0 0
        %855 = vmatpush.bf16.msra.mxu0 0
        %856 = vmatpush.bf16.msra.mxu0 0
        %857 = vmatpush.bf16.msra.mxu0 0
        %858 = vmatpush.bf16.msra.mxu0 %v849
        %859 = vmatmul.bf16.gmra.mxu0 %v846
        %v860 = vpop.f32.mrf.mxu0
        %v861 = vadd.f32 0.0, %v860
        %v862 = vpop.f32.mrf.mxu0
        %863 = vdwg.mxu0
        %865 = vrot.lane.b32.xlu0 %v861, 24
        %v866 = vpop.permute.xlu0 %865
        %vm868 = vcmask 261312
        %869 = vst.msk [vmem:[#allocation2] sm:$0xff] %vm868, %v866
        %v870 = vld [vmem:[#allocation2] sm:$0xff]
        %v871 = vpack.c.bf16 %v870, %v870
        %v873 = vperm.slane %v557, 0
        %v879 = vunpack.c.l.b16 %v553
        %v880 = vunpack.c.l.b16 %v554
        %v881 = vunpack.c.l.b16 %v555
        %v882 = vunpack.c.l.b16 %v556
        %v883 = vpack.c.b16 %v880, %v879
        %v884 = vpack.c.b16 %v882, %v881
        %v888 = vsel %vm495, %v871, 0
        %890 = vmatpush.bf16.msra.mxu0 0
        %891 = vmatpush.bf16.msra.mxu0 0
        %892 = vmatpush.bf16.msra.mxu0 0
        %893 = vmatpush.bf16.msra.mxu0 0
        %894 = vmatpush.bf16.msra.mxu0 0
        %895 = vmatpush.bf16.msra.mxu0 0
        %896 = vmatpush.bf16.msra.mxu0 %v884
        %897 = vmatpush.bf16.msra.mxu0 %v883
        %898 = vmatmul.bf16.gmra.mxu0 %v888
        %v899 = vpop.f32.mrf.mxu0
        %v900 = vadd.f32 %v873, %v899
        %v901 = vpop.f32.mrf.mxu0
        %902 = vdwg.mxu0
        %v903 = vadd.f32 %v558, %v900
        %v904 = vsel %vm495, %v903, 0.0
        %905 = vadd.xlane.f32.xlu0 %v904
        %v906 = vpop.xlane.xlu0 %905
        %v907 = vrcp.pop 32.0
        %v908 = vmul.f32 32.0, %v907
        %v909 = vsub.f32 1.0, %v908
        %v910 = vmul.f32 %v907, %v909
        %v911 = vadd.f32 %v907, %v910
        %vm912 = vweird.f32 %v907
        %v913 = vsel %vm912, %v907, %v911
        %v914 = vmul.f32 %v906, %v913
        %v915 = vsub.f32 %v903, %v914
        %v916 = vmul.f32 %v915, %v915
        %v917 = vsel %vm495, %v916, 0.0
        %918 = vadd.xlane.f32.xlu0 %v917
        %v919 = vpop.xlane.xlu0 %918
        %v920 = vmul.f32 %v919, %v913
        %v921 = vadd.f32 %v920, 1e-05
        %v922 = vrsqrt.pop %v921
        %v923 = vmul.f32 %v922, %v921
        %v924 = vmul.f32 %v923, %v922
        %v925 = vmul.f32 0.5, %v924
        %v926 = vsub.f32 1.5, %v925
        %v927 = vmul.f32 %v922, %v926
        %vm928 = vweird.f32 %v921
        %vm929 = vweird.f32 %v922
        %vm930 = vmor %vm928, %vm929
        %v931 = vsel %vm930, %v922, %v927
        %v932 = vmul.f32 %v915, %v931
        %v934 = vperm.slane %v559, 0
        %v936 = vmul.f32 %v932, %v934
        %v938 = vperm.slane %v560, 0
        %v940 = vadd.f32 %v936, %v938
        %v941 = vpack.c.bf16 %v940, %v940
        %vm942 = vcmask 257024
        %943 = vst.msk [vmem:[%s471] sm:$0xf] %vm942, %v941
        %p944 = scmp.lt.s32.totalorder %s25, 1
        %s945 = scalar_select %p944, %s25, 1
        %s946 = smul.addr %s945, 4
        %s947 = scalar_lea.vmem %s11, %s946
        // Predicated region
        $region81: #{transformer_forward.16} parent=63 // pred_check
          %p948 = pneg %p289
        $region82: #{transformer_forward.16} parent=63 // pred_check_branch
          %950 = sbr.rel (%p948) target = $region84
        $region83: #{transformer_forward.16} parent=63 // pred_region
          _
        $region84: #{transformer_forward.16} parent=63 // pred_fallthru
          _
      $region64: #{transformer_forward.16} parent=5 // pred_fallthru
        _
      %p951 = scmp.le.s32.totalorder 2, %s20
      // Predicated region
      $region85: #{transformer_forward.16} parent=5 // pred_check
        %p952 = pneg %p951
      $region86: #{transformer_forward.16} parent=5 // pred_check_branch
        %954 = sbr.rel (%p952) target = $region88
      $region87: #{transformer_forward.16} parent=5 // pred_region
        %s955 = ssub.s32 %s20, 2
        // Predicated region
        $region89: #{transformer_forward.16} parent=87 // pred_check
          %p956 = pneg %p295
        $region90: #{transformer_forward.16} parent=87 // pred_check_branch
          %958 = sbr.rel (%p956) target = $region92
        $region91: #{transformer_forward.16} parent=87 // pred_region
          %p959 = scmp.lt.s32.totalorder %s26, 1
          %s960 = scalar_select %p959, %s26, 1
          %s961 = smul.addr %s960, 4
          %s962 = scalar_lea.vmem %s11, %s961
        $region92: #{transformer_forward.16} parent=87 // pred_fallthru
          _
      $region88: #{transformer_forward.16} parent=5 // pred_fallthru
        _
    $region6: #{transformer_forward.16} parent=1 // loop_footer
      %s24 = sadd.s32 1, %s20
    $region7: #{transformer_forward.16} parent=1 // loop_footer_branch
      %19 = sbr.rel target = $region3
    $region8: #{transformer_forward.16} parent=1 // loop_exit
      _
    %963 = vsyncpa [#allocation4], 1
    %s964 = scalar_lea.sflag [#allocation4], 1
    %965 = vsyncpa %s964, 1
    %966 = vsyncpa [#allocation6], 1
    %967 = vsyncpa [#allocation9], 1

// kernel: transformer_forward.17
$region0: #{transformer_forward.17}
  #allocation0 [shape = 'u32[]', space=smem, size = 0x4, offset = 0x4, fixed_abs, tag = 'smem constant byte address 0x4 - core index']
  #allocation1 [shape = 'u32[72,128]{1,0:T(1,128)}', space=vmem, size = 0x9000, scoped, tag = 'internal scratch']
  %s0 = inlined_call_operand.vmem [shape: bf16[16,32], index: 0, kind: input, shape index: {}]
  %s1 = inlined_call_operand.vmem [shape: bf16[32,64], index: 1, kind: input, shape index: {}]
  %s2 = inlined_call_operand.hbm [shape: f32[1,64], index: 2, kind: input, shape index: {}]
  %s3 = inlined_call_operand.vmem [shape: bf16[64,32], index: 3, kind: input, shape index: {}]
  %s4 = inlined_call_operand.hbm [shape: f32[1,32], index: 4, kind: input, shape index: {}]
  %s5 = inlined_call_operand.hbm [shape: f32[1,32], index: 5, kind: input, shape index: {}]
  %s6 = inlined_call_operand.hbm [shape: f32[1,32], index: 6, kind: input, shape index: {}]
  %s7 = inlined_call_operand.vmem [shape: bf16[16,32], index: 7, kind: output, shape index: {}]
  %s8 = sld [smem:[#allocation0]]
  $region54: #{transformer_forward.17} parent=0
    _
  %s10 = ssub.s32 1, %s8
  %s11 = scalar_select 0, %s10, %s8
  $region1: #{transformer_forward.17} parent=0
    #allocation2 [shape = 'u8[512]{0}', space=vmem, size = 0x400, scoped, tag = 'input window, operand 2, single buffered']
    #allocation3 [shape = 's32[1]{0}', space=sflag, size = 0x4, scoped, tag = 'scoped memory for transformer_forward.17']
    #allocation4 [shape = 'u8[512]{0}', space=vmem, size = 0x400, scoped, tag = 'input window, operand 4, single buffered']
    #allocation5 [shape = 's32[1]{0}', space=sflag, size = 0x4, scoped, tag = 'scoped memory for transformer_forward.17']
    #allocation6 [shape = 'u8[512]{0}', space=vmem, size = 0x400, scoped, tag = 'input window, operand 5, single buffered']
    #allocation7 [shape = 'u8[512]{0}', space=vmem, size = 0x400, scoped, tag = 'input window, operand 6, single buffered']
    #allocation8 [shape = 's32[1]{0}', space=sflag, size = 0x4, scoped, tag = 'scoped memory for transformer_forward.17']
    %12 = vsyncpa [#allocation3], 0
    %13 = vsyncpa [#allocation5], 0
    %14 = vsyncpa [#allocation8], 0
    // Predicated region
    $region2: #{transformer_forward.17} parent=1 // pred_check
      _
    $region3: #{transformer_forward.17} parent=1 // pred_check_branch
      %16 = sbr.rel (0) target = $region5
    $region4: #{transformer_forward.17} parent=1 // pred_region
      _
    $region5: #{transformer_forward.17} parent=1 // pred_fallthru
      _
    // Predicated region
    $region6: #{transformer_forward.17} parent=1 // pred_check
      _
    $region7: #{transformer_forward.17} parent=1 // pred_check_branch
      %18 = sbr.rel (0) target = $region9
    $region8: #{transformer_forward.17} parent=1 // pred_region
      _
    $region9: #{transformer_forward.17} parent=1 // pred_fallthru
      _
    // Predicated region
    $region10: #{transformer_forward.17} parent=1 // pred_check
      _
    $region11: #{transformer_forward.17} parent=1 // pred_check_branch
      %20 = sbr.rel (0) target = $region13
    $region12: #{transformer_forward.17} parent=1 // pred_region
      %22 = vsyncadd [#allocation3], 0
      %s24 = sshll.u32 %s2, 4
      %s25 = int_to_ptr.hbm [resolvable:$true] %s24
      %s26 = sshll.u32 [#allocation2], 4
      %s27 = int_to_ptr.vmem [resolvable:$true] %s26
      %29 = dma.hbm_to_vmem [thread:$0]  %s25, 16, %s27, [#allocation3]
    $region13: #{transformer_forward.17} parent=1 // pred_fallthru
      _
    // Predicated region
    $region14: #{transformer_forward.17} parent=1 // pred_check
      _
    $region15: #{transformer_forward.17} parent=1 // pred_check_branch
      %31 = sbr.rel (0) target = $region17
    $region16: #{transformer_forward.17} parent=1 // pred_region
      _
    $region17: #{transformer_forward.17} parent=1 // pred_fallthru
      _
    // Predicated region
    $region18: #{transformer_forward.17} parent=1 // pred_check
      _
    $region19: #{transformer_forward.17} parent=1 // pred_check_branch
      %33 = sbr.rel (0) target = $region21
    $region20: #{transformer_forward.17} parent=1 // pred_region
      %35 = vsyncadd [#allocation5], 0
      %s37 = sshll.u32 %s4, 4
      %s38 = int_to_ptr.hbm [resolvable:$true] %s37
      %s39 = sshll.u32 [#allocation4], 4
      %s40 = int_to_ptr.vmem [resolvable:$true] %s39
      %42 = dma.hbm_to_vmem [thread:$0]  %s38, 16, %s40, [#allocation5]
    $region21: #{transformer_forward.17} parent=1 // pred_fallthru
      _
    // Predicated region
    $region22: #{transformer_forward.17} parent=1 // pred_check
      _
    $region23: #{transformer_forward.17} parent=1 // pred_check_branch
      %44 = sbr.rel (0) target = $region25
    $region24: #{transformer_forward.17} parent=1 // pred_region
      %46 = vsyncadd [#allocation5], 0
      %s48 = sshll.u32 %s5, 4
      %s49 = int_to_ptr.hbm [resolvable:$true] %s48
      %s50 = sshll.u32 [#allocation6], 4
      %s51 = int_to_ptr.vmem [resolvable:$true] %s50
      %53 = dma.hbm_to_vmem [thread:$0]  %s49, 16, %s51, [#allocation5]
    $region25: #{transformer_forward.17} parent=1 // pred_fallthru
      _
    // Predicated region
    $region26: #{transformer_forward.17} parent=1 // pred_check
      _
    $region27: #{transformer_forward.17} parent=1 // pred_check_branch
      %55 = sbr.rel (0) target = $region29
    $region28: #{transformer_forward.17} parent=1 // pred_region
      %57 = vsyncadd [#allocation8], 0
      %s59 = sshll.u32 %s6, 4
      %s60 = int_to_ptr.hbm [resolvable:$true] %s59
      %s61 = sshll.u32 [#allocation7], 4
      %s62 = int_to_ptr.vmem [resolvable:$true] %s61
      %64 = dma.hbm_to_vmem [thread:$0]  %s60, 16, %s62, [#allocation8]
    $region29: #{transformer_forward.17} parent=1 // pred_fallthru
      _
    // Predicated region
    $region30: #{transformer_forward.17} parent=1 // pred_check
      _
    $region31: #{transformer_forward.17} parent=1 // pred_check_branch
      %66 = sbr.rel (0) target = $region33
    $region32: #{transformer_forward.17} parent=1 // pred_region
      %68 = dma.done [#allocation3], 16
    $region33: #{transformer_forward.17} parent=1 // pred_fallthru
      _
    // Predicated region
    $region34: #{transformer_forward.17} parent=1 // pred_check
      _
    $region35: #{transformer_forward.17} parent=1 // pred_check_branch
      %70 = sbr.rel (0) target = $region37
    $region36: #{transformer_forward.17} parent=1 // pred_region
      %72 = dma.done [#allocation5], 16
    $region37: #{transformer_forward.17} parent=1 // pred_fallthru
      _
    // Predicated region
    $region38: #{transformer_forward.17} parent=1 // pred_check
      _
    $region39: #{transformer_forward.17} parent=1 // pred_check_branch
      %74 = sbr.rel (0) target = $region41
    $region40: #{transformer_forward.17} parent=1 // pred_region
      %76 = dma.done [#allocation5], 16
    $region41: #{transformer_forward.17} parent=1 // pred_fallthru
      _
    // Predicated region
    $region42: #{transformer_forward.17} parent=1 // pred_check
      _
    $region43: #{transformer_forward.17} parent=1 // pred_check_branch
      %78 = sbr.rel (0) target = $region45
    $region44: #{transformer_forward.17} parent=1 // pred_region
      %80 = dma.done [#allocation8], 16
    $region45: #{transformer_forward.17} parent=1 // pred_fallthru
      _
    %v82 = vld [vmem:[%s0] sm:$0xf]
    %v83 = vld [vmem:[%s0 + $0x4] sm:$0xf]
    %v84 = vld [vmem:[%s1] sm:$0xf]
    %v85 = vld [vmem:[%s1 + $0x4] sm:$0xf]
    %v86 = vld [vmem:[%s1 + $0x8] sm:$0xf]
    %v87 = vld [vmem:[%s1 + $0xc] sm:$0xf]
    %v88 = vld [vmem:[#allocation2] sm:$0x1]
    %v90 = vperm.slane %v88, 0
    %v94 = vunpack.c.l.b16 %v82
    %v95 = vunpack.c.l.b16 %v83
    %v96 = vpack.c.b16 %v95, %v94
    %v101 = vunpack.c.l.b16 %v84
    %v102 = vunpack.c.l.b16 %v85
    %v103 = vunpack.c.l.b16 %v86
    %v104 = vunpack.c.l.b16 %v87
    %v105 = vpack.c.b16 %v102, %v101
    %v106 = vpack.c.b16 %v104, %v103
    %vm109 = vcmask 261120
    %v111 = vsel %vm109, %v96, 0
    %113 = vmatpush.bf16.msra.mxu0 0
    %114 = vmatpush.bf16.msra.mxu0 0
    %115 = vmatpush.bf16.msra.mxu0 0
    %116 = vmatpush.bf16.msra.mxu0 0
    %117 = vmatpush.bf16.msra.mxu0 0
    %118 = vmatpush.bf16.msra.mxu0 0
    %119 = vmatpush.bf16.msra.mxu0 %v106
    %120 = vmatpush.bf16.msra.mxu0 %v105
    %121 = vmatmul.bf16.gmra.mxu0 %v111
    %v122 = vpop.f32.mrf.mxu0
    %v123 = vadd.f32 %v90, %v122
    %v124 = vpop.f32.mrf.mxu0
    %v125 = vadd.f32 %v90, %v124
    %126 = vdwg.mxu0
    %v127 = vmax.f32 %v123, 0.0
    %v128 = vmax.f32 %v125, 0.0
    %v129 = vpack.c.bf16 %v128, %v127
    %v130 = vld [vmem:[%s3] sm:$0xf]
    %v131 = vld [vmem:[%s3 + $0x4] sm:$0xf]
    %v132 = vld [vmem:[%s3 + $0x8] sm:$0xf]
    %v133 = vld [vmem:[%s3 + $0xc] sm:$0xf]
    %v134 = vld [vmem:[%s3 + $0x10] sm:$0xf]
    %v135 = vld [vmem:[%s3 + $0x14] sm:$0xf]
    %v136 = vld [vmem:[%s3 + $0x18] sm:$0xf]
    %v137 = vld [vmem:[%s3 + $0x1c] sm:$0xf]
    %v138 = vld [vmem:[#allocation4] sm:$0x1]
    %v140 = vperm.slane %v138, 0
    %v150 = vunpack.c.l.b16 %v130
    %v151 = vunpack.c.l.b16 %v131
    %v152 = vunpack.c.l.b16 %v132
    %v153 = vunpack.c.l.b16 %v133
    %v154 = vunpack.c.l.b16 %v134
    %v155 = vunpack.c.l.b16 %v135
    %v156 = vunpack.c.l.b16 %v136
    %v157 = vunpack.c.l.b16 %v137
    %v158 = vpack.c.b16 %v151, %v150
    %v159 = vpack.c.b16 %v153, %v152
    %v160 = vpack.c.b16 %v155, %v154
    %v161 = vpack.c.b16 %v157, %v156
    %vm166 = vcmask 523264
    %v168 = vsel %vm166, %v129, 0
    %170 = vmatpush.bf16.msra.mxu0 0
    %171 = vmatpush.bf16.msra.mxu0 0
    %172 = vmatpush.bf16.msra.mxu0 0
    %173 = vmatpush.bf16.msra.mxu0 0
    %174 = vmatpush.bf16.msra.mxu0 %v161
    %175 = vmatpush.bf16.msra.mxu0 %v160
    %176 = vmatpush.bf16.msra.mxu0 %v159
    %177 = vmatpush.bf16.msra.mxu0 %v158
    %178 = vmatmul.bf16.gmra.mxu0 %v168
    %v179 = vpop.f32.mrf.mxu0
    %v180 = vadd.f32 %v140, %v179
    %v181 = vpop.f32.mrf.mxu0
    %v182 = vadd.f32 %v140, %v181
    %183 = vdwg.mxu0
    %v184 = vunpack.c.l.bf16 %v82
    %v185 = vunpack.c.l.bf16 %v83
    %v186 = vadd.f32 %v184, %v180
    %v187 = vadd.f32 %v185, %v182
    %v188 = vsel %vm109, %v186, 0.0
    %189 = vadd.xlane.f32.xlu0 %v188
    %v190 = vpop.xlane.xlu0 %189
    %v191 = vsel %vm109, %v187, 0.0
    %192 = vadd.xlane.f32.xlu0 %v191
    %v193 = vpop.xlane.xlu0 %192
    %v194 = vrcp.pop 32.0
    %v195 = vmul.f32 32.0, %v194
    %v196 = vsub.f32 1.0, %v195
    %v197 = vmul.f32 %v194, %v196
    %v198 = vadd.f32 %v194, %v197
    %vm199 = vweird.f32 %v194
    %v200 = vsel %vm199, %v194, %v198
    %v201 = vmul.f32 %v190, %v200
    %v202 = vmul.f32 %v193, %v200
    %v203 = vsub.f32 %v186, %v201
    %v204 = vsub.f32 %v187, %v202
    %v205 = vmul.f32 %v203, %v203
    %v206 = vmul.f32 %v204, %v204
    %v207 = vsel %vm109, %v205, 0.0
    %208 = vadd.xlane.f32.xlu0 %v207
    %v209 = vpop.xlane.xlu0 %208
    %v210 = vsel %vm109, %v206, 0.0
    %211 = vadd.xlane.f32.xlu0 %v210
    %v212 = vpop.xlane.xlu0 %211
    %v213 = vmul.f32 %v209, %v200
    %v214 = vmul.f32 %v212, %v200
    %v215 = vadd.f32 %v213, 1e-05
    %v216 = vadd.f32 %v214, 1e-05
    %v217 = vrsqrt.pop %v215
    %v218 = vmul.f32 %v217, %v215
    %v219 = vmul.f32 %v218, %v217
    %v220 = vmul.f32 0.5, %v219
    %v221 = vsub.f32 1.5, %v220
    %v222 = vmul.f32 %v217, %v221
    %vm223 = vweird.f32 %v215
    %vm224 = vweird.f32 %v217
    %vm225 = vmor %vm223, %vm224
    %v226 = vsel %vm225, %v217, %v222
    %v227 = vrsqrt.pop %v216
    %v228 = vmul.f32 %v227, %v216
    %v229 = vmul.f32 %v228, %v227
    %v230 = vmul.f32 0.5, %v229
    %v231 = vsub.f32 1.5, %v230
    %v232 = vmul.f32 %v227, %v231
    %vm233 = vweird.f32 %v216
    %vm234 = vweird.f32 %v227
    %vm235 = vmor %vm233, %vm234
    %v236 = vsel %vm235, %v227, %v232
    %v237 = vmul.f32 %v203, %v226
    %v238 = vmul.f32 %v204, %v236
    %v239 = vld [vmem:[#allocation6] sm:$0x1]
    %v241 = vperm.slane %v239, 0
    %v243 = vmul.f32 %v237, %v241
    %v244 = vmul.f32 %v238, %v241
    %v245 = vld [vmem:[#allocation7] sm:$0x1]
    %v247 = vperm.slane %v245, 0
    %v249 = vadd.f32 %v243, %v247
    %v250 = vadd.f32 %v244, %v247
    %v251 = vpack.c.bf16 %v249, %v249
    %v252 = vpack.c.bf16 %v250, %v250
    %vm253 = vcmask 257024
    %254 = vst.msk [vmem:[%s7] sm:$0xf] %vm253, %v251
    %255 = vst.msk [vmem:[%s7 + $0x4] sm:$0xf] %vm253, %v252
    // Predicated region
    $region46: #{transformer_forward.17} parent=1 // pred_check
      _
    $region47: #{transformer_forward.17} parent=1 // pred_check_branch
      %257 = sbr.rel (0) target = $region49
    $region48: #{transformer_forward.17} parent=1 // pred_region
      _
    $region49: #{transformer_forward.17} parent=1 // pred_fallthru
      _
    // Predicated region
    $region50: #{transformer_forward.17} parent=1 // pred_check
      _
    $region51: #{transformer_forward.17} parent=1 // pred_check_branch
      %259 = sbr.rel (0) target = $region53
    $region52: #{transformer_forward.17} parent=1 // pred_region
      _
    $region53: #{transformer_forward.17} parent=1 // pred_fallthru
      _
    %260 = vsyncpa [#allocation3], 1
    %261 = vsyncpa [#allocation5], 1
    %262 = vsyncpa [#allocation8], 1

// kernel: transformer_forward.21
$region0: #{transformer_forward.21}
  #allocation0 [shape = 'u32[]', space=smem, size = 0x4, offset = 0x4, fixed_abs, tag = 'smem constant byte address 0x4 - core index']
  #allocation1 [shape = 'u32[72,128]{1,0:T(1,128)}', space=vmem, size = 0x9000, scoped, tag = 'internal scratch']
  #allocation2 [shape = 'f32[16,128]{1,0:T(8,128)}', space=vmem, size = 0x2000, scoped, tag = 'scratch operand']
  %s0 = inlined_call_operand.vmem [shape: bf16[16,32], index: 0, kind: input, shape index: {}]
  %s1 = inlined_call_operand.vmem [shape: bf16[32,128], index: 1, kind: input, shape index: {}]
  %s2 = inlined_call_operand.vmem [shape: f32[1,128], index: 2, kind: input, shape index: {}]
  %s3 = inlined_call_operand.hbm [shape: f32[16,128], index: 3, kind: output, shape index: {}]
  %s4 = sld [smem:[#allocation0]]
  $region30: #{transformer_forward.21} parent=0
    _
  %s6 = ssub.s32 1, %s4
  %s7 = scalar_select 0, %s6, %s4
  $region1: #{transformer_forward.21} parent=0
    #allocation3 [shape = 'u8[8192]{0}', space=vmem, size = 0x2000, scoped, tag = 'output window, operand 0, single buffered']
    #allocation4 [shape = 's32[1]{0}', space=sflag, size = 0x4, scoped, tag = 'scoped memory for transformer_forward.21']
    %8 = vsyncpa [#allocation4], 0
    // Predicated region
    $region2: #{transformer_forward.21} parent=1 // pred_check
      _
    $region3: #{transformer_forward.21} parent=1 // pred_check_branch
      %10 = sbr.rel (0) target = $region5
    $region4: #{transformer_forward.21} parent=1 // pred_region
      _
    $region5: #{transformer_forward.21} parent=1 // pred_fallthru
      _
    // Predicated region
    $region6: #{transformer_forward.21} parent=1 // pred_check
      _
    $region7: #{transformer_forward.21} parent=1 // pred_check_branch
      %12 = sbr.rel (0) target = $region9
    $region8: #{transformer_forward.21} parent=1 // pred_region
      _
    $region9: #{transformer_forward.21} parent=1 // pred_fallthru
      _
    // Predicated region
    $region10: #{transformer_forward.21} parent=1 // pred_check
      _
    $region11: #{transformer_forward.21} parent=1 // pred_check_branch
      %14 = sbr.rel (0) target = $region13
    $region12: #{transformer_forward.21} parent=1 // pred_region
      _
    $region13: #{transformer_forward.21} parent=1 // pred_fallthru
      _
    %p16 = scmp.eq.s32.totalorder 0, 0
    // Predicated region
    $region14: #{transformer_forward.21} parent=1 // pred_check
      %p17 = pneg %p16
    $region15: #{transformer_forward.21} parent=1 // pred_check_branch
      %19 = sbr.rel (%p17) target = $region17
    $region16: #{transformer_forward.21} parent=1 // pred_region
      %20 = vst [vmem:[#allocation2] sm:$0xff] 0.0
      %21 = vst [vmem:[#allocation2 + $0x8] sm:$0xff] 0.0
    $region17: #{transformer_forward.21} parent=1 // pred_fallthru
      _
    %v22 = vld [vmem:[#allocation2] sm:$0xff]
    %v23 = vld [vmem:[#allocation2 + $0x8] sm:$0xff]
    %v24 = vld [vmem:[%s0] sm:$0xf]
    %v25 = vld [vmem:[%s0 + $0x4] sm:$0xf]
    %v26 = vld [vmem:[%s1] sm:$0xf]
    %v27 = vld [vmem:[%s1 + $0x4] sm:$0xf]
    %v28 = vld [vmem:[%s1 + $0x8] sm:$0xf]
    %v29 = vld [vmem:[%s1 + $0xc] sm:$0xf]
    %v32 = vunpack.c.l.b16 %v24
    %v33 = vunpack.c.l.b16 %v25
    %v34 = vpack.c.b16 %v33, %v32
    %v39 = vunpack.c.l.b16 %v26
    %v40 = vunpack.c.l.b16 %v27
    %v41 = vunpack.c.l.b16 %v28
    %v42 = vunpack.c.l.b16 %v29
    %v43 = vpack.c.b16 %v40, %v39
    %v44 = vpack.c.b16 %v42, %v41
    %vm47 = vcmask 261120
    %v49 = vsel %vm47, %v34, 0
    %51 = vmatpush.bf16.msra.mxu0 0
    %52 = vmatpush.bf16.msra.mxu0 0
    %53 = vmatpush.bf16.msra.mxu0 0
    %54 = vmatpush.bf16.msra.mxu0 0
    %55 = vmatpush.bf16.msra.mxu0 0
    %56 = vmatpush.bf16.msra.mxu0 0
    %57 = vmatpush.bf16.msra.mxu0 %v44
    %58 = vmatpush.bf16.msra.mxu0 %v43
    %59 = vmatmul.bf16.gmra.mxu0 %v49
    %v60 = vpop.f32.mrf.mxu0
    %v61 = vadd.f32 0.0, %v60
    %v62 = vpop.f32.mrf.mxu0
    %v63 = vadd.f32 0.0, %v62
    %64 = vdwg.mxu0
    %v65 = vadd.f32 %v22, %v61
    %v66 = vadd.f32 %v23, %v63
    %67 = vst [vmem:[#allocation2] sm:$0xff] %v65
    %68 = vst [vmem:[#allocation2 + $0x8] sm:$0xff] %v66
    // Predicated region
    $region18: #{transformer_forward.21} parent=1 // pred_check
      %p69 = pneg %p16
    $region19: #{transformer_forward.21} parent=1 // pred_check_branch
      %71 = sbr.rel (%p69) target = $region21
    $region20: #{transformer_forward.21} parent=1 // pred_region
      %v72 = vld [vmem:[#allocation2] sm:$0xff]
      %v73 = vld [vmem:[#allocation2 + $0x8] sm:$0xff]
      %v74 = vld [vmem:[%s2] sm:$0x1]
      %v76 = vperm.slane %v74, 0
      %v78 = vadd.f32 %v72, %v76
      %v79 = vadd.f32 %v73, %v76
      %80 = vst [vmem:[#allocation3] sm:$0xff] %v78
      %81 = vst [vmem:[#allocation3 + $0x8] sm:$0xff] %v79
    $region21: #{transformer_forward.21} parent=1 // pred_fallthru
      _
    // Predicated region
    $region22: #{transformer_forward.21} parent=1 // pred_check
      _
    $region23: #{transformer_forward.21} parent=1 // pred_check_branch
      %83 = sbr.rel (0) target = $region25
    $region24: #{transformer_forward.21} parent=1 // pred_region
      %85 = vsyncadd [#allocation4], 0
      %s86 = sshll.u32 [#allocation3], 4
      %s87 = int_to_ptr.vmem [resolvable:$true] %s86
      %s88 = sshll.u32 %s3, 4
      %s89 = int_to_ptr.hbm [resolvable:$true] %s88
      %94 = dma.vmem_to_hbm [thread:$0]  %s87, 256, %s89, [#allocation4], 128, 128, 8
    $region25: #{transformer_forward.21} parent=1 // pred_fallthru
      _
    // Predicated region
    $region26: #{transformer_forward.21} parent=1 // pred_check
      _
    $region27: #{transformer_forward.21} parent=1 // pred_check_branch
      %96 = sbr.rel (0) target = $region29
    $region28: #{transformer_forward.21} parent=1 // pred_region
      %98 = dma.done [#allocation4], 256
    $region29: #{transformer_forward.21} parent=1 // pred_fallthru
      _
    %99 = vsyncpa [#allocation4], 1

// kernel: transformer_forward.18
$region0: #{transformer_forward.18}
  #allocation0 [shape = 'u32[]', space=smem, size = 0x4, offset = 0x4, fixed_abs, tag = 'smem constant byte address 0x4 - core index']
  #allocation1 [shape = 'u32[72,128]{1,0:T(1,128)}', space=vmem, size = 0x9000, scoped, tag = 'internal scratch']
  #allocation2 [shape = 'f32[8,32]{1,0:T(8,128)}', space=vmem, size = 0x1000, scoped, tag = 'scratch operand']
  %s0 = inlined_call_operand.vmem [shape: bf16[2,8,32], index: 0, kind: input, shape index: {}]
  %s1 = inlined_call_operand.vmem [shape: f32[2,1,8], index: 1, kind: input, shape index: {}]
  %s2 = inlined_call_operand.vmem [shape: bf16[32,96], index: 2, kind: input, shape index: {}]
  %s3 = inlined_call_operand.vmem [shape: f32[1,96], index: 3, kind: input, shape index: {}]
  %s4 = inlined_call_operand.vmem [shape: bf16[32,32], index: 4, kind: input, shape index: {}]
  %s5 = inlined_call_operand.hbm [shape: f32[1,32], index: 5, kind: input, shape index: {}]
  %s6 = inlined_call_operand.hbm [shape: f32[1,32], index: 6, kind: input, shape index: {}]
  %s7 = inlined_call_operand.hbm [shape: f32[1,32], index: 7, kind: input, shape index: {}]
  %s8 = inlined_call_operand.vmem [shape: bf16[2,8,32], index: 8, kind: output, shape index: {}]
  %s9 = sld [smem:[#allocation0]]
  $region77: #{transformer_forward.18} parent=0
    _
  %s11 = ssub.s32 1, %s9
  %s12 = scalar_select 0, %s11, %s9
  $region1: #{transformer_forward.18} parent=0
    #allocation3 [shape = 'u8[512]{0}', space=vmem, size = 0x400, scoped, tag = 'input window, operand 5, single buffered']
    #allocation4 [shape = 's32[2]{0}', space=sflag, size = 0x8, scoped, tag = 'scoped memory for transformer_forward.18']
    #allocation5 [shape = 'u8[512]{0}', space=vmem, size = 0x400, scoped, tag = 'input window, operand 6, single buffered']
    #allocation6 [shape = 's32[1]{0}', space=sflag, size = 0x4, scoped, tag = 'scoped memory for transformer_forward.18']
    #allocation7 [shape = 'u8[512]{0}', space=vmem, size = 0x400, scoped, tag = 'input window, operand 7, single buffered']
    %13 = vsyncpa [#allocation4], 0
    %14 = vsyncpa [#allocation6], 0
    loop: start=0, step=1, limit=4
    $region2: #{transformer_forward.18} parent=1 // loop_pre_header
      _
    $region3: #{transformer_forward.18} parent=1 // loop_header
      %s16 = sphi 0, %s20
      %p17 = scmp.ge.s32.totalorder %s16, 4
      %s26 = sphi 0, %s28
      %s29 = sphi 0, %s26
      %s30 = sphi 0, %s29
      %s46 = sphi 0, %s30
      %s52 = sphi 0, %s54
      %s55 = sphi 0, %s52
      %s56 = sphi 0, %s55
      %s72 = sphi 0, %s56
      %s76 = sphi 0, %s76
      %s78 = sphi 0, %s76
      %s79 = sphi 0, %s78
      %s93 = sphi 0, %s79
      %s97 = sphi 0, %s97
      %s99 = sphi 0, %s97
      %s100 = sphi 0, %s99
      %s114 = sphi 0, %s100
      %s118 = sphi 0, %s118
      %s120 = sphi 0, %s118
      %s121 = sphi 0, %s120
      %s135 = sphi 0, %s121
      %s139 = sphi 0, %s139
      %s141 = sphi 0, %s139
      %s142 = sphi 0, %s141
      %s156 = sphi 0, %s142
      %s160 = sphi 0, %s160
      %s162 = sphi 0, %s160
      %s163 = sphi 0, %s162
      %s177 = sphi 0, %s163
      %s181 = sphi 0, %s181
      %s183 = sphi 0, %s181
      %s184 = sphi 0, %s183
      %s198 = sphi 0, %s184
      %s204 = sphi 0, %s206
      %s207 = sphi 0, %s204
      %s208 = sphi 0, %s207
      %s224 = sphi 0, %s208
    $region4: #{transformer_forward.18} parent=1 // loop_header_branch
      %19 = sbr.rel (%p17) target = $region8
    $region5: #{transformer_forward.18} parent=1 // loop_body
      %s21 = ssub.s32 %s16, 1
      %s22 = ssub.s32 %s16, 2
      %s23 = sadd.s32 %s16, 1
      %s24 = ssub.s32 %s16, %s23
      %p25 = scmp.eq.s32.totalorder %s24, 0
      %s27 = sadd.s32 %s26, 1
      %s28 = scalar_select %p25, %s26, %s27
      %p31 = pneg %p25
      %p32 = scmp.eq.s32.totalorder %s16, 1
      %p33 = por %p31, %p32
      %p34 = scmp.ne.s32.totalorder %s26, %s29
      %p35 = scmp.eq.s32.totalorder %s16, 0
      %p36 = por %p34, %p35
      %p37 = scmp.ne.s32.totalorder %s26, %s29
      %p38 = scmp.eq.s32.totalorder %s21, 1
      %p39 = por %p37, %p38
      %p40 = scmp.ne.s32.totalorder %s29, %s30
      %p41 = scmp.eq.s32.totalorder %s21, 0
      %p42 = por %p40, %p41
      %p43 = scmp.ne.s32.totalorder %s29, %s30
      %p44 = scmp.eq.s32.totalorder %s22, 1
      %p45 = por %p43, %p44
      %p47 = scmp.ne.s32.totalorder %s30, %s46
      %p48 = scmp.eq.s32.totalorder %s22, 0
      %p49 = por %p47, %p48
      %s50 = ssub.s32 %s16, %s23
      %p51 = scmp.eq.s32.totalorder %s50, 0
      %s53 = sadd.s32 %s52, 1
      %s54 = scalar_select %p51, %s52, %s53
      %p57 = pneg %p51
      %p58 = scmp.eq.s32.totalorder %s16, 1
      %p59 = por %p57, %p58
      %p60 = scmp.ne.s32.totalorder %s52, %s55
      %p61 = scmp.eq.s32.totalorder %s16, 0
      %p62 = por %p60, %p61
      %p63 = scmp.ne.s32.totalorder %s52, %s55
      %p64 = scmp.eq.s32.totalorder %s21, 1
      %p65 = por %p63, %p64
      %p66 = scmp.ne.s32.totalorder %s55, %s56
      %p67 = scmp.eq.s32.totalorder %s21, 0
      %p68 = por %p66, %p67
      %p69 = scmp.ne.s32.totalorder %s55, %s56
      %p70 = scmp.eq.s32.totalorder %s22, 1
      %p71 = por %p69, %p70
      %p73 = scmp.ne.s32.totalorder %s56, %s72
      %p74 = scmp.eq.s32.totalorder %s22, 0
      %p75 = por %p73, %p74
      %s77 = sadd.s32 %s76, 1
      %p80 = scmp.eq.s32.totalorder %s16, 1
      %p81 = scmp.ne.s32.totalorder %s76, %s78
      %p82 = scmp.eq.s32.totalorder %s16, 0
      %p83 = por %p81, %p82
      %p84 = scmp.ne.s32.totalorder %s76, %s78
      %p85 = scmp.eq.s32.totalorder %s21, 1
      %p86 = por %p84, %p85
      %p87 = scmp.ne.s32.totalorder %s78, %s79
      %p88 = scmp.eq.s32.totalorder %s21, 0
      %p89 = por %p87, %p88
      %p90 = scmp.ne.s32.totalorder %s78, %s79
      %p91 = scmp.eq.s32.totalorder %s22, 1
      %p92 = por %p90, %p91
      %p94 = scmp.ne.s32.totalorder %s79, %s93
      %p95 = scmp.eq.s32.totalorder %s22, 0
      %p96 = por %p94, %p95
      %s98 = sadd.s32 %s97, 1
      %p101 = scmp.eq.s32.totalorder %s16, 1
      %p102 = scmp.ne.s32.totalorder %s97, %s99
      %p103 = scmp.eq.s32.totalorder %s16, 0
      %p104 = por %p102, %p103
      %p105 = scmp.ne.s32.totalorder %s97, %s99
      %p106 = scmp.eq.s32.totalorder %s21, 1
      %p107 = por %p105, %p106
      %p108 = scmp.ne.s32.totalorder %s99, %s100
      %p109 = scmp.eq.s32.totalorder %s21, 0
      %p110 = por %p108, %p109
      %p111 = scmp.ne.s32.totalorder %s99, %s100
      %p112 = scmp.eq.s32.totalorder %s22, 1
      %p113 = por %p111, %p112
      %p115 = scmp.ne.s32.totalorder %s100, %s114
      %p116 = scmp.eq.s32.totalorder %s22, 0
      %p117 = por %p115, %p116
      %s119 = sadd.s32 %s118, 1
      %p122 = scmp.eq.s32.totalorder %s16, 1
      %p123 = scmp.ne.s32.totalorder %s118, %s120
      %p124 = scmp.eq.s32.totalorder %s16, 0
      %p125 = por %p123, %p124
      %p126 = scmp.ne.s32.totalorder %s118, %s120
      %p127 = scmp.eq.s32.totalorder %s21, 1
      %p128 = por %p126, %p127
      %p129 = scmp.ne.s32.totalorder %s120, %s121
      %p130 = scmp.eq.s32.totalorder %s21, 0
      %p131 = por %p129, %p130
      %p132 = scmp.ne.s32.totalorder %s120, %s121
      %p133 = scmp.eq.s32.totalorder %s22, 1
      %p134 = por %p132, %p133
      %p136 = scmp.ne.s32.totalorder %s121, %s135
      %p137 = scmp.eq.s32.totalorder %s22, 0
      %p138 = por %p136, %p137
      %s140 = sadd.s32 %s139, 1
      %p143 = scmp.eq.s32.totalorder %s16, 1
      %p144 = scmp.ne.s32.totalorder %s139, %s141
      %p145 = scmp.eq.s32.totalorder %s16, 0
      %p146 = por %p144, %p145
      %p147 = scmp.ne.s32.totalorder %s139, %s141
      %p148 = scmp.eq.s32.totalorder %s21, 1
      %p149 = por %p147, %p148
      %p150 = scmp.ne.s32.totalorder %s141, %s142
      %p151 = scmp.eq.s32.totalorder %s21, 0
      %p152 = por %p150, %p151
      %p153 = scmp.ne.s32.totalorder %s141, %s142
      %p154 = scmp.eq.s32.totalorder %s22, 1
      %p155 = por %p153, %p154
      %p157 = scmp.ne.s32.totalorder %s142, %s156
      %p158 = scmp.eq.s32.totalorder %s22, 0
      %p159 = por %p157, %p158
      %s161 = sadd.s32 %s160, 1
      %p164 = scmp.eq.s32.totalorder %s16, 1
      %p165 = scmp.ne.s32.totalorder %s160, %s162
      %p166 = scmp.eq.s32.totalorder %s16, 0
      %p167 = por %p165, %p166
      %p168 = scmp.ne.s32.totalorder %s160, %s162
      %p169 = scmp.eq.s32.totalorder %s21, 1
      %p170 = por %p168, %p169
      %p171 = scmp.ne.s32.totalorder %s162, %s163
      %p172 = scmp.eq.s32.totalorder %s21, 0
      %p173 = por %p171, %p172
      %p174 = scmp.ne.s32.totalorder %s162, %s163
      %p175 = scmp.eq.s32.totalorder %s22, 1
      %p176 = por %p174, %p175
      %p178 = scmp.ne.s32.totalorder %s163, %s177
      %p179 = scmp.eq.s32.totalorder %s22, 0
      %p180 = por %p178, %p179
      %s182 = sadd.s32 %s181, 1
      %p185 = scmp.eq.s32.totalorder %s16, 1
      %p186 = scmp.ne.s32.totalorder %s181, %s183
      %p187 = scmp.eq.s32.totalorder %s16, 0
      %p188 = por %p186, %p187
      %p189 = scmp.ne.s32.totalorder %s181, %s183
      %p190 = scmp.eq.s32.totalorder %s21, 1
      %p191 = por %p189, %p190
      %p192 = scmp.ne.s32.totalorder %s183, %s184
      %p193 = scmp.eq.s32.totalorder %s21, 0
      %p194 = por %p192, %p193
      %p195 = scmp.ne.s32.totalorder %s183, %s184
      %p196 = scmp.eq.s32.totalorder %s22, 1
      %p197 = por %p195, %p196
      %p199 = scmp.ne.s32.totalorder %s184, %s198
      %p200 = scmp.eq.s32.totalorder %s22, 0
      %p201 = por %p199, %p200
      %s202 = ssub.s32 %s16, %s23
      %p203 = scmp.eq.s32.totalorder %s202, 0
      %s205 = sadd.s32 %s204, 1
      %s206 = scalar_select %p203, %s204, %s205
      %p209 = pneg %p203
      %p210 = scmp.eq.s32.totalorder %s16, 1
      %p211 = por %p209, %p210
      %p212 = scmp.ne.s32.totalorder %s204, %s207
      %p213 = scmp.eq.s32.totalorder %s16, 0
      %p214 = por %p212, %p213
      %p215 = scmp.ne.s32.totalorder %s204, %s207
      %p216 = scmp.eq.s32.totalorder %s21, 1
      %p217 = por %p215, %p216
      %p218 = scmp.ne.s32.totalorder %s207, %s208
      %p219 = scmp.eq.s32.totalorder %s21, 0
      %p220 = por %p218, %p219
      %p221 = scmp.ne.s32.totalorder %s207, %s208
      %p222 = scmp.eq.s32.totalorder %s22, 1
      %p223 = por %p221, %p222
      %p225 = scmp.ne.s32.totalorder %s208, %s224
      %p226 = scmp.eq.s32.totalorder %s22, 0
      %p227 = por %p225, %p226
      %p228 = scmp.le.s32.totalorder 1, %s16
      %p229 = scmp.lt.s32.totalorder %s16, 3
      %p230 = pnand %p228, %p229
      %p231 = pneg %p230
      // Predicated region
      $region9: #{transformer_forward.18} parent=5 // pred_check
        _
      $region10: #{transformer_forward.18} parent=5 // pred_check_branch
        %233 = sbr.rel (%p230) target = $region12
      $region11: #{transformer_forward.18} parent=5 // pred_region
        %s234 = ssub.s32 %s16, 1
        // Predicated region
        $region13: #{transformer_forward.18} parent=11 // pred_check
          %p235 = pneg %p89
        $region14: #{transformer_forward.18} parent=11 // pred_check_branch
          %237 = sbr.rel (%p235) target = $region16
        $region15: #{transformer_forward.18} parent=11 // pred_region
          _
        $region16: #{transformer_forward.18} parent=11 // pred_fallthru
          _
        // Predicated region
        $region17: #{transformer_forward.18} parent=11 // pred_check
          %p238 = pneg %p110
        $region18: #{transformer_forward.18} parent=11 // pred_check_branch
          %240 = sbr.rel (%p238) target = $region20
        $region19: #{transformer_forward.18} parent=11 // pred_region
          _
        $region20: #{transformer_forward.18} parent=11 // pred_fallthru
          _
        // Predicated region
        $region21: #{transformer_forward.18} parent=11 // pred_check
          %p241 = pneg %p131
        $region22: #{transformer_forward.18} parent=11 // pred_check_branch
          %243 = sbr.rel (%p241) target = $region24
        $region23: #{transformer_forward.18} parent=11 // pred_region
          _
        $region24: #{transformer_forward.18} parent=11 // pred_fallthru
          _
        // Predicated region
        $region25: #{transformer_forward.18} parent=11 // pred_check
          %p244 = pneg %p152
        $region26: #{transformer_forward.18} parent=11 // pred_check_branch
          %246 = sbr.rel (%p244) target = $region28
        $region27: #{transformer_forward.18} parent=11 // pred_region
          %248 = vsyncadd [#allocation4], 0
          %s250 = sshll.u32 %s5, 4
          %s251 = int_to_ptr.hbm [resolvable:$true] %s250
          %s252 = sshll.u32 [#allocation3], 4
          %s253 = int_to_ptr.vmem [resolvable:$true] %s252
          %255 = dma.hbm_to_vmem [thread:$0]  %s251, 16, %s253, [#allocation4]
        $region28: #{transformer_forward.18} parent=11 // pred_fallthru
          _
        // Predicated region
        $region29: #{transformer_forward.18} parent=11 // pred_check
          %p256 = pneg %p173
        $region30: #{transformer_forward.18} parent=11 // pred_check_branch
          %258 = sbr.rel (%p256) target = $region32
        $region31: #{transformer_forward.18} parent=11 // pred_region
          %260 = vsyncadd [#allocation6], 0
          %s262 = sshll.u32 %s6, 4
          %s263 = int_to_ptr.hbm [resolvable:$true] %s262
          %s264 = sshll.u32 [#allocation5], 4
          %s265 = int_to_ptr.vmem [resolvable:$true] %s264
          %267 = dma.hbm_to_vmem [thread:$0]  %s263, 16, %s265, [#allocation6]
        $region32: #{transformer_forward.18} parent=11 // pred_fallthru
          _
        // Predicated region
        $region33: #{transformer_forward.18} parent=11 // pred_check
          %p268 = pneg %p194
        $region34: #{transformer_forward.18} parent=11 // pred_check_branch
          %270 = sbr.rel (%p268) target = $region36
        $region35: #{transformer_forward.18} parent=11 // pred_region
          %272 = vsyncadd [#allocation6], 0
          %s274 = sshll.u32 %s7, 4
          %s275 = int_to_ptr.hbm [resolvable:$true] %s274
          %s276 = sshll.u32 [#allocation7], 4
          %s277 = int_to_ptr.vmem [resolvable:$true] %s276
          %279 = dma.hbm_to_vmem [thread:$0]  %s275, 16, %s277, [#allocation6]
        $region36: #{transformer_forward.18} parent=11 // pred_fallthru
          _
      $region12: #{transformer_forward.18} parent=5 // pred_fallthru
        _
      %p280 = scmp.lt.s32.totalorder %s16, 2
      // Predicated region
      $region37: #{transformer_forward.18} parent=5 // pred_check
        %p281 = pneg %p280
      $region38: #{transformer_forward.18} parent=5 // pred_check_branch
        %283 = sbr.rel (%p281) target = $region40
      $region39: #{transformer_forward.18} parent=5 // pred_region
        // Predicated region
        $region41: #{transformer_forward.18} parent=39 // pred_check
          %p284 = pneg %p36
        $region42: #{transformer_forward.18} parent=39 // pred_check_branch
          %286 = sbr.rel (%p284) target = $region44
        $region43: #{transformer_forward.18} parent=39 // pred_region
          %p287 = scmp.lt.s32.totalorder %s16, 1
          %s288 = scalar_select %p287, %s16, 1
          %s289 = smul.addr %s288, 4
          %s290 = scalar_lea.vmem %s0, %s289
        $region44: #{transformer_forward.18} parent=39 // pred_fallthru
          _
        // Predicated region
        $region45: #{transformer_forward.18} parent=39 // pred_check
          %p291 = pneg %p62
        $region46: #{transformer_forward.18} parent=39 // pred_check_branch
          %293 = sbr.rel (%p291) target = $region48
        $region47: #{transformer_forward.18} parent=39 // pred_region
          %p294 = scmp.lt.s32.totalorder %s16, 1
          %s295 = scalar_select %p294, %s16, 1
          %s296 = scalar_lea.vmem %s1, %s295
        $region48: #{transformer_forward.18} parent=39 // pred_fallthru
          _
      $region40: #{transformer_forward.18} parent=5 // pred_fallthru
        _
      %p297 = scmp.le.s32.totalorder 1, %s16
      %p298 = scmp.lt.s32.totalorder %s16, 3
      %p299 = pnand %p297, %p298
      %p300 = pneg %p299
      // Predicated region
      $region49: #{transformer_forward.18} parent=5 // pred_check
        _
      $region50: #{transformer_forward.18} parent=5 // pred_check_branch
        %302 = sbr.rel (%p299) target = $region52
      $region51: #{transformer_forward.18} parent=5 // pred_region
        %s303 = ssub.s32 %s16, 1
        // Predicated region
        $region53: #{transformer_forward.18} parent=51 // pred_check
          %p304 = pneg %p152
        $region54: #{transformer_forward.18} parent=51 // pred_check_branch
          %306 = sbr.rel (%p304) target = $region56
        $region55: #{transformer_forward.18} parent=51 // pred_region
          %308 = dma.done [#allocation4], 16
        $region56: #{transformer_forward.18} parent=51 // pred_fallthru
          _
        // Predicated region
        $region57: #{transformer_forward.18} parent=51 // pred_check
          %p309 = pneg %p173
        $region58: #{transformer_forward.18} parent=51 // pred_check_branch
          %311 = sbr.rel (%p309) target = $region60
        $region59: #{transformer_forward.18} parent=51 // pred_region
          %313 = dma.done [#allocation6], 16
        $region60: #{transformer_forward.18} parent=51 // pred_fallthru
          _
        // Predicated region
        $region61: #{transformer_forward.18} parent=51 // pred_check
          %p314 = pneg %p194
        $region62: #{transformer_forward.18} parent=51 // pred_check_branch
          %316 = sbr.rel (%p314) target = $region64
        $region63: #{transformer_forward.18} parent=51 // pred_region
          %318 = dma.done [#allocation6], 16
        $region64: #{transformer_forward.18} parent=51 // pred_fallthru
          _
        %p319 = scmp.lt.s32.totalorder %s21, 1
        %s320 = scalar_select %p319, %s21, 1
        %s321 = smul.addr %s320, 4
        %s322 = scalar_lea.vmem %s0, %s321
        %p323 = pneg %p42
        %p324 = pneg %p39
        %p325 = scmp.lt.s32.totalorder %s21, 1
        %s326 = scalar_select %p325, %s21, 1
        %s327 = scalar_lea.vmem %s1, %s326
        %p328 = pneg %p68
        %p329 = pneg %p65
        %p330 = pneg %p89
        %p331 = pneg %p86
        %p332 = pneg %p110
        %p333 = pneg %p107
        %p334 = pneg %p131
        %p335 = pneg %p128
        %p336 = pneg %p152
        %p337 = pneg %p149
        %p338 = pneg %p173
        %p339 = pneg %p170
        %p340 = pneg %p194
        %p341 = pneg %p191
        %p342 = pneg %p220
        %p343 = pneg %p217
        %p344 = scmp.lt.s32.totalorder %s21, 1
        %s345 = scalar_select %p344, %s21, 1
        %s346 = smul.addr %s345, 4
        %s347 = scalar_lea.vmem %s8, %s346
        %p348 = scmp.lt.s32.totalorder %s21, 1
        %s349 = scalar_select %p348, %s21, 1
        %s350 = smul.addr %s349, 4
        %s351 = scalar_lea.vmem %s0, %s350
        %p352 = scmp.lt.s32.totalorder %s21, 1
        %s353 = scalar_select %p352, %s21, 1
        %s354 = scalar_lea.vmem %s1, %s353
        %p355 = scmp.lt.s32.totalorder %s21, 1
        %s356 = scalar_select %p355, %s21, 1
        %s357 = smul.addr %s356, 4
        %s358 = scalar_lea.vmem %s8, %s357
        %v360 = vld [vmem:[%s351] sm:$0xf]
        %v361 = vld [vmem:[%s2] sm:$0xf]
        %v362 = vld [vmem:[%s2 + $0x4] sm:$0xf]
        %v363 = vld [vmem:[%s2 + $0x8] sm:$0xf]
        %v364 = vld [vmem:[%s2 + $0xc] sm:$0xf]
        %v365 = vld [vmem:[%s3] sm:$0x1]
        %v367 = vperm.slane %v365, 0
        %v373 = vunpack.c.l.b16 %v361
        %v374 = vunpack.c.l.b16 %v362
        %v375 = vunpack.c.l.b16 %v363
        %v376 = vunpack.c.l.b16 %v364
        %v377 = vpack.c.b16 %v374, %v373
        %v378 = vpack.c.b16 %v376, %v375
        %vm381 = vcmask 261120
        %v383 = vsel %vm381, %v360, 0
        %385 = vmatpush.bf16.msra.mxu0 0
        %386 = vmatpush.bf16.msra.mxu0 0
        %387 = vmatpush.bf16.msra.mxu0 0
        %388 = vmatpush.bf16.msra.mxu0 0
        %389 = vmatpush.bf16.msra.mxu0 0
        %390 = vmatpush.bf16.msra.mxu0 0
        %391 = vmatpush.bf16.msra.mxu0 %v378
        %392 = vmatpush.bf16.msra.mxu0 %v377
        %393 = vmatmul.bf16.gmra.mxu0 %v383
        %v394 = vpop.f32.mrf.mxu0
        %v395 = vadd.f32 %v367, %v394
        %v396 = vpop.f32.mrf.mxu0
        %397 = vdwg.mxu0
        %v398 = vld [vmem:[%s354] sm:$0x1]
        %vm399 = vcmp.gt.f32.partialorder %v398, 0.5
        %v400 = vsel %vm399, 1, 0
        %v401 = vperm.slane %v400, 0
        %vm402 = vcmp.eq.s32.totalorder %v401, 1
        %v403 = vlaneseq
        %v404 = vshrl.u32 %v403, 7
        %v405 = vlaneseq
        %v406 = vand.u32 %v405, 127
        %vm407 = vcmp.le.s32.totalorder %v406, %v404
        %vm408 = vmand %vm402, %vm407
        %v409 = vld [vmem:[%s4] sm:$0xf]
        %v410 = vld [vmem:[%s4 + $0x4] sm:$0xf]
        %v411 = vld [vmem:[%s4 + $0x8] sm:$0xf]
        %v412 = vld [vmem:[%s4 + $0xc] sm:$0xf]
        %v413 = vld [vmem:[#allocation3] sm:$0x1]
        %v414 = vunpack.c.l.bf16 %v360
        %v415 = vld [vmem:[#allocation5] sm:$0x1]
        %v416 = vld [vmem:[#allocation7] sm:$0x1]
        %v417 = vpack.c.bf16 %v395, %v395
        %v419 = vunpack.c.l.b16 %v417
        %v420 = vpack.c.b16 %v419, %v419
        %421 = vrot.lane.b32.xlu0 %v420, 96
        %v422 = vpop.permute.xlu0 %421
        %vm423 = vcmask 64512
        %v425 = vsel %vm423, %v417, 0
        %v428 = vsel %vm423, %v422, 0
        %430 = vmatpush.bf16.xpose.msra.mxu0 0
        %431 = vmatpush.bf16.xpose.msra.mxu0 0
        %432 = vmatpush.bf16.xpose.msra.mxu0 0
        %433 = vmatpush.bf16.xpose.msra.mxu0 0
        %434 = vmatpush.bf16.xpose.msra.mxu0 0
        %435 = vmatpush.bf16.xpose.msra.mxu0 0
        %436 = vmatpush.bf16.xpose.msra.mxu0 0
        %437 = vmatpush.bf16.xpose.msra.mxu0 %v428
        %438 = vmatmul.bf16.gmra.mxu0 %v425
        %v439 = vpop.f32.mrf.mxu0
        %v440 = vadd.f32 0.0, %v439
        %v441 = vpop.f32.mrf.mxu0
        %442 = vdwg.mxu0
        %v443 = vmul.f32 %v440, 0.35355338
        %v444 = vsel %vm408, %v443, -1e+09
        %v445 = vsel %vm423, %v444, -inf
        %446 = vmax.xlane.f32.xlu0 %v445
        %v447 = vpop.xlane.xlu0 %446
        %v448 = vsub.f32 %v444, %v447
        %v449 = vmul.f32 %v448, 1.442695
        %v450 = vpow.pop %v449
        %v451 = vsel %vm423, %v450, 0.0
        %452 = vadd.xlane.f32.xlu0 %v451
        %v453 = vpop.xlane.xlu0 %452
        %v454 = vrcp.pop %v453
        %v455 = vmul.f32 %v453, %v454
        %v456 = vsub.f32 1.0, %v455
        %v457 = vmul.f32 %v454, %v456
        %v458 = vadd.f32 %v454, %v457
        %vm459 = vweird.f32 %v453
        %vm460 = vweird.f32 %v454
        %vm461 = vmor %vm459, %vm460
        %v462 = vsel %vm461, %v454, %v458
        %v463 = vand.u32 2147483647, %v453
        %vm464 = vcmp.eq.f32.partialorder %v463, 8.507059e+37
        %v465 = vand.u32 %v453, 2147483648
        %v466 = vor.u32 1.1754944e-38, %v465
        %v467 = vsel %vm464, %v466, %v462
        %v468 = vmul.f32 %v450, %v467
        %v469 = vpack.c.bf16 %v468, %v468
        %470 = vrot.lane.b32.xlu0 %v420, 64
        %v471 = vpop.permute.xlu0 %470
        %v473 = vsel %vm423, %v469, 0
        %vm475 = vcmask 1043456
        %v477 = vsel %vm475, %v471, 0
        %479 = vmatpush.bf16.msra.mxu0 0
        %480 = vmatpush.bf16.msra.mxu0 0
        %481 = vmatpush.bf16.msra.mxu0 0
        %482 = vmatpush.bf16.msra.mxu0 0
        %483 = vmatpush.bf16.msra.mxu0 0
        %484 = vmatpush.bf16.msra.mxu0 0
        %485 = vmatpush.bf16.msra.mxu0 0
        %486 = vmatpush.bf16.msra.mxu0 %v477
        %487 = vmatmul.bf16.gmra.mxu0 %v473
        %v488 = vpop.f32.mrf.mxu0
        %v489 = vadd.f32 0.0, %v488
        %v490 = vpop.f32.mrf.mxu0
        %491 = vdwg.mxu0
        %492 = vst.msk [vmem:[#allocation2] sm:$0xff] %vm423, %v489
        %493 = vrot.lane.b32.xlu0 %v420, 120
        %v494 = vpop.permute.xlu0 %493
        %495 = vrot.lane.b32.xlu0 %v420, 88
        %v496 = vpop.permute.xlu0 %495
        %v498 = vsel %vm423, %v494, 0
        %v501 = vsel %vm423, %v496, 0
        %503 = vmatpush.bf16.xpose.msra.mxu0 0
        %504 = vmatpush.bf16.xpose.msra.mxu0 0
        %505 = vmatpush.bf16.xpose.msra.mxu0 0
        %506 = vmatpush.bf16.xpose.msra.mxu0 0
        %507 = vmatpush.bf16.xpose.msra.mxu0 0
        %508 = vmatpush.bf16.xpose.msra.mxu0 0
        %509 = vmatpush.bf16.xpose.msra.mxu0 0
        %510 = vmatpush.bf16.xpose.msra.mxu0 %v501
        %511 = vmatmul.bf16.gmra.mxu0 %v498
        %v512 = vpop.f32.mrf.mxu0
        %v513 = vadd.f32 0.0, %v512
        %v514 = vpop.f32.mrf.mxu0
        %515 = vdwg.mxu0
        %v516 = vmul.f32 %v513, 0.35355338
        %v517 = vsel %vm408, %v516, -1e+09
        %v518 = vsel %vm423, %v517, -inf
        %519 = vmax.xlane.f32.xlu0 %v518
        %v520 = vpop.xlane.xlu0 %519
        %v521 = vsub.f32 %v517, %v520
        %v522 = vmul.f32 %v521, 1.442695
        %v523 = vpow.pop %v522
        %v524 = vsel %vm423, %v523, 0.0
        %525 = vadd.xlane.f32.xlu0 %v524
        %v526 = vpop.xlane.xlu0 %525
        %v527 = vrcp.pop %v526
        %v528 = vmul.f32 %v526, %v527
        %v529 = vsub.f32 1.0, %v528
        %v530 = vmul.f32 %v527, %v529
        %v531 = vadd.f32 %v527, %v530
        %vm532 = vweird.f32 %v526
        %vm533 = vweird.f32 %v527
        %vm534 = vmor %vm532, %vm533
        %v535 = vsel %vm534, %v527, %v531
        %v536 = vand.u32 2147483647, %v526
        %vm537 = vcmp.eq.f32.partialorder %v536, 8.507059e+37
        %v538 = vand.u32 %v526, 2147483648
        %v539 = vor.u32 1.1754944e-38, %v538
        %v540 = vsel %vm537, %v539, %v535
        %v541 = vmul.f32 %v523, %v540
        %v542 = vpack.c.bf16 %v541, %v541
        %543 = vrot.lane.b32.xlu0 %v420, 56
        %v544 = vpop.permute.xlu0 %543
        %v546 = vsel %vm423, %v542, 0
        %v549 = vsel %vm475, %v544, 0
        %551 = vmatpush.bf16.msra.mxu0 0
        %552 = vmatpush.bf16.msra.mxu0 0
        %553 = vmatpush.bf16.msra.mxu0 0
        %554 = vmatpush.bf16.msra.mxu0 0
        %555 = vmatpush.bf16.msra.mxu0 0
        %556 = vmatpush.bf16.msra.mxu0 0
        %557 = vmatpush.bf16.msra.mxu0 0
        %558 = vmatpush.bf16.msra.mxu0 %v549
        %559 = vmatmul.bf16.gmra.mxu0 %v546
        %v560 = vpop.f32.mrf.mxu0
        %v561 = vadd.f32 0.0, %v560
        %v562 = vpop.f32.mrf.mxu0
        %563 = vdwg.mxu0
        %565 = vrot.lane.b32.xlu0 %v561, 8
        %v566 = vpop.permute.xlu0 %565
        %vm568 = vcmask 130112
        %569 = vst.msk [vmem:[#allocation2] sm:$0xff] %vm568, %v566
        %570 = vrot.lane.b32.xlu0 %v420, 112
        %v571 = vpop.permute.xlu0 %570
        %572 = vrot.lane.b32.xlu0 %v420, 80
        %v573 = vpop.permute.xlu0 %572
        %v575 = vsel %vm423, %v571, 0
        %v578 = vsel %vm423, %v573, 0
        %580 = vmatpush.bf16.xpose.msra.mxu0 0
        %581 = vmatpush.bf16.xpose.msra.mxu0 0
        %582 = vmatpush.bf16.xpose.msra.mxu0 0
        %583 = vmatpush.bf16.xpose.msra.mxu0 0
        %584 = vmatpush.bf16.xpose.msra.mxu0 0
        %585 = vmatpush.bf16.xpose.msra.mxu0 0
        %586 = vmatpush.bf16.xpose.msra.mxu0 0
        %587 = vmatpush.bf16.xpose.msra.mxu0 %v578
        %588 = vmatmul.bf16.gmra.mxu0 %v575
        %v589 = vpop.f32.mrf.mxu0
        %v590 = vadd.f32 0.0, %v589
        %v591 = vpop.f32.mrf.mxu0
        %592 = vdwg.mxu0
        %v593 = vmul.f32 %v590, 0.35355338
        %v594 = vsel %vm408, %v593, -1e+09
        %v595 = vsel %vm423, %v594, -inf
        %596 = vmax.xlane.f32.xlu0 %v595
        %v597 = vpop.xlane.xlu0 %596
        %v598 = vsub.f32 %v594, %v597
        %v599 = vmul.f32 %v598, 1.442695
        %v600 = vpow.pop %v599
        %v601 = vsel %vm423, %v600, 0.0
        %602 = vadd.xlane.f32.xlu0 %v601
        %v603 = vpop.xlane.xlu0 %602
        %v604 = vrcp.pop %v603
        %v605 = vmul.f32 %v603, %v604
        %v606 = vsub.f32 1.0, %v605
        %v607 = vmul.f32 %v604, %v606
        %v608 = vadd.f32 %v604, %v607
        %vm609 = vweird.f32 %v603
        %vm610 = vweird.f32 %v604
        %vm611 = vmor %vm609, %vm610
        %v612 = vsel %vm611, %v604, %v608
        %v613 = vand.u32 2147483647, %v603
        %vm614 = vcmp.eq.f32.partialorder %v613, 8.507059e+37
        %v615 = vand.u32 %v603, 2147483648
        %v616 = vor.u32 1.1754944e-38, %v615
        %v617 = vsel %vm614, %v616, %v612
        %v618 = vmul.f32 %v600, %v617
        %v619 = vpack.c.bf16 %v618, %v618
        %620 = vrot.lane.b32.xlu0 %v420, 48
        %v621 = vpop.permute.xlu0 %620
        %v623 = vsel %vm423, %v619, 0
        %v626 = vsel %vm475, %v621, 0
        %628 = vmatpush.bf16.msra.mxu0 0
        %629 = vmatpush.bf16.msra.mxu0 0
        %630 = vmatpush.bf16.msra.mxu0 0
        %631 = vmatpush.bf16.msra.mxu0 0
        %632 = vmatpush.bf16.msra.mxu0 0
        %633 = vmatpush.bf16.msra.mxu0 0
        %634 = vmatpush.bf16.msra.mxu0 0
        %635 = vmatpush.bf16.msra.mxu0 %v626
        %636 = vmatmul.bf16.gmra.mxu0 %v623
        %v637 = vpop.f32.mrf.mxu0
        %v638 = vadd.f32 0.0, %v637
        %v639 = vpop.f32.mrf.mxu0
        %640 = vdwg.mxu0
        %642 = vrot.lane.b32.xlu0 %v638, 16
        %v643 = vpop.permute.xlu0 %642
        %vm645 = vcmask 195712
        %646 = vst.msk [vmem:[#allocation2] sm:$0xff] %vm645, %v643
        %647 = vrot.lane.b32.xlu0 %v420, 104
        %v648 = vpop.permute.xlu0 %647
        %649 = vrot.lane.b32.xlu0 %v420, 72
        %v650 = vpop.permute.xlu0 %649
        %v652 = vsel %vm423, %v648, 0
        %v655 = vsel %vm423, %v650, 0
        %657 = vmatpush.bf16.xpose.msra.mxu0 0
        %658 = vmatpush.bf16.xpose.msra.mxu0 0
        %659 = vmatpush.bf16.xpose.msra.mxu0 0
        %660 = vmatpush.bf16.xpose.msra.mxu0 0
        %661 = vmatpush.bf16.xpose.msra.mxu0 0
        %662 = vmatpush.bf16.xpose.msra.mxu0 0
        %663 = vmatpush.bf16.xpose.msra.mxu0 0
        %664 = vmatpush.bf16.xpose.msra.mxu0 %v655
        %665 = vmatmul.bf16.gmra.mxu0 %v652
        %v666 = vpop.f32.mrf.mxu0
        %v667 = vadd.f32 0.0, %v666
        %v668 = vpop.f32.mrf.mxu0
        %669 = vdwg.mxu0
        %v670 = vmul.f32 %v667, 0.35355338
        %v671 = vsel %vm408, %v670, -1e+09
        %v672 = vsel %vm423, %v671, -inf
        %673 = vmax.xlane.f32.xlu0 %v672
        %v674 = vpop.xlane.xlu0 %673
        %v675 = vsub.f32 %v671, %v674
        %v676 = vmul.f32 %v675, 1.442695
        %v677 = vpow.pop %v676
        %v678 = vsel %vm423, %v677, 0.0
        %679 = vadd.xlane.f32.xlu0 %v678
        %v680 = vpop.xlane.xlu0 %679
        %v681 = vrcp.pop %v680
        %v682 = vmul.f32 %v680, %v681
        %v683 = vsub.f32 1.0, %v682
        %v684 = vmul.f32 %v681, %v683
        %v685 = vadd.f32 %v681, %v684
        %vm686 = vweird.f32 %v680
        %vm687 = vweird.f32 %v681
        %vm688 = vmor %vm686, %vm687
        %v689 = vsel %vm688, %v681, %v685
        %v690 = vand.u32 2147483647, %v680
        %vm691 = vcmp.eq.f32.partialorder %v690, 8.507059e+37
        %v692 = vand.u32 %v680, 2147483648
        %v693 = vor.u32 1.1754944e-38, %v692
        %v694 = vsel %vm691, %v693, %v689
        %v695 = vmul.f32 %v677, %v694
        %v696 = vpack.c.bf16 %v695, %v695
        %697 = vrot.lane.b32.xlu0 %v420, 40
        %v698 = vpop.permute.xlu0 %697
        %v700 = vsel %vm423, %v696, 0
        %v703 = vsel %vm475, %v698, 0
        %705 = vmatpush.bf16.msra.mxu0 0
        %706 = vmatpush.bf16.msra.mxu0 0
        %707 = vmatpush.bf16.msra.mxu0 0
        %708 = vmatpush.bf16.msra.mxu0 0
        %709 = vmatpush.bf16.msra.mxu0 0
        %710 = vmatpush.bf16.msra.mxu0 0
        %711 = vmatpush.bf16.msra.mxu0 0
        %712 = vmatpush.bf16.msra.mxu0 %v703
        %713 = vmatmul.bf16.gmra.mxu0 %v700
        %v714 = vpop.f32.mrf.mxu0
        %v715 = vadd.f32 0.0, %v714
        %v716 = vpop.f32.mrf.mxu0
        %717 = vdwg.mxu0
        %719 = vrot.lane.b32.xlu0 %v715, 24
        %v720 = vpop.permute.xlu0 %719
        %vm722 = vcmask 261312
        %723 = vst.msk [vmem:[#allocation2] sm:$0xff] %vm722, %v720
        %v724 = vld [vmem:[#allocation2] sm:$0xff]
        %v725 = vpack.c.bf16 %v724, %v724
        %v727 = vperm.slane %v413, 0
        %v733 = vunpack.c.l.b16 %v409
        %v734 = vunpack.c.l.b16 %v410
        %v735 = vunpack.c.l.b16 %v411
        %v736 = vunpack.c.l.b16 %v412
        %v737 = vpack.c.b16 %v734, %v733
        %v738 = vpack.c.b16 %v736, %v735
        %v742 = vsel %vm381, %v725, 0
        %744 = vmatpush.bf16.msra.mxu0 0
        %745 = vmatpush.bf16.msra.mxu0 0
        %746 = vmatpush.bf16.msra.mxu0 0
        %747 = vmatpush.bf16.msra.mxu0 0
        %748 = vmatpush.bf16.msra.mxu0 0
        %749 = vmatpush.bf16.msra.mxu0 0
        %750 = vmatpush.bf16.msra.mxu0 %v738
        %751 = vmatpush.bf16.msra.mxu0 %v737
        %752 = vmatmul.bf16.gmra.mxu0 %v742
        %v753 = vpop.f32.mrf.mxu0
        %v754 = vadd.f32 %v727, %v753
        %v755 = vpop.f32.mrf.mxu0
        %756 = vdwg.mxu0
        %v757 = vadd.f32 %v414, %v754
        %v758 = vsel %vm381, %v757, 0.0
        %759 = vadd.xlane.f32.xlu0 %v758
        %v760 = vpop.xlane.xlu0 %759
        %v761 = vrcp.pop 32.0
        %v762 = vmul.f32 32.0, %v761
        %v763 = vsub.f32 1.0, %v762
        %v764 = vmul.f32 %v761, %v763
        %v765 = vadd.f32 %v761, %v764
        %vm766 = vweird.f32 %v761
        %v767 = vsel %vm766, %v761, %v765
        %v768 = vmul.f32 %v760, %v767
        %v769 = vsub.f32 %v757, %v768
        %v770 = vmul.f32 %v769, %v769
        %v771 = vsel %vm381, %v770, 0.0
        %772 = vadd.xlane.f32.xlu0 %v771
        %v773 = vpop.xlane.xlu0 %772
        %v774 = vmul.f32 %v773, %v767
        %v775 = vadd.f32 %v774, 1e-05
        %v776 = vrsqrt.pop %v775
        %v777 = vmul.f32 %v776, %v775
        %v778 = vmul.f32 %v777, %v776
        %v779 = vmul.f32 0.5, %v778
        %v780 = vsub.f32 1.5, %v779
        %v781 = vmul.f32 %v776, %v780
        %vm782 = vweird.f32 %v775
        %vm783 = vweird.f32 %v776
        %vm784 = vmor %vm782, %vm783
        %v785 = vsel %vm784, %v776, %v781
        %v786 = vmul.f32 %v769, %v785
        %v788 = vperm.slane %v415, 0
        %v790 = vmul.f32 %v786, %v788
        %v792 = vperm.slane %v416, 0
        %v794 = vadd.f32 %v790, %v792
        %v795 = vpack.c.bf16 %v794, %v794
        %vm796 = vcmask 257024
        %797 = vst.msk [vmem:[%s358] sm:$0xf] %vm796, %v795
        %p798 = scmp.lt.s32.totalorder %s21, 1
        %s799 = scalar_select %p798, %s21, 1
        %s800 = smul.addr %s799, 4
        %s801 = scalar_lea.vmem %s8, %s800
        // Predicated region
        $region65: #{transformer_forward.18} parent=51 // pred_check
          %p802 = pneg %p217
        $region66: #{transformer_forward.18} parent=51 // pred_check_branch
          %804 = sbr.rel (%p802) target = $region68
        $region67: #{transformer_forward.18} parent=51 // pred_region
          _
        $region68: #{transformer_forward.18} parent=51 // pred_fallthru
          _
      $region52: #{transformer_forward.18} parent=5 // pred_fallthru
        _
      %p805 = scmp.le.s32.totalorder 2, %s16
      // Predicated region
      $region69: #{transformer_forward.18} parent=5 // pred_check
        %p806 = pneg %p805
      $region70: #{transformer_forward.18} parent=5 // pred_check_branch
        %808 = sbr.rel (%p806) target = $region72
      $region71: #{transformer_forward.18} parent=5 // pred_region
        %s809 = ssub.s32 %s16, 2
        // Predicated region
        $region73: #{transformer_forward.18} parent=71 // pred_check
          %p810 = pneg %p223
        $region74: #{transformer_forward.18} parent=71 // pred_check_branch
          %812 = sbr.rel (%p810) target = $region76
        $region75: #{transformer_forward.18} parent=71 // pred_region
          %p813 = scmp.lt.s32.totalorder %s22, 1
          %s814 = scalar_select %p813, %s22, 1
          %s815 = smul.addr %s814, 4
          %s816 = scalar_lea.vmem %s8, %s815
        $region76: #{transformer_forward.18} parent=71 // pred_fallthru
          _
      $region72: #{transformer_forward.18} parent=5 // pred_fallthru
        _
    $region6: #{transformer_forward.18} parent=1 // loop_footer
      %s20 = sadd.s32 1, %s16
    $region7: #{transformer_forward.18} parent=1 // loop_footer_branch
      %15 = sbr.rel target = $region3
    $region8: #{transformer_forward.18} parent=1 // loop_exit
      _
    %817 = vsyncpa [#allocation4], 1
    %s818 = scalar_lea.sflag [#allocation4], 1
    %819 = vsyncpa %s818, 1
    %820 = vsyncpa [#allocation6], 1

</llo_original>
